<compile_context>
chip_gen: v7x
topology: tpu7x:2x2x1
jax: 0.10.0
libtpu: 0.0.40
codegen_flags: <defaults>
</compile_context>

<pallas_src>
import functools

import jax
import jax.numpy as jnp
from jax.experimental import pallas as pl
from jax.experimental.pallas import tpu as pltpu


# ----------------------------------------------------------------------------
# Hyper-parameters (synthetic, small)
# ----------------------------------------------------------------------------
VOCAB = 50
EMBED_DIM = 32          # hparams.embedding_dim
HIDDEN = 32             # hparams.lstm_hidden_dim
BIDIRECT = True         # hparams.lstm_bidirect
NUM_LAYERS = 1          # hparams.lstm_layers
NUM_CLASSES = 3         # hparams.num_classes
SEQ = 8
BATCH = 4

LSTM_OUT = 2 * HIDDEN if BIDIRECT else HIDDEN   # 64
PAD_OUT = 128                                   # lane-dense final store width


# ----------------------------------------------------------------------------
# Fused forward kernel: one invocation, everything resident in VMEM.
# ----------------------------------------------------------------------------
def _fused_forward_kernel(
        ids_ref, emb_ref, wih_ref, whhf_ref, whhb_ref, b_ref,
        w1f_ref, w1b_ref, b1_ref, w2_ref, b2_ref, w3_ref, b3_ref,
        w4_ref, b4_ref,
        out_ref,
        hf_scr, hb_scr,
        *, seq_len, batch):
    H = whhf_ref.shape[0]
    N = ids_ref.shape[0]           # seq_len * batch
    vocab = emb_ref.shape[0]

    # ---- Embedding lookup as a one-hot MXU matmul (gather-free, exact) ----
    ids = ids_ref[...]                                               # (N, 1) i32
    onehot = (jax.lax.broadcasted_iota(jnp.int32, (N, vocab), 1) == ids)
    emb_x = jnp.dot(onehot.astype(jnp.float32), emb_ref[...],
                    preferred_element_type=jnp.float32)              # (N, E)
    # dropout: eval-mode identity.

    # ---- Hoisted input projection for BOTH directions: (N, 8H) ----
    gx = jnp.dot(emb_x, wih_ref[...],
                 preferred_element_type=jnp.float32) + b_ref[...]

    whh_f = whhf_ref[...]
    whh_b = whhb_ref[...]

    def gates(pre):
        i = jax.nn.sigmoid(pre[:, 0 * H:1 * H])
        f = jax.nn.sigmoid(pre[:, 1 * H:2 * H])
        g = jnp.tanh(pre[:, 2 * H:3 * H])
        o = jax.nn.sigmoid(pre[:, 3 * H:4 * H])
        return i, f, g, o

    h_f = jnp.zeros((batch, H), jnp.float32)
    c_f = jnp.zeros((batch, H), jnp.float32)
    h_b = jnp.zeros((batch, H), jnp.float32)
    c_b = jnp.zeros((batch, H), jnp.float32)

    # ---- Recurrence: fully unrolled (seq_len small & static) ----
    # Forward direction slices lanes [0:4H], backward lanes [4H:8H] of gx.
    for t in range(seq_len):
        tr = seq_len - 1 - t
        pre_f = (jnp.dot(h_f, whh_f, preferred_element_type=jnp.float32)
                 + gx[t * batch:(t + 1) * batch, 0:4 * H])
        pre_b = (jnp.dot(h_b, whh_b, preferred_element_type=jnp.float32)
                 + gx[tr * batch:(tr + 1) * batch, 4 * H:8 * H])
        i_f, f_f, g_f, o_f = gates(pre_f)
        i_b, f_b, g_b, o_b = gates(pre_b)
        c_f = f_f * c_f + i_f * g_f
        h_f = o_f * jnp.tanh(c_f)
        c_b = f_b * c_b + i_b * g_b
        h_b = o_b * jnp.tanh(c_b)
        hf_scr[t * batch:(t + 1) * batch, :] = h_f
        hb_scr[tr * batch:(tr + 1) * batch, :] = h_b
    # dropout: eval-mode identity.

    # ---- MLP head (concat avoided: w1 split across the two directions) ----
    h = (jnp.dot(hf_scr[...], w1f_ref[...], preferred_element_type=jnp.float32)
         + jnp.dot(hb_scr[...], w1b_ref[...], preferred_element_type=jnp.float32)
         + b1_ref[...])
    h = jnp.maximum(h, 0.0)
    h = jnp.maximum(
        jnp.dot(h, w2_ref[...], preferred_element_type=jnp.float32) + b2_ref[...], 0.0)
    h = jnp.maximum(
        jnp.dot(h, w3_ref[...], preferred_element_type=jnp.float32) + b3_ref[...], 0.0)
    # Lane-dense (128-wide) single final store.
    out_ref[...] = (jnp.dot(h, w4_ref[...], preferred_element_type=jnp.float32)
                    + b4_ref[...])


# ----------------------------------------------------------------------------
# Parameter construction (deterministic, PyTorch-like uniform init)
# ----------------------------------------------------------------------------
def make_params(key):
    ks = jax.random.split(key, 16)
    u = lambda k, shape, s: jax.random.uniform(
        k, shape, jnp.float32, minval=-s, maxval=s)

    stdv = 1.0 / jnp.sqrt(HIDDEN)
    params = {
        # nn.Embedding(VOCAB, EMBED_DIM)
        "emb": jax.random.normal(ks[0], (VOCAB, EMBED_DIM), jnp.float32),
        # LSTM forward direction (stored transposed: (in, 4H)); b = b_ih + b_hh
        "wih_f": u(ks[1], (EMBED_DIM, 4 * HIDDEN), stdv),
        "whh_f": u(ks[2], (HIDDEN, 4 * HIDDEN), stdv),
        "b_f":   u(ks[3], (1, 4 * HIDDEN), stdv),
        # LSTM reverse direction
        "wih_b": u(ks[4], (EMBED_DIM, 4 * HIDDEN), stdv),
        "whh_b": u(ks[5], (HIDDEN, 4 * HIDDEN), stdv),
        "b_b":   u(ks[6], (1, 4 * HIDDEN), stdv),
    }
    # Linear stack: 64 -> 32 -> 16 -> 8 -> NUM_CLASSES (stored transposed)
    dims = [LSTM_OUT, LSTM_OUT // 2, LSTM_OUT // 4, LSTM_OUT // 8, NUM_CLASSES]
    for li in range(4):
        fan_in = dims[li]
        s = 1.0 / jnp.sqrt(fan_in)
        params[f"w{li+1}"] = u(ks[7 + 2 * li], (dims[li], dims[li + 1]), s)
        params[f"b{li+1}"] = u(ks[8 + 2 * li], (1, dims[li + 1]), s)
    return params


def pack_params(p):
    """One-time kernel-facing repack: concat directions, split w1, pad w4."""
    w4p = jnp.zeros((p["w4"].shape[0], PAD_OUT), jnp.float32)
    w4p = w4p.at[:, :NUM_CLASSES].set(p["w4"])
    b4p = jnp.zeros((1, PAD_OUT), jnp.float32).at[:, :NUM_CLASSES].set(p["b4"])
    return {
        "emb": p["emb"],
        "wih": jnp.concatenate([p["wih_f"], p["wih_b"]], axis=1),   # (E, 8H)
        "whh_f": p["whh_f"],
        "whh_b": p["whh_b"],
        "b": jnp.concatenate([p["b_f"], p["b_b"]], axis=1),         # (1, 8H)
        "w1f": p["w1"][:HIDDEN],                                    # (H, 32)
        "w1b": p["w1"][HIDDEN:],                                    # (H, 32)
        "b1": p["b1"], "w2": p["w2"], "b2": p["b2"],
        "w3": p["w3"], "b3": p["b3"],
        "w4p": w4p, "b4p": b4p,
    }


# ----------------------------------------------------------------------------
# Forward pass: single fused pallas_call + trivial slice/reshape in wrapper.
# ----------------------------------------------------------------------------
@jax.jit
def forward(token_ids, kp):
    S, B = token_ids.shape
    ids_flat = token_ids.reshape(S * B, 1).astype(jnp.int32)

    kernel = functools.partial(_fused_forward_kernel, seq_len=S, batch=B)
    out = pl.pallas_call(
        kernel,
        out_shape=jax.ShapeDtypeStruct((S * B, PAD_OUT), jnp.float32),
        scratch_shapes=[
            pltpu.VMEM((S * B, HIDDEN), jnp.float32),   # per-step h, forward
            pltpu.VMEM((S * B, HIDDEN), jnp.float32),   # per-step h, backward
        ],
    )(ids_flat, kp["emb"], kp["wih"], kp["whh_f"], kp["whh_b"], kp["b"],
      kp["w1f"], kp["w1b"], kp["b1"], kp["w2"], kp["b2"], kp["w3"], kp["b3"],
      kp["w4p"], kp["b4p"])

    return out[:, :NUM_CLASSES].reshape(S, B, NUM_CLASSES)


# ----------------------------------------------------------------------------
# Pure-JAX reference (for correctness check)
# ----------------------------------------------------------------------------
def forward_ref(token_ids, params):
    emb = jnp.take(params["emb"], token_ids, axis=0)

    def lstm_dir(x, wih, whh, b):
        H = whh.shape[0]

        def step(carry, x_t):
            h, c = carry
            g = x_t @ wih + h @ whh + b[0]
            i = jax.nn.sigmoid(g[:, 0 * H:1 * H])
            f = jax.nn.sigmoid(g[:, 1 * H:2 * H])
            gg = jnp.tanh(g[:, 2 * H:3 * H])
            o = jax.nn.sigmoid(g[:, 3 * H:4 * H])
            c = f * c + i * gg
            h = o * jnp.tanh(c)
            return (h, c), h

        B = x.shape[1]
        init = (jnp.zeros((B, H), jnp.float32), jnp.zeros((B, H), jnp.float32))
        _, hs = jax.lax.scan(step, init, x)
        return hs

    h_f = lstm_dir(emb, params["wih_f"], params["whh_f"], params["b_f"])
    h_b = lstm_dir(emb[::-1], params["wih_b"], params["whh_b"], params["b_b"])[::-1]
    h = jnp.concatenate([h_f, h_b], axis=-1)
    for li in range(1, 4):
        h = jnp.maximum(h @ params[f"w{li}"] + params[f"b{li}"][0], 0.0)
    return h @ params["w4"] + params["b4"][0]


if __name__ == "__main__":
    key = jax.random.PRNGKey(0)
    k_par, k_ids = jax.random.split(key)
    params = make_params(k_par)
    packed = pack_params(params)
    token_ids = jax.random.randint(k_ids, (SEQ, BATCH), 0, VOCAB, dtype=jnp.int32)

    out = forward(token_ids, packed)
    out = jax.block_until_ready(out)
    assert out.shape == (SEQ, BATCH, NUM_CLASSES), out.shape

    ref = forward_ref(token_ids, params)
    assert jnp.allclose(out, ref, atol=2e-3, rtol=2e-3), (
        float(jnp.max(jnp.abs(out - ref))))

    print("KERNEL_OK")
</pallas_src>

<mosaic_0001>
module attributes {stable_mosaic.version = 11 : i64} {
  func.func @_fused_forward_kernel(%arg0: memref<32x1xi32, #tpu.memory_space<vmem>>, %arg1: memref<50x32xf32, #tpu.memory_space<vmem>>, %arg2: memref<32x256xf32, #tpu.memory_space<vmem>>, %arg3: memref<32x128xf32, #tpu.memory_space<vmem>>, %arg4: memref<32x128xf32, #tpu.memory_space<vmem>>, %arg5: memref<1x256xf32, #tpu.memory_space<vmem>>, %arg6: memref<32x32xf32, #tpu.memory_space<vmem>>, %arg7: memref<32x32xf32, #tpu.memory_space<vmem>>, %arg8: memref<1x32xf32, #tpu.memory_space<vmem>>, %arg9: memref<32x16xf32, #tpu.memory_space<vmem>>, %arg10: memref<1x16xf32, #tpu.memory_space<vmem>>, %arg11: memref<16x8xf32, #tpu.memory_space<vmem>>, %arg12: memref<1x8xf32, #tpu.memory_space<vmem>>, %arg13: memref<8x128xf32, #tpu.memory_space<vmem>>, %arg14: memref<1x128xf32, #tpu.memory_space<vmem>>, %arg15: memref<32x128xf32, #tpu.memory_space<vmem>>, %arg16: memref<32x32xf32, #tpu.memory_space<vmem>>, %arg17: memref<32x32xf32, #tpu.memory_space<vmem>>) attributes {dimension_semantics = [], scalar_prefetch = 0 : i64, scratch_operands = 2 : i64, tpu.core_type = #tpu.core_type<tc>} {
    %c0 = arith.constant 0 : index
    %c0_0 = arith.constant 0 : index
    %0 = vector.load %arg0[%c0, %c0_0] : memref<32x1xi32, #tpu.memory_space<vmem>>, vector<32x1xi32>
    %1 = tpu.iota {dimensions = array<i32: 1>} : vector<32x50xi32>
    %2 = vector.broadcast %0 : vector<32x1xi32> to vector<32x50xi32>
    %3 = arith.cmpi eq, %1, %2 : vector<32x50xi32>
    %4 = arith.extui %3 : vector<32x50xi1> to vector<32x50xi32>
    %5 = arith.sitofp %4 : vector<32x50xi32> to vector<32x50xf32>
    %c0_1 = arith.constant 0 : index
    %c0_2 = arith.constant 0 : index
    %6 = vector.load %arg1[%c0_1, %c0_2] : memref<50x32xf32, #tpu.memory_space<vmem>>, vector<50x32xf32>
    %cst = arith.constant dense<0.000000e+00> : vector<32x32xf32>
    %7 = tpu.matmul %5, %6, %cst {dimension_numbers = #tpu.dot_dimension_numbers<[1], [0], [0], [1], [0, 0, 1, 1], [], []>} : vector<32x50xf32>, vector<50x32xf32>, vector<32x32xf32> -> vector<32x32xf32>
    %c0_3 = arith.constant 0 : index
    %c0_4 = arith.constant 0 : index
    %8 = vector.load %arg2[%c0_3, %c0_4] : memref<32x256xf32, #tpu.memory_space<vmem>>, vector<32x256xf32>
    %cst_5 = arith.constant dense<0.000000e+00> : vector<32x256xf32>
    %9 = tpu.matmul %7, %8, %cst_5 {dimension_numbers = #tpu.dot_dimension_numbers<[1], [0], [0], [1], [0, 0, 1, 1], [], []>} : vector<32x32xf32>, vector<32x256xf32>, vector<32x256xf32> -> vector<32x256xf32>
    %c0_6 = arith.constant 0 : index
    %c0_7 = arith.constant 0 : index
    %10 = vector.load %arg5[%c0_6, %c0_7] : memref<1x256xf32, #tpu.memory_space<vmem>>, vector<1x256xf32>
    %11 = vector.broadcast %10 : vector<1x256xf32> to vector<32x256xf32>
    %12 = arith.addf %9, %11 : vector<32x256xf32>
    %c0_8 = arith.constant 0 : index
    %c0_9 = arith.constant 0 : index
    %13 = vector.load %arg3[%c0_8, %c0_9] : memref<32x128xf32, #tpu.memory_space<vmem>>, vector<32x128xf32>
    %c0_10 = arith.constant 0 : index
    %c0_11 = arith.constant 0 : index
    %14 = vector.load %arg4[%c0_10, %c0_11] : memref<32x128xf32, #tpu.memory_space<vmem>>, vector<32x128xf32>
    %cst_12 = arith.constant 0.000000e+00 : f32
    %15 = vector.broadcast %cst_12 : f32 to vector<4x32xf32>
    %cst_13 = arith.constant 0.000000e+00 : f32
    %16 = vector.broadcast %cst_13 : f32 to vector<4x32xf32>
    %cst_14 = arith.constant 0.000000e+00 : f32
    %17 = vector.broadcast %cst_14 : f32 to vector<4x32xf32>
    %cst_15 = arith.constant 0.000000e+00 : f32
    %18 = vector.broadcast %cst_15 : f32 to vector<4x32xf32>
    %cst_16 = arith.constant dense<0.000000e+00> : vector<4x128xf32>
    %19 = tpu.matmul %15, %13, %cst_16 {dimension_numbers = #tpu.dot_dimension_numbers<[1], [0], [0], [1], [0, 0, 1, 1], [], []>} : vector<4x32xf32>, vector<32x128xf32>, vector<4x128xf32> -> vector<4x128xf32>
    %20 = vector.extract_strided_slice %12 {offsets = [0, 0], sizes = [4, 128], strides = [1, 1]} : vector<32x256xf32> to vector<4x128xf32>
    %21 = arith.addf %19, %20 : vector<4x128xf32>
    %cst_17 = arith.constant dense<0.000000e+00> : vector<4x128xf32>
    %22 = tpu.matmul %17, %14, %cst_17 {dimension_numbers = #tpu.dot_dimension_numbers<[1], [0], [0], [1], [0, 0, 1, 1], [], []>} : vector<4x32xf32>, vector<32x128xf32>, vector<4x128xf32> -> vector<4x128xf32>
    %23 = vector.extract_strided_slice %12 {offsets = [28, 128], sizes = [4, 128], strides = [1, 1]} : vector<32x256xf32> to vector<4x128xf32>
    %24 = arith.addf %22, %23 : vector<4x128xf32>
    %25 = vector.extract_strided_slice %21 {offsets = [0, 0], sizes = [4, 32], strides = [1, 1]} : vector<4x128xf32> to vector<4x32xf32>
    %26 = arith.negf %25 : vector<4x32xf32>
    %27 = math.exp %26 : vector<4x32xf32>
    %cst_18 = arith.constant 1.000000e+00 : f32
    %28 = vector.broadcast %cst_18 : f32 to vector<4x32xf32>
    %29 = arith.addf %28, %27 : vector<4x32xf32>
    %30 = arith.divf %28, %29 : vector<4x32xf32>
    %31 = vector.extract_strided_slice %21 {offsets = [0, 32], sizes = [4, 32], strides = [1, 1]} : vector<4x128xf32> to vector<4x32xf32>
    %32 = arith.negf %31 : vector<4x32xf32>
    %33 = math.exp %32 : vector<4x32xf32>
    %cst_19 = arith.constant 1.000000e+00 : f32
    %34 = vector.broadcast %cst_19 : f32 to vector<4x32xf32>
    %35 = arith.addf %34, %33 : vector<4x32xf32>
    %36 = arith.divf %34, %35 : vector<4x32xf32>
    %37 = vector.extract_strided_slice %21 {offsets = [0, 64], sizes = [4, 32], strides = [1, 1]} : vector<4x128xf32> to vector<4x32xf32>
    %38 = math.tanh %37 : vector<4x32xf32>
    %39 = vector.extract_strided_slice %21 {offsets = [0, 96], sizes = [4, 32], strides = [1, 1]} : vector<4x128xf32> to vector<4x32xf32>
    %40 = arith.negf %39 : vector<4x32xf32>
    %41 = math.exp %40 : vector<4x32xf32>
    %cst_20 = arith.constant 1.000000e+00 : f32
    %42 = vector.broadcast %cst_20 : f32 to vector<4x32xf32>
    %43 = arith.addf %42, %41 : vector<4x32xf32>
    %44 = arith.divf %42, %43 : vector<4x32xf32>
    %45 = vector.extract_strided_slice %24 {offsets = [0, 0], sizes = [4, 32], strides = [1, 1]} : vector<4x128xf32> to vector<4x32xf32>
    %46 = arith.negf %45 : vector<4x32xf32>
    %47 = math.exp %46 : vector<4x32xf32>
    %cst_21 = arith.constant 1.000000e+00 : f32
    %48 = vector.broadcast %cst_21 : f32 to vector<4x32xf32>
    %49 = arith.addf %48, %47 : vector<4x32xf32>
    %50 = arith.divf %48, %49 : vector<4x32xf32>
    %51 = vector.extract_strided_slice %24 {offsets = [0, 32], sizes = [4, 32], strides = [1, 1]} : vector<4x128xf32> to vector<4x32xf32>
    %52 = arith.negf %51 : vector<4x32xf32>
    %53 = math.exp %52 : vector<4x32xf32>
    %cst_22 = arith.constant 1.000000e+00 : f32
    %54 = vector.broadcast %cst_22 : f32 to vector<4x32xf32>
    %55 = arith.addf %54, %53 : vector<4x32xf32>
    %56 = arith.divf %54, %55 : vector<4x32xf32>
    %57 = vector.extract_strided_slice %24 {offsets = [0, 64], sizes = [4, 32], strides = [1, 1]} : vector<4x128xf32> to vector<4x32xf32>
    %58 = math.tanh %57 : vector<4x32xf32>
    %59 = vector.extract_strided_slice %24 {offsets = [0, 96], sizes = [4, 32], strides = [1, 1]} : vector<4x128xf32> to vector<4x32xf32>
    %60 = arith.negf %59 : vector<4x32xf32>
    %61 = math.exp %60 : vector<4x32xf32>
    %cst_23 = arith.constant 1.000000e+00 : f32
    %62 = vector.broadcast %cst_23 : f32 to vector<4x32xf32>
    %63 = arith.addf %62, %61 : vector<4x32xf32>
    %64 = arith.divf %62, %63 : vector<4x32xf32>
    %65 = arith.mulf %36, %16 : vector<4x32xf32>
    %66 = arith.mulf %30, %38 : vector<4x32xf32>
    %67 = arith.addf %65, %66 : vector<4x32xf32>
    %68 = math.tanh %67 : vector<4x32xf32>
    %69 = arith.mulf %44, %68 : vector<4x32xf32>
    %70 = arith.mulf %56, %18 : vector<4x32xf32>
    %71 = arith.mulf %50, %58 : vector<4x32xf32>
    %72 = arith.addf %70, %71 : vector<4x32xf32>
    %73 = math.tanh %72 : vector<4x32xf32>
    %74 = arith.mulf %64, %73 : vector<4x32xf32>
    %c0_24 = arith.constant 0 : index
    %c0_25 = arith.constant 0 : index
    %75 = vector.load %arg16[%c0_24, %c0_25] : memref<32x32xf32, #tpu.memory_space<vmem>>, vector<4x32xf32>
    tpu.vector_store %arg16[%c0_24, %c0_25], %69 {strides = array<i32>} : memref<32x32xf32, #tpu.memory_space<vmem>>, vector<4x32xf32>,
    %c28 = arith.constant 28 : index
    %c0_26 = arith.constant 0 : index
    %76 = vector.load %arg17[%c28, %c0_26] : memref<32x32xf32, #tpu.memory_space<vmem>>, vector<4x32xf32>
    tpu.vector_store %arg17[%c28, %c0_26], %74 {strides = array<i32>} : memref<32x32xf32, #tpu.memory_space<vmem>>, vector<4x32xf32>,
    %cst_27 = arith.constant dense<0.000000e+00> : vector<4x128xf32>
    %77 = tpu.matmul %69, %13, %cst_27 {dimension_numbers = #tpu.dot_dimension_numbers<[1], [0], [0], [1], [0, 0, 1, 1], [], []>} : vector<4x32xf32>, vector<32x128xf32>, vector<4x128xf32> -> vector<4x128xf32>
    %78 = vector.extract_strided_slice %12 {offsets = [4, 0], sizes = [4, 128], strides = [1, 1]} : vector<32x256xf32> to vector<4x128xf32>
    %79 = arith.addf %77, %78 : vector<4x128xf32>
    %cst_28 = arith.constant dense<0.000000e+00> : vector<4x128xf32>
    %80 = tpu.matmul %74, %14, %cst_28 {dimension_numbers = #tpu.dot_dimension_numbers<[1], [0], [0], [1], [0, 0, 1, 1], [], []>} : vector<4x32xf32>, vector<32x128xf32>, vector<4x128xf32> -> vector<4x128xf32>
    %81 = vector.extract_strided_slice %12 {offsets = [24, 128], sizes = [4, 128], strides = [1, 1]} : vector<32x256xf32> to vector<4x128xf32>
    %82 = arith.addf %80, %81 : vector<4x128xf32>
    %83 = vector.extract_strided_slice %79 {offsets = [0, 0], sizes = [4, 32], strides = [1, 1]} : vector<4x128xf32> to vector<4x32xf32>
    %84 = arith.negf %83 : vector<4x32xf32>
    %85 = math.exp %84 : vector<4x32xf32>
    %cst_29 = arith.constant 1.000000e+00 : f32
    %86 = vector.broadcast %cst_29 : f32 to vector<4x32xf32>
    %87 = arith.addf %86, %85 : vector<4x32xf32>
    %88 = arith.divf %86, %87 : vector<4x32xf32>
    %89 = vector.extract_strided_slice %79 {offsets = [0, 32], sizes = [4, 32], strides = [1, 1]} : vector<4x128xf32> to vector<4x32xf32>
    %90 = arith.negf %89 : vector<4x32xf32>
    %91 = math.exp %90 : vector<4x32xf32>
    %cst_30 = arith.constant 1.000000e+00 : f32
    %92 = vector.broadcast %cst_30 : f32 to vector<4x32xf32>
    %93 = arith.addf %92, %91 : vector<4x32xf32>
    %94 = arith.divf %92, %93 : vector<4x32xf32>
    %95 = vector.extract_strided_slice %79 {offsets = [0, 64], sizes = [4, 32], strides = [1, 1]} : vector<4x128xf32> to vector<4x32xf32>
    %96 = math.tanh %95 : vector<4x32xf32>
    %97 = vector.extract_strided_slice %79 {offsets = [0, 96], sizes = [4, 32], strides = [1, 1]} : vector<4x128xf32> to vector<4x32xf32>
    %98 = arith.negf %97 : vector<4x32xf32>
    %99 = math.exp %98 : vector<4x32xf32>
    %cst_31 = arith.constant 1.000000e+00 : f32
    %100 = vector.broadcast %cst_31 : f32 to vector<4x32xf32>
    %101 = arith.addf %100, %99 : vector<4x32xf32>
    %102 = arith.divf %100, %101 : vector<4x32xf32>
    %103 = vector.extract_strided_slice %82 {offsets = [0, 0], sizes = [4, 32], strides = [1, 1]} : vector<4x128xf32> to vector<4x32xf32>
    %104 = arith.negf %103 : vector<4x32xf32>
    %105 = math.exp %104 : vector<4x32xf32>
    %cst_32 = arith.constant 1.000000e+00 : f32
    %106 = vector.broadcast %cst_32 : f32 to vector<4x32xf32>
    %107 = arith.addf %106, %105 : vector<4x32xf32>
    %108 = arith.divf %106, %107 : vector<4x32xf32>
    %109 = vector.extract_strided_slice %82 {offsets = [0, 32], sizes = [4, 32], strides = [1, 1]} : vector<4x128xf32> to vector<4x32xf32>
    %110 = arith.negf %109 : vector<4x32xf32>
    %111 = math.exp %110 : vector<4x32xf32>
    %cst_33 = arith.constant 1.000000e+00 : f32
    %112 = vector.broadcast %cst_33 : f32 to vector<4x32xf32>
    %113 = arith.addf %112, %111 : vector<4x32xf32>
    %114 = arith.divf %112, %113 : vector<4x32xf32>
    %115 = vector.extract_strided_slice %82 {offsets = [0, 64], sizes = [4, 32], strides = [1, 1]} : vector<4x128xf32> to vector<4x32xf32>
    %116 = math.tanh %115 : vector<4x32xf32>
    %117 = vector.extract_strided_slice %82 {offsets = [0, 96], sizes = [4, 32], strides = [1, 1]} : vector<4x128xf32> to vector<4x32xf32>
    %118 = arith.negf %117 : vector<4x32xf32>
    %119 = math.exp %118 : vector<4x32xf32>
    %cst_34 = arith.constant 1.000000e+00 : f32
    %120 = vector.broadcast %cst_34 : f32 to vector<4x32xf32>
    %121 = arith.addf %120, %119 : vector<4x32xf32>
    %122 = arith.divf %120, %121 : vector<4x32xf32>
    %123 = arith.mulf %94, %67 : vector<4x32xf32>
    %124 = arith.mulf %88, %96 : vector<4x32xf32>
    %125 = arith.addf %123, %124 : vector<4x32xf32>
    %126 = math.tanh %125 : vector<4x32xf32>
    %127 = arith.mulf %102, %126 : vector<4x32xf32>
    %128 = arith.mulf %114, %72 : vector<4x32xf32>
    %129 = arith.mulf %108, %116 : vector<4x32xf32>
    %130 = arith.addf %128, %129 : vector<4x32xf32>
    %131 = math.tanh %130 : vector<4x32xf32>
    %132 = arith.mulf %122, %131 : vector<4x32xf32>
    %c4 = arith.constant 4 : index
    %c0_35 = arith.constant 0 : index
    %133 = vector.load %arg16[%c4, %c0_35] : memref<32x32xf32, #tpu.memory_space<vmem>>, vector<4x32xf32>
    tpu.vector_store %arg16[%c4, %c0_35], %127 {strides = array<i32>} : memref<32x32xf32, #tpu.memory_space<vmem>>, vector<4x32xf32>,
    %c24 = arith.constant 24 : index
    %c0_36 = arith.constant 0 : index
    %134 = vector.load %arg17[%c24, %c0_36] : memref<32x32xf32, #tpu.memory_space<vmem>>, vector<4x32xf32>
    tpu.vector_store %arg17[%c24, %c0_36], %132 {strides = array<i32>} : memref<32x32xf32, #tpu.memory_space<vmem>>, vector<4x32xf32>,
    %cst_37 = arith.constant dense<0.000000e+00> : vector<4x128xf32>
    %135 = tpu.matmul %127, %13, %cst_37 {dimension_numbers = #tpu.dot_dimension_numbers<[1], [0], [0], [1], [0, 0, 1, 1], [], []>} : vector<4x32xf32>, vector<32x128xf32>, vector<4x128xf32> -> vector<4x128xf32>
    %136 = vector.extract_strided_slice %12 {offsets = [8, 0], sizes = [4, 128], strides = [1, 1]} : vector<32x256xf32> to vector<4x128xf32>
    %137 = arith.addf %135, %136 : vector<4x128xf32>
    %cst_38 = arith.constant dense<0.000000e+00> : vector<4x128xf32>
    %138 = tpu.matmul %132, %14, %cst_38 {dimension_numbers = #tpu.dot_dimension_numbers<[1], [0], [0], [1], [0, 0, 1, 1], [], []>} : vector<4x32xf32>, vector<32x128xf32>, vector<4x128xf32> -> vector<4x128xf32>
    %139 = vector.extract_strided_slice %12 {offsets = [20, 128], sizes = [4, 128], strides = [1, 1]} : vector<32x256xf32> to vector<4x128xf32>
    %140 = arith.addf %138, %139 : vector<4x128xf32>
    %141 = vector.extract_strided_slice %137 {offsets = [0, 0], sizes = [4, 32], strides = [1, 1]} : vector<4x128xf32> to vector<4x32xf32>
    %142 = arith.negf %141 : vector<4x32xf32>
    %143 = math.exp %142 : vector<4x32xf32>
    %cst_39 = arith.constant 1.000000e+00 : f32
    %144 = vector.broadcast %cst_39 : f32 to vector<4x32xf32>
    %145 = arith.addf %144, %143 : vector<4x32xf32>
    %146 = arith.divf %144, %145 : vector<4x32xf32>
    %147 = vector.extract_strided_slice %137 {offsets = [0, 32], sizes = [4, 32], strides = [1, 1]} : vector<4x128xf32> to vector<4x32xf32>
    %148 = arith.negf %147 : vector<4x32xf32>
    %149 = math.exp %148 : vector<4x32xf32>
    %cst_40 = arith.constant 1.000000e+00 : f32
    %150 = vector.broadcast %cst_40 : f32 to vector<4x32xf32>
    %151 = arith.addf %150, %149 : vector<4x32xf32>
    %152 = arith.divf %150, %151 : vector<4x32xf32>
    %153 = vector.extract_strided_slice %137 {offsets = [0, 64], sizes = [4, 32], strides = [1, 1]} : vector<4x128xf32> to vector<4x32xf32>
    %154 = math.tanh %153 : vector<4x32xf32>
    %155 = vector.extract_strided_slice %137 {offsets = [0, 96], sizes = [4, 32], strides = [1, 1]} : vector<4x128xf32> to vector<4x32xf32>
    %156 = arith.negf %155 : vector<4x32xf32>
    %157 = math.exp %156 : vector<4x32xf32>
    %cst_41 = arith.constant 1.000000e+00 : f32
    %158 = vector.broadcast %cst_41 : f32 to vector<4x32xf32>
    %159 = arith.addf %158, %157 : vector<4x32xf32>
    %160 = arith.divf %158, %159 : vector<4x32xf32>
    %161 = vector.extract_strided_slice %140 {offsets = [0, 0], sizes = [4, 32], strides = [1, 1]} : vector<4x128xf32> to vector<4x32xf32>
    %162 = arith.negf %161 : vector<4x32xf32>
    %163 = math.exp %162 : vector<4x32xf32>
    %cst_42 = arith.constant 1.000000e+00 : f32
    %164 = vector.broadcast %cst_42 : f32 to vector<4x32xf32>
    %165 = arith.addf %164, %163 : vector<4x32xf32>
    %166 = arith.divf %164, %165 : vector<4x32xf32>
    %167 = vector.extract_strided_slice %140 {offsets = [0, 32], sizes = [4, 32], strides = [1, 1]} : vector<4x128xf32> to vector<4x32xf32>
    %168 = arith.negf %167 : vector<4x32xf32>
    %169 = math.exp %168 : vector<4x32xf32>
    %cst_43 = arith.constant 1.000000e+00 : f32
    %170 = vector.broadcast %cst_43 : f32 to vector<4x32xf32>
    %171 = arith.addf %170, %169 : vector<4x32xf32>
    %172 = arith.divf %170, %171 : vector<4x32xf32>
    %173 = vector.extract_strided_slice %140 {offsets = [0, 64], sizes = [4, 32], strides = [1, 1]} : vector<4x128xf32> to vector<4x32xf32>
    %174 = math.tanh %173 : vector<4x32xf32>
    %175 = vector.extract_strided_slice %140 {offsets = [0, 96], sizes = [4, 32], strides = [1, 1]} : vector<4x128xf32> to vector<4x32xf32>
    %176 = arith.negf %175 : vector<4x32xf32>
    %177 = math.exp %176 : vector<4x32xf32>
    %cst_44 = arith.constant 1.000000e+00 : f32
    %178 = vector.broadcast %cst_44 : f32 to vector<4x32xf32>
    %179 = arith.addf %178, %177 : vector<4x32xf32>
    %180 = arith.divf %178, %179 : vector<4x32xf32>
    %181 = arith.mulf %152, %125 : vector<4x32xf32>
    %182 = arith.mulf %146, %154 : vector<4x32xf32>
    %183 = arith.addf %181, %182 : vector<4x32xf32>
    %184 = math.tanh %183 : vector<4x32xf32>
    %185 = arith.mulf %160, %184 : vector<4x32xf32>
    %186 = arith.mulf %172, %130 : vector<4x32xf32>
    %187 = arith.mulf %166, %174 : vector<4x32xf32>
    %188 = arith.addf %186, %187 : vector<4x32xf32>
    %189 = math.tanh %188 : vector<4x32xf32>
    %190 = arith.mulf %180, %189 : vector<4x32xf32>
    %c8 = arith.constant 8 : index
    %c0_45 = arith.constant 0 : index
    %191 = vector.load %arg16[%c8, %c0_45] : memref<32x32xf32, #tpu.memory_space<vmem>>, vector<4x32xf32>
    tpu.vector_store %arg16[%c8, %c0_45], %185 {strides = array<i32>} : memref<32x32xf32, #tpu.memory_space<vmem>>, vector<4x32xf32>,
    %c20 = arith.constant 20 : index
    %c0_46 = arith.constant 0 : index
    %192 = vector.load %arg17[%c20, %c0_46] : memref<32x32xf32, #tpu.memory_space<vmem>>, vector<4x32xf32>
    tpu.vector_store %arg17[%c20, %c0_46], %190 {strides = array<i32>} : memref<32x32xf32, #tpu.memory_space<vmem>>, vector<4x32xf32>,
    %cst_47 = arith.constant dense<0.000000e+00> : vector<4x128xf32>
    %193 = tpu.matmul %185, %13, %cst_47 {dimension_numbers = #tpu.dot_dimension_numbers<[1], [0], [0], [1], [0, 0, 1, 1], [], []>} : vector<4x32xf32>, vector<32x128xf32>, vector<4x128xf32> -> vector<4x128xf32>
    %194 = vector.extract_strided_slice %12 {offsets = [12, 0], sizes = [4, 128], strides = [1, 1]} : vector<32x256xf32> to vector<4x128xf32>
    %195 = arith.addf %193, %194 : vector<4x128xf32>
    %cst_48 = arith.constant dense<0.000000e+00> : vector<4x128xf32>
    %196 = tpu.matmul %190, %14, %cst_48 {dimension_numbers = #tpu.dot_dimension_numbers<[1], [0], [0], [1], [0, 0, 1, 1], [], []>} : vector<4x32xf32>, vector<32x128xf32>, vector<4x128xf32> -> vector<4x128xf32>
    %197 = vector.extract_strided_slice %12 {offsets = [16, 128], sizes = [4, 128], strides = [1, 1]} : vector<32x256xf32> to vector<4x128xf32>
    %198 = arith.addf %196, %197 : vector<4x128xf32>
    %199 = vector.extract_strided_slice %195 {offsets = [0, 0], sizes = [4, 32], strides = [1, 1]} : vector<4x128xf32> to vector<4x32xf32>
    %200 = arith.negf %199 : vector<4x32xf32>
    %201 = math.exp %200 : vector<4x32xf32>
    %cst_49 = arith.constant 1.000000e+00 : f32
    %202 = vector.broadcast %cst_49 : f32 to vector<4x32xf32>
    %203 = arith.addf %202, %201 : vector<4x32xf32>
    %204 = arith.divf %202, %203 : vector<4x32xf32>
    %205 = vector.extract_strided_slice %195 {offsets = [0, 32], sizes = [4, 32], strides = [1, 1]} : vector<4x128xf32> to vector<4x32xf32>
    %206 = arith.negf %205 : vector<4x32xf32>
    %207 = math.exp %206 : vector<4x32xf32>
    %cst_50 = arith.constant 1.000000e+00 : f32
    %208 = vector.broadcast %cst_50 : f32 to vector<4x32xf32>
    %209 = arith.addf %208, %207 : vector<4x32xf32>
    %210 = arith.divf %208, %209 : vector<4x32xf32>
    %211 = vector.extract_strided_slice %195 {offsets = [0, 64], sizes = [4, 32], strides = [1, 1]} : vector<4x128xf32> to vector<4x32xf32>
    %212 = math.tanh %211 : vector<4x32xf32>
    %213 = vector.extract_strided_slice %195 {offsets = [0, 96], sizes = [4, 32], strides = [1, 1]} : vector<4x128xf32> to vector<4x32xf32>
    %214 = arith.negf %213 : vector<4x32xf32>
    %215 = math.exp %214 : vector<4x32xf32>
    %cst_51 = arith.constant 1.000000e+00 : f32
    %216 = vector.broadcast %cst_51 : f32 to vector<4x32xf32>
    %217 = arith.addf %216, %215 : vector<4x32xf32>
    %218 = arith.divf %216, %217 : vector<4x32xf32>
    %219 = vector.extract_strided_slice %198 {offsets = [0, 0], sizes = [4, 32], strides = [1, 1]} : vector<4x128xf32> to vector<4x32xf32>
    %220 = arith.negf %219 : vector<4x32xf32>
    %221 = math.exp %220 : vector<4x32xf32>
    %cst_52 = arith.constant 1.000000e+00 : f32
    %222 = vector.broadcast %cst_52 : f32 to vector<4x32xf32>
    %223 = arith.addf %222, %221 : vector<4x32xf32>
    %224 = arith.divf %222, %223 : vector<4x32xf32>
    %225 = vector.extract_strided_slice %198 {offsets = [0, 32], sizes = [4, 32], strides = [1, 1]} : vector<4x128xf32> to vector<4x32xf32>
    %226 = arith.negf %225 : vector<4x32xf32>
    %227 = math.exp %226 : vector<4x32xf32>
    %cst_53 = arith.constant 1.000000e+00 : f32
    %228 = vector.broadcast %cst_53 : f32 to vector<4x32xf32>
    %229 = arith.addf %228, %227 : vector<4x32xf32>
    %230 = arith.divf %228, %229 : vector<4x32xf32>
    %231 = vector.extract_strided_slice %198 {offsets = [0, 64], sizes = [4, 32], strides = [1, 1]} : vector<4x128xf32> to vector<4x32xf32>
    %232 = math.tanh %231 : vector<4x32xf32>
    %233 = vector.extract_strided_slice %198 {offsets = [0, 96], sizes = [4, 32], strides = [1, 1]} : vector<4x128xf32> to vector<4x32xf32>
    %234 = arith.negf %233 : vector<4x32xf32>
    %235 = math.exp %234 : vector<4x32xf32>
    %cst_54 = arith.constant 1.000000e+00 : f32
    %236 = vector.broadcast %cst_54 : f32 to vector<4x32xf32>
    %237 = arith.addf %236, %235 : vector<4x32xf32>
    %238 = arith.divf %236, %237 : vector<4x32xf32>
    %239 = arith.mulf %210, %183 : vector<4x32xf32>
    %240 = arith.mulf %204, %212 : vector<4x32xf32>
    %241 = arith.addf %239, %240 : vector<4x32xf32>
    %242 = math.tanh %241 : vector<4x32xf32>
    %243 = arith.mulf %218, %242 : vector<4x32xf32>
    %244 = arith.mulf %230, %188 : vector<4x32xf32>
    %245 = arith.mulf %224, %232 : vector<4x32xf32>
    %246 = arith.addf %244, %245 : vector<4x32xf32>
    %247 = math.tanh %246 : vector<4x32xf32>
    %248 = arith.mulf %238, %247 : vector<4x32xf32>
    %c12 = arith.constant 12 : index
    %c0_55 = arith.constant 0 : index
    %249 = vector.load %arg16[%c12, %c0_55] : memref<32x32xf32, #tpu.memory_space<vmem>>, vector<4x32xf32>
    tpu.vector_store %arg16[%c12, %c0_55], %243 {strides = array<i32>} : memref<32x32xf32, #tpu.memory_space<vmem>>, vector<4x32xf32>,
    %c16 = arith.constant 16 : index
    %c0_56 = arith.constant 0 : index
    %250 = vector.load %arg17[%c16, %c0_56] : memref<32x32xf32, #tpu.memory_space<vmem>>, vector<4x32xf32>
    tpu.vector_store %arg17[%c16, %c0_56], %248 {strides = array<i32>} : memref<32x32xf32, #tpu.memory_space<vmem>>, vector<4x32xf32>,
    %cst_57 = arith.constant dense<0.000000e+00> : vector<4x128xf32>
    %251 = tpu.matmul %243, %13, %cst_57 {dimension_numbers = #tpu.dot_dimension_numbers<[1], [0], [0], [1], [0, 0, 1, 1], [], []>} : vector<4x32xf32>, vector<32x128xf32>, vector<4x128xf32> -> vector<4x128xf32>
    %252 = vector.extract_strided_slice %12 {offsets = [16, 0], sizes = [4, 128], strides = [1, 1]} : vector<32x256xf32> to vector<4x128xf32>
    %253 = arith.addf %251, %252 : vector<4x128xf32>
    %cst_58 = arith.constant dense<0.000000e+00> : vector<4x128xf32>
    %254 = tpu.matmul %248, %14, %cst_58 {dimension_numbers = #tpu.dot_dimension_numbers<[1], [0], [0], [1], [0, 0, 1, 1], [], []>} : vector<4x32xf32>, vector<32x128xf32>, vector<4x128xf32> -> vector<4x128xf32>
    %255 = vector.extract_strided_slice %12 {offsets = [12, 128], sizes = [4, 128], strides = [1, 1]} : vector<32x256xf32> to vector<4x128xf32>
    %256 = arith.addf %254, %255 : vector<4x128xf32>
    %257 = vector.extract_strided_slice %253 {offsets = [0, 0], sizes = [4, 32], strides = [1, 1]} : vector<4x128xf32> to vector<4x32xf32>
    %258 = arith.negf %257 : vector<4x32xf32>
    %259 = math.exp %258 : vector<4x32xf32>
    %cst_59 = arith.constant 1.000000e+00 : f32
    %260 = vector.broadcast %cst_59 : f32 to vector<4x32xf32>
    %261 = arith.addf %260, %259 : vector<4x32xf32>
    %262 = arith.divf %260, %261 : vector<4x32xf32>
    %263 = vector.extract_strided_slice %253 {offsets = [0, 32], sizes = [4, 32], strides = [1, 1]} : vector<4x128xf32> to vector<4x32xf32>
    %264 = arith.negf %263 : vector<4x32xf32>
    %265 = math.exp %264 : vector<4x32xf32>
    %cst_60 = arith.constant 1.000000e+00 : f32
    %266 = vector.broadcast %cst_60 : f32 to vector<4x32xf32>
    %267 = arith.addf %266, %265 : vector<4x32xf32>
    %268 = arith.divf %266, %267 : vector<4x32xf32>
    %269 = vector.extract_strided_slice %253 {offsets = [0, 64], sizes = [4, 32], strides = [1, 1]} : vector<4x128xf32> to vector<4x32xf32>
    %270 = math.tanh %269 : vector<4x32xf32>
    %271 = vector.extract_strided_slice %253 {offsets = [0, 96], sizes = [4, 32], strides = [1, 1]} : vector<4x128xf32> to vector<4x32xf32>
    %272 = arith.negf %271 : vector<4x32xf32>
    %273 = math.exp %272 : vector<4x32xf32>
    %cst_61 = arith.constant 1.000000e+00 : f32
    %274 = vector.broadcast %cst_61 : f32 to vector<4x32xf32>
    %275 = arith.addf %274, %273 : vector<4x32xf32>
    %276 = arith.divf %274, %275 : vector<4x32xf32>
    %277 = vector.extract_strided_slice %256 {offsets = [0, 0], sizes = [4, 32], strides = [1, 1]} : vector<4x128xf32> to vector<4x32xf32>
    %278 = arith.negf %277 : vector<4x32xf32>
    %279 = math.exp %278 : vector<4x32xf32>
    %cst_62 = arith.constant 1.000000e+00 : f32
    %280 = vector.broadcast %cst_62 : f32 to vector<4x32xf32>
    %281 = arith.addf %280, %279 : vector<4x32xf32>
    %282 = arith.divf %280, %281 : vector<4x32xf32>
    %283 = vector.extract_strided_slice %256 {offsets = [0, 32], sizes = [4, 32], strides = [1, 1]} : vector<4x128xf32> to vector<4x32xf32>
    %284 = arith.negf %283 : vector<4x32xf32>
    %285 = math.exp %284 : vector<4x32xf32>
    %cst_63 = arith.constant 1.000000e+00 : f32
    %286 = vector.broadcast %cst_63 : f32 to vector<4x32xf32>
    %287 = arith.addf %286, %285 : vector<4x32xf32>
    %288 = arith.divf %286, %287 : vector<4x32xf32>
    %289 = vector.extract_strided_slice %256 {offsets = [0, 64], sizes = [4, 32], strides = [1, 1]} : vector<4x128xf32> to vector<4x32xf32>
    %290 = math.tanh %289 : vector<4x32xf32>
    %291 = vector.extract_strided_slice %256 {offsets = [0, 96], sizes = [4, 32], strides = [1, 1]} : vector<4x128xf32> to vector<4x32xf32>
    %292 = arith.negf %291 : vector<4x32xf32>
    %293 = math.exp %292 : vector<4x32xf32>
    %cst_64 = arith.constant 1.000000e+00 : f32
    %294 = vector.broadcast %cst_64 : f32 to vector<4x32xf32>
    %295 = arith.addf %294, %293 : vector<4x32xf32>
    %296 = arith.divf %294, %295 : vector<4x32xf32>
    %297 = arith.mulf %268, %241 : vector<4x32xf32>
    %298 = arith.mulf %262, %270 : vector<4x32xf32>
    %299 = arith.addf %297, %298 : vector<4x32xf32>
    %300 = math.tanh %299 : vector<4x32xf32>
    %301 = arith.mulf %276, %300 : vector<4x32xf32>
    %302 = arith.mulf %288, %246 : vector<4x32xf32>
    %303 = arith.mulf %282, %290 : vector<4x32xf32>
    %304 = arith.addf %302, %303 : vector<4x32xf32>
    %305 = math.tanh %304 : vector<4x32xf32>
    %306 = arith.mulf %296, %305 : vector<4x32xf32>
    %c16_65 = arith.constant 16 : index
    %c0_66 = arith.constant 0 : index
    %307 = vector.load %arg16[%c16_65, %c0_66] : memref<32x32xf32, #tpu.memory_space<vmem>>, vector<4x32xf32>
    tpu.vector_store %arg16[%c16_65, %c0_66], %301 {strides = array<i32>} : memref<32x32xf32, #tpu.memory_space<vmem>>, vector<4x32xf32>,
    %c12_67 = arith.constant 12 : index
    %c0_68 = arith.constant 0 : index
    %308 = vector.load %arg17[%c12_67, %c0_68] : memref<32x32xf32, #tpu.memory_space<vmem>>, vector<4x32xf32>
    tpu.vector_store %arg17[%c12_67, %c0_68], %306 {strides = array<i32>} : memref<32x32xf32, #tpu.memory_space<vmem>>, vector<4x32xf32>,
    %cst_69 = arith.constant dense<0.000000e+00> : vector<4x128xf32>
    %309 = tpu.matmul %301, %13, %cst_69 {dimension_numbers = #tpu.dot_dimension_numbers<[1], [0], [0], [1], [0, 0, 1, 1], [], []>} : vector<4x32xf32>, vector<32x128xf32>, vector<4x128xf32> -> vector<4x128xf32>
    %310 = vector.extract_strided_slice %12 {offsets = [20, 0], sizes = [4, 128], strides = [1, 1]} : vector<32x256xf32> to vector<4x128xf32>
    %311 = arith.addf %309, %310 : vector<4x128xf32>
    %cst_70 = arith.constant dense<0.000000e+00> : vector<4x128xf32>
    %312 = tpu.matmul %306, %14, %cst_70 {dimension_numbers = #tpu.dot_dimension_numbers<[1], [0], [0], [1], [0, 0, 1, 1], [], []>} : vector<4x32xf32>, vector<32x128xf32>, vector<4x128xf32> -> vector<4x128xf32>
    %313 = vector.extract_strided_slice %12 {offsets = [8, 128], sizes = [4, 128], strides = [1, 1]} : vector<32x256xf32> to vector<4x128xf32>
    %314 = arith.addf %312, %313 : vector<4x128xf32>
    %315 = vector.extract_strided_slice %311 {offsets = [0, 0], sizes = [4, 32], strides = [1, 1]} : vector<4x128xf32> to vector<4x32xf32>
    %316 = arith.negf %315 : vector<4x32xf32>
    %317 = math.exp %316 : vector<4x32xf32>
    %cst_71 = arith.constant 1.000000e+00 : f32
    %318 = vector.broadcast %cst_71 : f32 to vector<4x32xf32>
    %319 = arith.addf %318, %317 : vector<4x32xf32>
    %320 = arith.divf %318, %319 : vector<4x32xf32>
    %321 = vector.extract_strided_slice %311 {offsets = [0, 32], sizes = [4, 32], strides = [1, 1]} : vector<4x128xf32> to vector<4x32xf32>
    %322 = arith.negf %321 : vector<4x32xf32>
    %323 = math.exp %322 : vector<4x32xf32>
    %cst_72 = arith.constant 1.000000e+00 : f32
    %324 = vector.broadcast %cst_72 : f32 to vector<4x32xf32>
    %325 = arith.addf %324, %323 : vector<4x32xf32>
    %326 = arith.divf %324, %325 : vector<4x32xf32>
    %327 = vector.extract_strided_slice %311 {offsets = [0, 64], sizes = [4, 32], strides = [1, 1]} : vector<4x128xf32> to vector<4x32xf32>
    %328 = math.tanh %327 : vector<4x32xf32>
    %329 = vector.extract_strided_slice %311 {offsets = [0, 96], sizes = [4, 32], strides = [1, 1]} : vector<4x128xf32> to vector<4x32xf32>
    %330 = arith.negf %329 : vector<4x32xf32>
    %331 = math.exp %330 : vector<4x32xf32>
    %cst_73 = arith.constant 1.000000e+00 : f32
    %332 = vector.broadcast %cst_73 : f32 to vector<4x32xf32>
    %333 = arith.addf %332, %331 : vector<4x32xf32>
    %334 = arith.divf %332, %333 : vector<4x32xf32>
    %335 = vector.extract_strided_slice %314 {offsets = [0, 0], sizes = [4, 32], strides = [1, 1]} : vector<4x128xf32> to vector<4x32xf32>
    %336 = arith.negf %335 : vector<4x32xf32>
    %337 = math.exp %336 : vector<4x32xf32>
    %cst_74 = arith.constant 1.000000e+00 : f32
    %338 = vector.broadcast %cst_74 : f32 to vector<4x32xf32>
    %339 = arith.addf %338, %337 : vector<4x32xf32>
    %340 = arith.divf %338, %339 : vector<4x32xf32>
    %341 = vector.extract_strided_slice %314 {offsets = [0, 32], sizes = [4, 32], strides = [1, 1]} : vector<4x128xf32> to vector<4x32xf32>
    %342 = arith.negf %341 : vector<4x32xf32>
    %343 = math.exp %342 : vector<4x32xf32>
    %cst_75 = arith.constant 1.000000e+00 : f32
    %344 = vector.broadcast %cst_75 : f32 to vector<4x32xf32>
    %345 = arith.addf %344, %343 : vector<4x32xf32>
    %346 = arith.divf %344, %345 : vector<4x32xf32>
    %347 = vector.extract_strided_slice %314 {offsets = [0, 64], sizes = [4, 32], strides = [1, 1]} : vector<4x128xf32> to vector<4x32xf32>
    %348 = math.tanh %347 : vector<4x32xf32>
    %349 = vector.extract_strided_slice %314 {offsets = [0, 96], sizes = [4, 32], strides = [1, 1]} : vector<4x128xf32> to vector<4x32xf32>
    %350 = arith.negf %349 : vector<4x32xf32>
    %351 = math.exp %350 : vector<4x32xf32>
    %cst_76 = arith.constant 1.000000e+00 : f32
    %352 = vector.broadcast %cst_76 : f32 to vector<4x32xf32>
    %353 = arith.addf %352, %351 : vector<4x32xf32>
    %354 = arith.divf %352, %353 : vector<4x32xf32>
    %355 = arith.mulf %326, %299 : vector<4x32xf32>
    %356 = arith.mulf %320, %328 : vector<4x32xf32>
    %357 = arith.addf %355, %356 : vector<4x32xf32>
    %358 = math.tanh %357 : vector<4x32xf32>
    %359 = arith.mulf %334, %358 : vector<4x32xf32>
    %360 = arith.mulf %346, %304 : vector<4x32xf32>
    %361 = arith.mulf %340, %348 : vector<4x32xf32>
    %362 = arith.addf %360, %361 : vector<4x32xf32>
    %363 = math.tanh %362 : vector<4x32xf32>
    %364 = arith.mulf %354, %363 : vector<4x32xf32>
    %c20_77 = arith.constant 20 : index
    %c0_78 = arith.constant 0 : index
    %365 = vector.load %arg16[%c20_77, %c0_78] : memref<32x32xf32, #tpu.memory_space<vmem>>, vector<4x32xf32>
    tpu.vector_store %arg16[%c20_77, %c0_78], %359 {strides = array<i32>} : memref<32x32xf32, #tpu.memory_space<vmem>>, vector<4x32xf32>,
    %c8_79 = arith.constant 8 : index
    %c0_80 = arith.constant 0 : index
    %366 = vector.load %arg17[%c8_79, %c0_80] : memref<32x32xf32, #tpu.memory_space<vmem>>, vector<4x32xf32>
    tpu.vector_store %arg17[%c8_79, %c0_80], %364 {strides = array<i32>} : memref<32x32xf32, #tpu.memory_space<vmem>>, vector<4x32xf32>,
    %cst_81 = arith.constant dense<0.000000e+00> : vector<4x128xf32>
    %367 = tpu.matmul %359, %13, %cst_81 {dimension_numbers = #tpu.dot_dimension_numbers<[1], [0], [0], [1], [0, 0, 1, 1], [], []>} : vector<4x32xf32>, vector<32x128xf32>, vector<4x128xf32> -> vector<4x128xf32>
    %368 = vector.extract_strided_slice %12 {offsets = [24, 0], sizes = [4, 128], strides = [1, 1]} : vector<32x256xf32> to vector<4x128xf32>
    %369 = arith.addf %367, %368 : vector<4x128xf32>
    %cst_82 = arith.constant dense<0.000000e+00> : vector<4x128xf32>
    %370 = tpu.matmul %364, %14, %cst_82 {dimension_numbers = #tpu.dot_dimension_numbers<[1], [0], [0], [1], [0, 0, 1, 1], [], []>} : vector<4x32xf32>, vector<32x128xf32>, vector<4x128xf32> -> vector<4x128xf32>
    %371 = vector.extract_strided_slice %12 {offsets = [4, 128], sizes = [4, 128], strides = [1, 1]} : vector<32x256xf32> to vector<4x128xf32>
    %372 = arith.addf %370, %371 : vector<4x128xf32>
    %373 = vector.extract_strided_slice %369 {offsets = [0, 0], sizes = [4, 32], strides = [1, 1]} : vector<4x128xf32> to vector<4x32xf32>
    %374 = arith.negf %373 : vector<4x32xf32>
    %375 = math.exp %374 : vector<4x32xf32>
    %cst_83 = arith.constant 1.000000e+00 : f32
    %376 = vector.broadcast %cst_83 : f32 to vector<4x32xf32>
    %377 = arith.addf %376, %375 : vector<4x32xf32>
    %378 = arith.divf %376, %377 : vector<4x32xf32>
    %379 = vector.extract_strided_slice %369 {offsets = [0, 32], sizes = [4, 32], strides = [1, 1]} : vector<4x128xf32> to vector<4x32xf32>
    %380 = arith.negf %379 : vector<4x32xf32>
    %381 = math.exp %380 : vector<4x32xf32>
    %cst_84 = arith.constant 1.000000e+00 : f32
    %382 = vector.broadcast %cst_84 : f32 to vector<4x32xf32>
    %383 = arith.addf %382, %381 : vector<4x32xf32>
    %384 = arith.divf %382, %383 : vector<4x32xf32>
    %385 = vector.extract_strided_slice %369 {offsets = [0, 64], sizes = [4, 32], strides = [1, 1]} : vector<4x128xf32> to vector<4x32xf32>
    %386 = math.tanh %385 : vector<4x32xf32>
    %387 = vector.extract_strided_slice %369 {offsets = [0, 96], sizes = [4, 32], strides = [1, 1]} : vector<4x128xf32> to vector<4x32xf32>
    %388 = arith.negf %387 : vector<4x32xf32>
    %389 = math.exp %388 : vector<4x32xf32>
    %cst_85 = arith.constant 1.000000e+00 : f32
    %390 = vector.broadcast %cst_85 : f32 to vector<4x32xf32>
    %391 = arith.addf %390, %389 : vector<4x32xf32>
    %392 = arith.divf %390, %391 : vector<4x32xf32>
    %393 = vector.extract_strided_slice %372 {offsets = [0, 0], sizes = [4, 32], strides = [1, 1]} : vector<4x128xf32> to vector<4x32xf32>
    %394 = arith.negf %393 : vector<4x32xf32>
    %395 = math.exp %394 : vector<4x32xf32>
    %cst_86 = arith.constant 1.000000e+00 : f32
    %396 = vector.broadcast %cst_86 : f32 to vector<4x32xf32>
    %397 = arith.addf %396, %395 : vector<4x32xf32>
    %398 = arith.divf %396, %397 : vector<4x32xf32>
    %399 = vector.extract_strided_slice %372 {offsets = [0, 32], sizes = [4, 32], strides = [1, 1]} : vector<4x128xf32> to vector<4x32xf32>
    %400 = arith.negf %399 : vector<4x32xf32>
    %401 = math.exp %400 : vector<4x32xf32>
    %cst_87 = arith.constant 1.000000e+00 : f32
    %402 = vector.broadcast %cst_87 : f32 to vector<4x32xf32>
    %403 = arith.addf %402, %401 : vector<4x32xf32>
    %404 = arith.divf %402, %403 : vector<4x32xf32>
    %405 = vector.extract_strided_slice %372 {offsets = [0, 64], sizes = [4, 32], strides = [1, 1]} : vector<4x128xf32> to vector<4x32xf32>
    %406 = math.tanh %405 : vector<4x32xf32>
    %407 = vector.extract_strided_slice %372 {offsets = [0, 96], sizes = [4, 32], strides = [1, 1]} : vector<4x128xf32> to vector<4x32xf32>
    %408 = arith.negf %407 : vector<4x32xf32>
    %409 = math.exp %408 : vector<4x32xf32>
    %cst_88 = arith.constant 1.000000e+00 : f32
    %410 = vector.broadcast %cst_88 : f32 to vector<4x32xf32>
    %411 = arith.addf %410, %409 : vector<4x32xf32>
    %412 = arith.divf %410, %411 : vector<4x32xf32>
    %413 = arith.mulf %384, %357 : vector<4x32xf32>
    %414 = arith.mulf %378, %386 : vector<4x32xf32>
    %415 = arith.addf %413, %414 : vector<4x32xf32>
    %416 = math.tanh %415 : vector<4x32xf32>
    %417 = arith.mulf %392, %416 : vector<4x32xf32>
    %418 = arith.mulf %404, %362 : vector<4x32xf32>
    %419 = arith.mulf %398, %406 : vector<4x32xf32>
    %420 = arith.addf %418, %419 : vector<4x32xf32>
    %421 = math.tanh %420 : vector<4x32xf32>
    %422 = arith.mulf %412, %421 : vector<4x32xf32>
    %c24_89 = arith.constant 24 : index
    %c0_90 = arith.constant 0 : index
    %423 = vector.load %arg16[%c24_89, %c0_90] : memref<32x32xf32, #tpu.memory_space<vmem>>, vector<4x32xf32>
    tpu.vector_store %arg16[%c24_89, %c0_90], %417 {strides = array<i32>} : memref<32x32xf32, #tpu.memory_space<vmem>>, vector<4x32xf32>,
    %c4_91 = arith.constant 4 : index
    %c0_92 = arith.constant 0 : index
    %424 = vector.load %arg17[%c4_91, %c0_92] : memref<32x32xf32, #tpu.memory_space<vmem>>, vector<4x32xf32>
    tpu.vector_store %arg17[%c4_91, %c0_92], %422 {strides = array<i32>} : memref<32x32xf32, #tpu.memory_space<vmem>>, vector<4x32xf32>,
    %cst_93 = arith.constant dense<0.000000e+00> : vector<4x128xf32>
    %425 = tpu.matmul %417, %13, %cst_93 {dimension_numbers = #tpu.dot_dimension_numbers<[1], [0], [0], [1], [0, 0, 1, 1], [], []>} : vector<4x32xf32>, vector<32x128xf32>, vector<4x128xf32> -> vector<4x128xf32>
    %426 = vector.extract_strided_slice %12 {offsets = [28, 0], sizes = [4, 128], strides = [1, 1]} : vector<32x256xf32> to vector<4x128xf32>
    %427 = arith.addf %425, %426 : vector<4x128xf32>
    %cst_94 = arith.constant dense<0.000000e+00> : vector<4x128xf32>
    %428 = tpu.matmul %422, %14, %cst_94 {dimension_numbers = #tpu.dot_dimension_numbers<[1], [0], [0], [1], [0, 0, 1, 1], [], []>} : vector<4x32xf32>, vector<32x128xf32>, vector<4x128xf32> -> vector<4x128xf32>
    %429 = vector.extract_strided_slice %12 {offsets = [0, 128], sizes = [4, 128], strides = [1, 1]} : vector<32x256xf32> to vector<4x128xf32>
    %430 = arith.addf %428, %429 : vector<4x128xf32>
    %431 = vector.extract_strided_slice %427 {offsets = [0, 0], sizes = [4, 32], strides = [1, 1]} : vector<4x128xf32> to vector<4x32xf32>
    %432 = arith.negf %431 : vector<4x32xf32>
    %433 = math.exp %432 : vector<4x32xf32>
    %cst_95 = arith.constant 1.000000e+00 : f32
    %434 = vector.broadcast %cst_95 : f32 to vector<4x32xf32>
    %435 = arith.addf %434, %433 : vector<4x32xf32>
    %436 = arith.divf %434, %435 : vector<4x32xf32>
    %437 = vector.extract_strided_slice %427 {offsets = [0, 32], sizes = [4, 32], strides = [1, 1]} : vector<4x128xf32> to vector<4x32xf32>
    %438 = arith.negf %437 : vector<4x32xf32>
    %439 = math.exp %438 : vector<4x32xf32>
    %cst_96 = arith.constant 1.000000e+00 : f32
    %440 = vector.broadcast %cst_96 : f32 to vector<4x32xf32>
    %441 = arith.addf %440, %439 : vector<4x32xf32>
    %442 = arith.divf %440, %441 : vector<4x32xf32>
    %443 = vector.extract_strided_slice %427 {offsets = [0, 64], sizes = [4, 32], strides = [1, 1]} : vector<4x128xf32> to vector<4x32xf32>
    %444 = math.tanh %443 : vector<4x32xf32>
    %445 = vector.extract_strided_slice %427 {offsets = [0, 96], sizes = [4, 32], strides = [1, 1]} : vector<4x128xf32> to vector<4x32xf32>
    %446 = arith.negf %445 : vector<4x32xf32>
    %447 = math.exp %446 : vector<4x32xf32>
    %cst_97 = arith.constant 1.000000e+00 : f32
    %448 = vector.broadcast %cst_97 : f32 to vector<4x32xf32>
    %449 = arith.addf %448, %447 : vector<4x32xf32>
    %450 = arith.divf %448, %449 : vector<4x32xf32>
    %451 = vector.extract_strided_slice %430 {offsets = [0, 0], sizes = [4, 32], strides = [1, 1]} : vector<4x128xf32> to vector<4x32xf32>
    %452 = arith.negf %451 : vector<4x32xf32>
    %453 = math.exp %452 : vector<4x32xf32>
    %cst_98 = arith.constant 1.000000e+00 : f32
    %454 = vector.broadcast %cst_98 : f32 to vector<4x32xf32>
    %455 = arith.addf %454, %453 : vector<4x32xf32>
    %456 = arith.divf %454, %455 : vector<4x32xf32>
    %457 = vector.extract_strided_slice %430 {offsets = [0, 32], sizes = [4, 32], strides = [1, 1]} : vector<4x128xf32> to vector<4x32xf32>
    %458 = arith.negf %457 : vector<4x32xf32>
    %459 = math.exp %458 : vector<4x32xf32>
    %cst_99 = arith.constant 1.000000e+00 : f32
    %460 = vector.broadcast %cst_99 : f32 to vector<4x32xf32>
    %461 = arith.addf %460, %459 : vector<4x32xf32>
    %462 = arith.divf %460, %461 : vector<4x32xf32>
    %463 = vector.extract_strided_slice %430 {offsets = [0, 64], sizes = [4, 32], strides = [1, 1]} : vector<4x128xf32> to vector<4x32xf32>
    %464 = math.tanh %463 : vector<4x32xf32>
    %465 = vector.extract_strided_slice %430 {offsets = [0, 96], sizes = [4, 32], strides = [1, 1]} : vector<4x128xf32> to vector<4x32xf32>
    %466 = arith.negf %465 : vector<4x32xf32>
    %467 = math.exp %466 : vector<4x32xf32>
    %cst_100 = arith.constant 1.000000e+00 : f32
    %468 = vector.broadcast %cst_100 : f32 to vector<4x32xf32>
    %469 = arith.addf %468, %467 : vector<4x32xf32>
    %470 = arith.divf %468, %469 : vector<4x32xf32>
    %471 = arith.mulf %442, %415 : vector<4x32xf32>
    %472 = arith.mulf %436, %444 : vector<4x32xf32>
    %473 = arith.addf %471, %472 : vector<4x32xf32>
    %474 = math.tanh %473 : vector<4x32xf32>
    %475 = arith.mulf %450, %474 : vector<4x32xf32>
    %476 = arith.mulf %462, %420 : vector<4x32xf32>
    %477 = arith.mulf %456, %464 : vector<4x32xf32>
    %478 = arith.addf %476, %477 : vector<4x32xf32>
    %479 = math.tanh %478 : vector<4x32xf32>
    %480 = arith.mulf %470, %479 : vector<4x32xf32>
    %c28_101 = arith.constant 28 : index
    %c0_102 = arith.constant 0 : index
    %481 = vector.load %arg16[%c28_101, %c0_102] : memref<32x32xf32, #tpu.memory_space<vmem>>, vector<4x32xf32>
    tpu.vector_store %arg16[%c28_101, %c0_102], %475 {strides = array<i32>} : memref<32x32xf32, #tpu.memory_space<vmem>>, vector<4x32xf32>,
    %c0_103 = arith.constant 0 : index
    %c0_104 = arith.constant 0 : index
    %482 = vector.load %arg17[%c0_103, %c0_104] : memref<32x32xf32, #tpu.memory_space<vmem>>, vector<4x32xf32>
    tpu.vector_store %arg17[%c0_103, %c0_104], %480 {strides = array<i32>} : memref<32x32xf32, #tpu.memory_space<vmem>>, vector<4x32xf32>,
    %c0_105 = arith.constant 0 : index
    %c0_106 = arith.constant 0 : index
    %483 = vector.load %arg16[%c0_105, %c0_106] : memref<32x32xf32, #tpu.memory_space<vmem>>, vector<32x32xf32>
    %c0_107 = arith.constant 0 : index
    %c0_108 = arith.constant 0 : index
    %484 = vector.load %arg6[%c0_107, %c0_108] : memref<32x32xf32, #tpu.memory_space<vmem>>, vector<32x32xf32>
    %cst_109 = arith.constant dense<0.000000e+00> : vector<32x32xf32>
    %485 = tpu.matmul %483, %484, %cst_109 {dimension_numbers = #tpu.dot_dimension_numbers<[1], [0], [0], [1], [0, 0, 1, 1], [], []>} : vector<32x32xf32>, vector<32x32xf32>, vector<32x32xf32> -> vector<32x32xf32>
    %c0_110 = arith.constant 0 : index
    %c0_111 = arith.constant 0 : index
    %486 = vector.load %arg17[%c0_110, %c0_111] : memref<32x32xf32, #tpu.memory_space<vmem>>, vector<32x32xf32>
    %c0_112 = arith.constant 0 : index
    %c0_113 = arith.constant 0 : index
    %487 = vector.load %arg7[%c0_112, %c0_113] : memref<32x32xf32, #tpu.memory_space<vmem>>, vector<32x32xf32>
    %cst_114 = arith.constant dense<0.000000e+00> : vector<32x32xf32>
    %488 = tpu.matmul %486, %487, %cst_114 {dimension_numbers = #tpu.dot_dimension_numbers<[1], [0], [0], [1], [0, 0, 1, 1], [], []>} : vector<32x32xf32>, vector<32x32xf32>, vector<32x32xf32> -> vector<32x32xf32>
    %489 = arith.addf %485, %488 : vector<32x32xf32>
    %c0_115 = arith.constant 0 : index
    %c0_116 = arith.constant 0 : index
    %490 = vector.load %arg8[%c0_115, %c0_116] : memref<1x32xf32, #tpu.memory_space<vmem>>, vector<1x32xf32>
    %491 = vector.broadcast %490 : vector<1x32xf32> to vector<32x32xf32>
    %492 = arith.addf %489, %491 : vector<32x32xf32>
    %cst_117 = arith.constant 0.000000e+00 : f32
    %493 = vector.broadcast %cst_117 : f32 to vector<32x32xf32>
    %494 = arith.maximumf %492, %493 : vector<32x32xf32>
    %c0_118 = arith.constant 0 : index
    %c0_119 = arith.constant 0 : index
    %495 = vector.load %arg9[%c0_118, %c0_119] : memref<32x16xf32, #tpu.memory_space<vmem>>, vector<32x16xf32>
    %cst_120 = arith.constant dense<0.000000e+00> : vector<32x16xf32>
    %496 = tpu.matmul %494, %495, %cst_120 {dimension_numbers = #tpu.dot_dimension_numbers<[1], [0], [0], [1], [0, 0, 1, 1], [], []>} : vector<32x32xf32>, vector<32x16xf32>, vector<32x16xf32> -> vector<32x16xf32>
    %c0_121 = arith.constant 0 : index
    %c0_122 = arith.constant 0 : index
    %497 = vector.load %arg10[%c0_121, %c0_122] : memref<1x16xf32, #tpu.memory_space<vmem>>, vector<1x16xf32>
    %498 = vector.broadcast %497 : vector<1x16xf32> to vector<32x16xf32>
    %499 = arith.addf %496, %498 : vector<32x16xf32>
    %cst_123 = arith.constant 0.000000e+00 : f32
    %500 = vector.broadcast %cst_123 : f32 to vector<32x16xf32>
    %501 = arith.maximumf %499, %500 : vector<32x16xf32>
    %c0_124 = arith.constant 0 : index
    %c0_125 = arith.constant 0 : index
    %502 = vector.load %arg11[%c0_124, %c0_125] : memref<16x8xf32, #tpu.memory_space<vmem>>, vector<16x8xf32>
    %cst_126 = arith.constant dense<0.000000e+00> : vector<32x8xf32>
    %503 = tpu.matmul %501, %502, %cst_126 {dimension_numbers = #tpu.dot_dimension_numbers<[1], [0], [0], [1], [0, 0, 1, 1], [], []>} : vector<32x16xf32>, vector<16x8xf32>, vector<32x8xf32> -> vector<32x8xf32>
    %c0_127 = arith.constant 0 : index
    %c0_128 = arith.constant 0 : index
    %504 = vector.load %arg12[%c0_127, %c0_128] : memref<1x8xf32, #tpu.memory_space<vmem>>, vector<1x8xf32>
    %505 = vector.broadcast %504 : vector<1x8xf32> to vector<32x8xf32>
    %506 = arith.addf %503, %505 : vector<32x8xf32>
    %cst_129 = arith.constant 0.000000e+00 : f32
    %507 = vector.broadcast %cst_129 : f32 to vector<32x8xf32>
    %508 = arith.maximumf %506, %507 : vector<32x8xf32>
    %c0_130 = arith.constant 0 : index
    %c0_131 = arith.constant 0 : index
    %509 = vector.load %arg13[%c0_130, %c0_131] : memref<8x128xf32, #tpu.memory_space<vmem>>, vector<8x128xf32>
    %cst_132 = arith.constant dense<0.000000e+00> : vector<32x128xf32>
    %510 = tpu.matmul %508, %509, %cst_132 {dimension_numbers = #tpu.dot_dimension_numbers<[1], [0], [0], [1], [0, 0, 1, 1], [], []>} : vector<32x8xf32>, vector<8x128xf32>, vector<32x128xf32> -> vector<32x128xf32>
    %c0_133 = arith.constant 0 : index
    %c0_134 = arith.constant 0 : index
    %511 = vector.load %arg14[%c0_133, %c0_134] : memref<1x128xf32, #tpu.memory_space<vmem>>, vector<1x128xf32>
    %512 = vector.broadcast %511 : vector<1x128xf32> to vector<32x128xf32>
    %513 = arith.addf %510, %512 : vector<32x128xf32>
    %c0_135 = arith.constant 0 : index
    %c0_136 = arith.constant 0 : index
    %514 = vector.load %arg15[%c0_135, %c0_136] : memref<32x128xf32, #tpu.memory_space<vmem>>, vector<32x128xf32>
    tpu.vector_store %arg15[%c0_135, %c0_136], %513 {strides = array<i32>} : memref<32x128xf32, #tpu.memory_space<vmem>>, vector<32x128xf32>,
    return
  }
}

</mosaic_0001>

<llo_original>
// kernel: forward.1
$region0: #{forward.1}
  #allocation0 [shape = 'u32[]', space=smem, size = 0x4, offset = 0x4, fixed_abs, tag = 'smem constant byte address 0x4 - core index']
  #allocation1 [shape = 'u32[144,128]{1,0:T(1,128)}', space=vmem, size = 0x12000, scoped, tag = 'internal scratch']
  #allocation2 [shape = 'f32[32,32]{1,0:T(8,128)}', space=vmem, size = 0x4000, scoped, tag = 'scratch operand']
  #allocation3 [shape = 'f32[32,32]{1,0:T(8,128)}', space=vmem, size = 0x4000, scoped, tag = 'scratch operand']
  %s0 = inlined_call_operand.vmem [shape: s32[32,1], index: 0, kind: input, shape index: {}]
  %s1 = inlined_call_operand.vmem [shape: f32[50,32], index: 1, kind: input, shape index: {}]
  %s2 = inlined_call_operand.vmem [shape: f32[32,256], index: 2, kind: input, shape index: {}]
  %s3 = inlined_call_operand.vmem [shape: f32[32,128], index: 3, kind: input, shape index: {}]
  %s4 = inlined_call_operand.vmem [shape: f32[32,128], index: 4, kind: input, shape index: {}]
  %s5 = inlined_call_operand.hbm [shape: f32[1,256], index: 5, kind: input, shape index: {}]
  %s6 = inlined_call_operand.vmem [shape: f32[32,32], index: 6, kind: input, shape index: {}]
  %s7 = inlined_call_operand.vmem [shape: f32[32,32], index: 7, kind: input, shape index: {}]
  %s8 = inlined_call_operand.vmem [shape: f32[1,32], index: 8, kind: input, shape index: {}]
  %s9 = inlined_call_operand.vmem [shape: f32[32,16], index: 9, kind: input, shape index: {}]
  %s10 = inlined_call_operand.hbm [shape: f32[1,16], index: 10, kind: input, shape index: {}]
  %s11 = inlined_call_operand.vmem [shape: f32[16,8], index: 11, kind: input, shape index: {}]
  %s12 = inlined_call_operand.hbm [shape: f32[1,8], index: 12, kind: input, shape index: {}]
  %s13 = inlined_call_operand.hbm [shape: f32[8,128], index: 13, kind: input, shape index: {}]
  %s14 = inlined_call_operand.hbm [shape: f32[1,128], index: 14, kind: input, shape index: {}]
  %s15 = inlined_call_operand.vmem [shape: f32[32,128], index: 15, kind: output, shape index: {}]
  %s16 = sld [smem:[#allocation0]]
  $region90: #{forward.1} parent=0
    _
  %s18 = ssub.s32 1, %s16
  %s19 = scalar_select 0, %s18, %s16
  $region1: #{forward.1} parent=0
    #allocation4 [shape = 'u8[1024]{0}', space=vmem, size = 0x400, scoped, tag = 'input window, operand 5, single buffered']
    #allocation5 [shape = 's32[1]{0}', space=sflag, size = 0x4, scoped, tag = 'scoped memory for forward.1']
    #allocation6 [shape = 'u8[512]{0}', space=vmem, size = 0x400, scoped, tag = 'input window, operand 10, single buffered']
    #allocation7 [shape = 's32[1]{0}', space=sflag, size = 0x4, scoped, tag = 'scoped memory for forward.1']
    #allocation8 [shape = 'u8[512]{0}', space=vmem, size = 0x400, scoped, tag = 'input window, operand 12, single buffered']
    #allocation9 [shape = 'u8[4096]{0}', space=vmem, size = 0x1000, scoped, tag = 'input window, operand 13, single buffered']
    #allocation10 [shape = 's32[1]{0}', space=sflag, size = 0x4, scoped, tag = 'scoped memory for forward.1']
    #allocation11 [shape = 'u8[512]{0}', space=vmem, size = 0x400, scoped, tag = 'input window, operand 14, single buffered']
    %20 = vsyncpa [#allocation5], 0
    %21 = vsyncpa [#allocation7], 0
    %22 = vsyncpa [#allocation10], 0
    // Predicated region
    $region2: #{forward.1} parent=1 // pred_check
      _
    $region3: #{forward.1} parent=1 // pred_check_branch
      %24 = sbr.rel (0) target = $region5
    $region4: #{forward.1} parent=1 // pred_region
      _
    $region5: #{forward.1} parent=1 // pred_fallthru
      _
    // Predicated region
    $region6: #{forward.1} parent=1 // pred_check
      _
    $region7: #{forward.1} parent=1 // pred_check_branch
      %26 = sbr.rel (0) target = $region9
    $region8: #{forward.1} parent=1 // pred_region
      _
    $region9: #{forward.1} parent=1 // pred_fallthru
      _
    // Predicated region
    $region10: #{forward.1} parent=1 // pred_check
      _
    $region11: #{forward.1} parent=1 // pred_check_branch
      %28 = sbr.rel (0) target = $region13
    $region12: #{forward.1} parent=1 // pred_region
      _
    $region13: #{forward.1} parent=1 // pred_fallthru
      _
    // Predicated region
    $region14: #{forward.1} parent=1 // pred_check
      _
    $region15: #{forward.1} parent=1 // pred_check_branch
      %30 = sbr.rel (0) target = $region17
    $region16: #{forward.1} parent=1 // pred_region
      _
    $region17: #{forward.1} parent=1 // pred_fallthru
      _
    // Predicated region
    $region18: #{forward.1} parent=1 // pred_check
      _
    $region19: #{forward.1} parent=1 // pred_check_branch
      %32 = sbr.rel (0) target = $region21
    $region20: #{forward.1} parent=1 // pred_region
      _
    $region21: #{forward.1} parent=1 // pred_fallthru
      _
    // Predicated region
    $region22: #{forward.1} parent=1 // pred_check
      _
    $region23: #{forward.1} parent=1 // pred_check_branch
      %34 = sbr.rel (0) target = $region25
    $region24: #{forward.1} parent=1 // pred_region
      %s36 = ssub.s32 32, 32
      %37 = vsyncadd [#allocation5], %s36
      %s39 = sshll.u32 [#allocation4], 4
      %s40 = int_to_ptr.vmem [resolvable:$true] %s39
      %42 = dma.hbm_to_vmem [thread:$0]  %s5, 32, %s40, [#allocation5]
    $region25: #{forward.1} parent=1 // pred_fallthru
      _
    // Predicated region
    $region26: #{forward.1} parent=1 // pred_check
      _
    $region27: #{forward.1} parent=1 // pred_check_branch
      %44 = sbr.rel (0) target = $region29
    $region28: #{forward.1} parent=1 // pred_region
      _
    $region29: #{forward.1} parent=1 // pred_fallthru
      _
    // Predicated region
    $region30: #{forward.1} parent=1 // pred_check
      _
    $region31: #{forward.1} parent=1 // pred_check_branch
      %46 = sbr.rel (0) target = $region33
    $region32: #{forward.1} parent=1 // pred_region
      _
    $region33: #{forward.1} parent=1 // pred_fallthru
      _
    // Predicated region
    $region34: #{forward.1} parent=1 // pred_check
      _
    $region35: #{forward.1} parent=1 // pred_check_branch
      %48 = sbr.rel (0) target = $region37
    $region36: #{forward.1} parent=1 // pred_region
      _
    $region37: #{forward.1} parent=1 // pred_fallthru
      _
    // Predicated region
    $region38: #{forward.1} parent=1 // pred_check
      _
    $region39: #{forward.1} parent=1 // pred_check_branch
      %50 = sbr.rel (0) target = $region41
    $region40: #{forward.1} parent=1 // pred_region
      _
    $region41: #{forward.1} parent=1 // pred_fallthru
      _
    // Predicated region
    $region42: #{forward.1} parent=1 // pred_check
      _
    $region43: #{forward.1} parent=1 // pred_check_branch
      %52 = sbr.rel (0) target = $region45
    $region44: #{forward.1} parent=1 // pred_region
      %s54 = ssub.s32 16, 16
      %55 = vsyncadd [#allocation7], %s54
      %s57 = sshll.u32 [#allocation6], 4
      %s58 = int_to_ptr.vmem [resolvable:$true] %s57
      %60 = dma.hbm_to_vmem [thread:$0]  %s10, 16, %s58, [#allocation7]
    $region45: #{forward.1} parent=1 // pred_fallthru
      _
    // Predicated region
    $region46: #{forward.1} parent=1 // pred_check
      _
    $region47: #{forward.1} parent=1 // pred_check_branch
      %62 = sbr.rel (0) target = $region49
    $region48: #{forward.1} parent=1 // pred_region
      _
    $region49: #{forward.1} parent=1 // pred_fallthru
      _
    // Predicated region
    $region50: #{forward.1} parent=1 // pred_check
      _
    $region51: #{forward.1} parent=1 // pred_check_branch
      %64 = sbr.rel (0) target = $region53
    $region52: #{forward.1} parent=1 // pred_region
      %s66 = ssub.s32 16, 16
      %67 = vsyncadd [#allocation7], %s66
      %s69 = sshll.u32 [#allocation8], 4
      %s70 = int_to_ptr.vmem [resolvable:$true] %s69
      %72 = dma.hbm_to_vmem [thread:$0]  %s12, 16, %s70, [#allocation7]
    $region53: #{forward.1} parent=1 // pred_fallthru
      _
    // Predicated region
    $region54: #{forward.1} parent=1 // pred_check
      _
    $region55: #{forward.1} parent=1 // pred_check_branch
      %74 = sbr.rel (0) target = $region57
    $region56: #{forward.1} parent=1 // pred_region
      %s76 = ssub.s32 128, 128
      %77 = vsyncadd [#allocation10], %s76
      %s79 = sshll.u32 [#allocation9], 4
      %s80 = int_to_ptr.vmem [resolvable:$true] %s79
      %82 = dma.hbm_to_vmem [thread:$0]  %s13, 128, %s80, [#allocation10]
    $region57: #{forward.1} parent=1 // pred_fallthru
      _
    // Predicated region
    $region58: #{forward.1} parent=1 // pred_check
      _
    $region59: #{forward.1} parent=1 // pred_check_branch
      %84 = sbr.rel (0) target = $region61
    $region60: #{forward.1} parent=1 // pred_region
      %s86 = ssub.s32 16, 16
      %87 = vsyncadd [#allocation10], %s86
      %s89 = sshll.u32 [#allocation11], 4
      %s90 = int_to_ptr.vmem [resolvable:$true] %s89
      %92 = dma.hbm_to_vmem [thread:$0]  %s14, 16, %s90, [#allocation10]
    $region61: #{forward.1} parent=1 // pred_fallthru
      _
    // Predicated region
    $region62: #{forward.1} parent=1 // pred_check
      _
    $region63: #{forward.1} parent=1 // pred_check_branch
      %94 = sbr.rel (0) target = $region65
    $region64: #{forward.1} parent=1 // pred_region
      %95 = dma.done [#allocation5], 32
    $region65: #{forward.1} parent=1 // pred_fallthru
      _
    // Predicated region
    $region66: #{forward.1} parent=1 // pred_check
      _
    $region67: #{forward.1} parent=1 // pred_check_branch
      %97 = sbr.rel (0) target = $region69
    $region68: #{forward.1} parent=1 // pred_region
      %98 = dma.done [#allocation7], 16
    $region69: #{forward.1} parent=1 // pred_fallthru
      _
    // Predicated region
    $region70: #{forward.1} parent=1 // pred_check
      _
    $region71: #{forward.1} parent=1 // pred_check_branch
      %100 = sbr.rel (0) target = $region73
    $region72: #{forward.1} parent=1 // pred_region
      %101 = dma.done [#allocation7], 16
    $region73: #{forward.1} parent=1 // pred_fallthru
      _
    // Predicated region
    $region74: #{forward.1} parent=1 // pred_check
      _
    $region75: #{forward.1} parent=1 // pred_check_branch
      %103 = sbr.rel (0) target = $region77
    $region76: #{forward.1} parent=1 // pred_region
      %104 = dma.done [#allocation10], 128
    $region77: #{forward.1} parent=1 // pred_fallthru
      _
    // Predicated region
    $region78: #{forward.1} parent=1 // pred_check
      _
    $region79: #{forward.1} parent=1 // pred_check_branch
      %106 = sbr.rel (0) target = $region81
    $region80: #{forward.1} parent=1 // pred_region
      %107 = dma.done [#allocation10], 16
    $region81: #{forward.1} parent=1 // pred_fallthru
      _
    %v108 = vld [vmem:[%s0] sm:$0xff]
    %v109 = vld [vmem:[%s0 + $0x8] sm:$0xff]
    %v110 = vld [vmem:[%s0 + $0x10] sm:$0xff]
    %v111 = vld [vmem:[%s0 + $0x18] sm:$0xff]
    %v112 = vlaneseq
    %v113 = vand.u32 %v112, 127
    %114 = vset.pattern.permute.xlu0 0
    %115 = vperm.xlu0 %114, %v108
    %v116 = vpop.permute.xlu0 %115
    %117 = vset.pattern.permute.xlu0 0
    %118 = vperm.xlu0 %117, %v109
    %v119 = vpop.permute.xlu0 %118
    %120 = vset.pattern.permute.xlu0 0
    %121 = vperm.xlu0 %120, %v110
    %v122 = vpop.permute.xlu0 %121
    %123 = vset.pattern.permute.xlu0 0
    %124 = vperm.xlu0 %123, %v111
    %v125 = vpop.permute.xlu0 %124
    %vm126 = vcmp.eq.s32.totalorder %v113, %v116
    %vm127 = vcmp.eq.s32.totalorder %v113, %v119
    %vm128 = vcmp.eq.s32.totalorder %v113, %v122
    %vm129 = vcmp.eq.s32.totalorder %v113, %v125
    %v130 = vsel %vm126, 1, 0
    %v131 = vsel %vm127, 1, 0
    %v132 = vsel %vm128, 1, 0
    %v133 = vsel %vm129, 1, 0
    %v134 = vcvt.s32.f32 %v130
    %v135 = vcvt.s32.f32 %v131
    %v136 = vcvt.s32.f32 %v132
    %v137 = vcvt.s32.f32 %v133
    %v138 = vld [vmem:[%s1] sm:$0xff]
    %v139 = vld [vmem:[%s1 + $0x8] sm:$0xff]
    %v140 = vld [vmem:[%s1 + $0x10] sm:$0xff]
    %v141 = vld [vmem:[%s1 + $0x18] sm:$0xff]
    %v142 = vld [vmem:[%s1 + $0x20] sm:$0xff]
    %v143 = vld [vmem:[%s1 + $0x28] sm:$0xff]
    %v144 = vld [vmem:[%s1 + $0x30] sm:$0x3]
    %vm145 = vcmask 408576
    %v147 = vsel %vm145, %v134, 0
    %v150 = vsel %vm145, %v135, 0
    %v153 = vsel %vm145, %v136, 0
    %v156 = vsel %vm145, %v137, 0
    %vm158 = vcmask 1041408
    %v160 = vsel %vm158, %v144, 0
    %162 = vmatprep.subr.mxu0 0.0
    %163 = vmatpush1.msra.mxu0 %v138
    %164 = vmatprep.subr.mxu0 0.0
    %165 = vmatpush1.msra.mxu0 %v139
    %166 = vmatprep.subr.mxu0 0.0
    %167 = vmatpush1.msra.mxu0 %v140
    %168 = vmatprep.subr.mxu0 0.0
    %169 = vmatpush1.msra.mxu0 %v141
    %170 = vmatprep.subr.mxu0 0.0
    %171 = vmatpush1.msra.mxu0 %v142
    %172 = vmatprep.subr.mxu0 0.0
    %173 = vmatpush1.msra.mxu0 %v143
    %174 = vmatprep.subr.mxu0 0.0
    %175 = vmatpush1.msra.mxu0 %v160
    %176 = vmatprep.subr.mxu0 0.0
    %177 = vmatpush1.msra.mxu0 0.0
    %178 = vmatprep.subr.mxu0 0.0
    %179 = vmatpush1.msra.mxu0 0.0
    %180 = vmatprep.subr.mxu0 0.0
    %181 = vmatpush1.msra.mxu0 0.0
    %182 = vmatprep.subr.mxu0 0.0
    %183 = vmatpush1.msra.mxu0 0.0
    %184 = vmatprep.subr.mxu0 0.0
    %185 = vmatpush1.msra.mxu0 0.0
    %186 = vmatprep.subr.mxu0 0.0
    %187 = vmatpush1.msra.mxu0 0.0
    %188 = vmatprep.subr.mxu0 0.0
    %189 = vmatpush1.msra.mxu0 0.0
    %190 = vmatprep.subr.mxu0 0.0
    %191 = vmatpush1.msra.mxu0 0.0
    %192 = vmatprep.subr.mxu0 0.0
    %193 = vmatpush1.msra.mxu0 0.0
    %194 = vmatprep.subr.mxu0 0.0
    %195 = vmatpush1.msra.mxu0 0.0
    %196 = vmatprep.subr.mxu0 0.0
    %197 = vmatpush1.msra.mxu0 0.0
    %198 = vmatprep.subr.mxu0 0.0
    %199 = vmatpush1.msra.mxu0 0.0
    %200 = vmatprep.subr.mxu0 0.0
    %201 = vmatpush1.msra.mxu0 0.0
    %202 = vmatprep.subr.mxu0 0.0
    %203 = vmatpush1.msra.mxu0 0.0
    %204 = vmatprep.subr.mxu0 0.0
    %205 = vmatpush1.msra.mxu0 0.0
    %206 = vmatprep.subr.mxu0 0.0
    %207 = vmatpush1.msra.mxu0 0.0
    %208 = vmatprep.subr.mxu0 0.0
    %209 = vmatpush1.msra.mxu0 0.0
    %210 = vmatprep.subr.mxu0 0.0
    %211 = vmatpush1.msra.mxu0 0.0
    %212 = vmatprep.subr.mxu0 0.0
    %213 = vmatpush1.msra.mxu0 0.0
    %214 = vmatprep.subr.mxu0 0.0
    %215 = vmatpush1.msra.mxu0 0.0
    %216 = vmatprep.subr.mxu0 0.0
    %217 = vmatpush1.msra.mxu0 0.0
    %218 = vmatprep.subr.mxu0 0.0
    %219 = vmatpush1.msra.mxu0 0.0
    %220 = vmatprep.subr.mxu0 0.0
    %221 = vmatpush1.msra.mxu0 0.0
    %222 = vmatprep.subr.mxu0 0.0
    %223 = vmatpush1.msra.mxu0 0.0
    %224 = vmatprep.subr.mxu0 0.0
    %225 = vmatpush1.msra.mxu0 0.0
    %226 = vmatprep.mubr.f32.mxu0 0.0
    %227 = vmatmul.mubr.f32.gmra.mrb[0].mxu0 %v147
    %v228 = vpop.f32.mrb[0].mxu0
    %v229 = vadd.f32 0.0, %v228
    %v230 = vpop.f32.mrb[0].mxu0
    %231 = vmatprep.mubr.f32.mxu0 0.0
    %232 = vmatmul.mubr.f32.gmra.mrb[0].mxu0 %v150
    %v233 = vpop.f32.mrb[0].mxu0
    %v234 = vadd.f32 0.0, %v233
    %v235 = vpop.f32.mrb[0].mxu0
    %236 = vmatprep.mubr.f32.mxu0 0.0
    %237 = vmatmul.mubr.f32.gmra.mrb[0].mxu0 %v153
    %v238 = vpop.f32.mrb[0].mxu0
    %v239 = vadd.f32 0.0, %v238
    %v240 = vpop.f32.mrb[0].mxu0
    %241 = vmatprep.mubr.f32.mxu0 0.0
    %242 = vmatmul.mubr.f32.gmra.mrb[0].mxu0 %v156
    %v243 = vpop.f32.mrb[0].mxu0
    %v244 = vadd.f32 0.0, %v243
    %v245 = vpop.f32.mrb[0].mxu0
    %246 = vdwg.mxu0
    %v247 = vld [vmem:[%s2] sm:$0xff]
    %v248 = vld [vmem:[%s2 + $0x8] sm:$0xff]
    %v249 = vld [vmem:[%s2 + $0x10] sm:$0xff]
    %v250 = vld [vmem:[%s2 + $0x18] sm:$0xff]
    %v251 = vld [vmem:[%s2 + $0x20] sm:$0xff]
    %v252 = vld [vmem:[%s2 + $0x28] sm:$0xff]
    %v253 = vld [vmem:[%s2 + $0x30] sm:$0xff]
    %v254 = vld [vmem:[%s2 + $0x38] sm:$0xff]
    %v255 = vld [vmem:[#allocation4] sm:$0x3]
    %v257 = vlaneseq
    %v258 = vshrl.u32 %v257, 7
    %v259 = vsub.s32 0, %v258
    %v260 = vrot.slane %v255, %v259
    %v261 = vlaneseq
    %v262 = vshrl.u32 %v261, 7
    %v263 = vsub.s32 1, %v262
    %v264 = vrot.slane %v255, %v263
    %vm267 = vcmask 261120
    %v269 = vsel %vm267, %v229, 0
    %v272 = vsel %vm267, %v234, 0
    %v275 = vsel %vm267, %v239, 0
    %v278 = vsel %vm267, %v244, 0
    %280 = vmatprep.subr.mxu0 %v248
    %281 = vmatpush1.msra.mxu0 %v247
    %282 = vmatprep.subr.mxu0 %v250
    %283 = vmatpush1.msra.mxu0 %v249
    %284 = vmatprep.subr.mxu0 %v252
    %285 = vmatpush1.msra.mxu0 %v251
    %286 = vmatprep.subr.mxu0 %v254
    %287 = vmatpush1.msra.mxu0 %v253
    %288 = vmatprep.subr.mxu0 0.0
    %289 = vmatpush1.msra.mxu0 0.0
    %290 = vmatprep.subr.mxu0 0.0
    %291 = vmatpush1.msra.mxu0 0.0
    %292 = vmatprep.subr.mxu0 0.0
    %293 = vmatpush1.msra.mxu0 0.0
    %294 = vmatprep.subr.mxu0 0.0
    %295 = vmatpush1.msra.mxu0 0.0
    %296 = vmatprep.subr.mxu0 0.0
    %297 = vmatpush1.msra.mxu0 0.0
    %298 = vmatprep.subr.mxu0 0.0
    %299 = vmatpush1.msra.mxu0 0.0
    %300 = vmatprep.subr.mxu0 0.0
    %301 = vmatpush1.msra.mxu0 0.0
    %302 = vmatprep.subr.mxu0 0.0
    %303 = vmatpush1.msra.mxu0 0.0
    %304 = vmatprep.subr.mxu0 0.0
    %305 = vmatpush1.msra.mxu0 0.0
    %306 = vmatprep.subr.mxu0 0.0
    %307 = vmatpush1.msra.mxu0 0.0
    %308 = vmatprep.subr.mxu0 0.0
    %309 = vmatpush1.msra.mxu0 0.0
    %310 = vmatprep.subr.mxu0 0.0
    %311 = vmatpush1.msra.mxu0 0.0
    %312 = vmatprep.subr.mxu0 0.0
    %313 = vmatpush1.msra.mxu0 0.0
    %314 = vmatprep.subr.mxu0 0.0
    %315 = vmatpush1.msra.mxu0 0.0
    %316 = vmatprep.subr.mxu0 0.0
    %317 = vmatpush1.msra.mxu0 0.0
    %318 = vmatprep.subr.mxu0 0.0
    %319 = vmatpush1.msra.mxu0 0.0
    %320 = vmatprep.subr.mxu0 0.0
    %321 = vmatpush1.msra.mxu0 0.0
    %322 = vmatprep.subr.mxu0 0.0
    %323 = vmatpush1.msra.mxu0 0.0
    %324 = vmatprep.subr.mxu0 0.0
    %325 = vmatpush1.msra.mxu0 0.0
    %326 = vmatprep.subr.mxu0 0.0
    %327 = vmatpush1.msra.mxu0 0.0
    %328 = vmatprep.subr.mxu0 0.0
    %329 = vmatpush1.msra.mxu0 0.0
    %330 = vmatprep.subr.mxu0 0.0
    %331 = vmatpush1.msra.mxu0 0.0
    %332 = vmatprep.subr.mxu0 0.0
    %333 = vmatpush1.msra.mxu0 0.0
    %334 = vmatprep.subr.mxu0 0.0
    %335 = vmatpush1.msra.mxu0 0.0
    %336 = vmatprep.subr.mxu0 0.0
    %337 = vmatpush1.msra.mxu0 0.0
    %338 = vmatprep.subr.mxu0 0.0
    %339 = vmatpush1.msra.mxu0 0.0
    %340 = vmatprep.subr.mxu0 0.0
    %341 = vmatpush1.msra.mxu0 0.0
    %342 = vmatprep.subr.mxu0 0.0
    %343 = vmatpush1.msra.mxu0 0.0
    %344 = vmatprep.mubr.f32.mxu0 0.0
    %345 = vmatmul.mubr.f32.gmra.mrb[0].mxu0 %v269
    %v346 = vpop.f32.mrb[0].mxu0
    %v347 = vadd.f32 %v260, %v346
    %v348 = vpop.f32.mrb[0].mxu0
    %v349 = vadd.f32 %v264, %v348
    %350 = vmatprep.mubr.f32.mxu0 0.0
    %351 = vmatmul.mubr.f32.gmra.mrb[0].mxu0 %v272
    %v352 = vpop.f32.mrb[0].mxu0
    %v353 = vadd.f32 %v260, %v352
    %v354 = vpop.f32.mrb[0].mxu0
    %v355 = vadd.f32 %v264, %v354
    %356 = vmatprep.mubr.f32.mxu0 0.0
    %357 = vmatmul.mubr.f32.gmra.mrb[0].mxu0 %v275
    %v358 = vpop.f32.mrb[0].mxu0
    %v359 = vadd.f32 %v260, %v358
    %v360 = vpop.f32.mrb[0].mxu0
    %v361 = vadd.f32 %v264, %v360
    %362 = vmatprep.mubr.f32.mxu0 0.0
    %363 = vmatmul.mubr.f32.gmra.mrb[0].mxu0 %v278
    %v364 = vpop.f32.mrb[0].mxu0
    %v365 = vadd.f32 %v260, %v364
    %v366 = vpop.f32.mrb[0].mxu0
    %v367 = vadd.f32 %v264, %v366
    %368 = vdwg.mxu0
    %v369 = vld [vmem:[%s3] sm:$0xff]
    %v370 = vld [vmem:[%s3 + $0x8] sm:$0xff]
    %v371 = vld [vmem:[%s3 + $0x10] sm:$0xff]
    %v372 = vld [vmem:[%s3 + $0x18] sm:$0xff]
    %v373 = vld [vmem:[%s4] sm:$0xff]
    %v374 = vld [vmem:[%s4 + $0x8] sm:$0xff]
    %v375 = vld [vmem:[%s4 + $0x10] sm:$0xff]
    %v376 = vld [vmem:[%s4 + $0x18] sm:$0xff]
    %v378 = vsel %vm267, 0.0, 0
    %380 = vmatprep.subr.mxu0 0.0
    %381 = vmatpush1.msra.mxu0 %v369
    %382 = vmatprep.subr.mxu0 0.0
    %383 = vmatpush1.msra.mxu0 %v370
    %384 = vmatprep.subr.mxu0 0.0
    %385 = vmatpush1.msra.mxu0 %v371
    %386 = vmatprep.subr.mxu0 0.0
    %387 = vmatpush1.msra.mxu0 %v372
    %388 = vmatprep.subr.mxu0 0.0
    %389 = vmatpush1.msra.mxu0 0.0
    %390 = vmatprep.subr.mxu0 0.0
    %391 = vmatpush1.msra.mxu0 0.0
    %392 = vmatprep.subr.mxu0 0.0
    %393 = vmatpush1.msra.mxu0 0.0
    %394 = vmatprep.subr.mxu0 0.0
    %395 = vmatpush1.msra.mxu0 0.0
    %396 = vmatprep.subr.mxu0 0.0
    %397 = vmatpush1.msra.mxu0 0.0
    %398 = vmatprep.subr.mxu0 0.0
    %399 = vmatpush1.msra.mxu0 0.0
    %400 = vmatprep.subr.mxu0 0.0
    %401 = vmatpush1.msra.mxu0 0.0
    %402 = vmatprep.subr.mxu0 0.0
    %403 = vmatpush1.msra.mxu0 0.0
    %404 = vmatprep.subr.mxu0 0.0
    %405 = vmatpush1.msra.mxu0 0.0
    %406 = vmatprep.subr.mxu0 0.0
    %407 = vmatpush1.msra.mxu0 0.0
    %408 = vmatprep.subr.mxu0 0.0
    %409 = vmatpush1.msra.mxu0 0.0
    %410 = vmatprep.subr.mxu0 0.0
    %411 = vmatpush1.msra.mxu0 0.0
    %412 = vmatprep.subr.mxu0 0.0
    %413 = vmatpush1.msra.mxu0 0.0
    %414 = vmatprep.subr.mxu0 0.0
    %415 = vmatpush1.msra.mxu0 0.0
    %416 = vmatprep.subr.mxu0 0.0
    %417 = vmatpush1.msra.mxu0 0.0
    %418 = vmatprep.subr.mxu0 0.0
    %419 = vmatpush1.msra.mxu0 0.0
    %420 = vmatprep.subr.mxu0 0.0
    %421 = vmatpush1.msra.mxu0 0.0
    %422 = vmatprep.subr.mxu0 0.0
    %423 = vmatpush1.msra.mxu0 0.0
    %424 = vmatprep.subr.mxu0 0.0
    %425 = vmatpush1.msra.mxu0 0.0
    %426 = vmatprep.subr.mxu0 0.0
    %427 = vmatpush1.msra.mxu0 0.0
    %428 = vmatprep.subr.mxu0 0.0
    %429 = vmatpush1.msra.mxu0 0.0
    %430 = vmatprep.subr.mxu0 0.0
    %431 = vmatpush1.msra.mxu0 0.0
    %432 = vmatprep.subr.mxu0 0.0
    %433 = vmatpush1.msra.mxu0 0.0
    %434 = vmatprep.subr.mxu0 0.0
    %435 = vmatpush1.msra.mxu0 0.0
    %436 = vmatprep.subr.mxu0 0.0
    %437 = vmatpush1.msra.mxu0 0.0
    %438 = vmatprep.subr.mxu0 0.0
    %439 = vmatpush1.msra.mxu0 0.0
    %440 = vmatprep.subr.mxu0 0.0
    %441 = vmatpush1.msra.mxu0 0.0
    %442 = vmatprep.subr.mxu0 0.0
    %443 = vmatpush1.msra.mxu0 0.0
    %444 = vmatprep.mubr.f32.mxu0 0.0
    %445 = vmatmul.mubr.f32.gmra.mrb[0].mxu0 %v378
    %v446 = vpop.f32.mrb[0].mxu0
    %v447 = vadd.f32 %v347, %v446
    %v448 = vpop.f32.mrb[0].mxu0
    %449 = vdwg.mxu0
    %v451 = vrot.slane %v367, 4
    %453 = vmatprep.subr.mxu0 0.0
    %454 = vmatpush1.msra.mxu0 %v373
    %455 = vmatprep.subr.mxu0 0.0
    %456 = vmatpush1.msra.mxu0 %v374
    %457 = vmatprep.subr.mxu0 0.0
    %458 = vmatpush1.msra.mxu0 %v375
    %459 = vmatprep.subr.mxu0 0.0
    %460 = vmatpush1.msra.mxu0 %v376
    %461 = vmatprep.subr.mxu0 0.0
    %462 = vmatpush1.msra.mxu0 0.0
    %463 = vmatprep.subr.mxu0 0.0
    %464 = vmatpush1.msra.mxu0 0.0
    %465 = vmatprep.subr.mxu0 0.0
    %466 = vmatpush1.msra.mxu0 0.0
    %467 = vmatprep.subr.mxu0 0.0
    %468 = vmatpush1.msra.mxu0 0.0
    %469 = vmatprep.subr.mxu0 0.0
    %470 = vmatpush1.msra.mxu0 0.0
    %471 = vmatprep.subr.mxu0 0.0
    %472 = vmatpush1.msra.mxu0 0.0
    %473 = vmatprep.subr.mxu0 0.0
    %474 = vmatpush1.msra.mxu0 0.0
    %475 = vmatprep.subr.mxu0 0.0
    %476 = vmatpush1.msra.mxu0 0.0
    %477 = vmatprep.subr.mxu0 0.0
    %478 = vmatpush1.msra.mxu0 0.0
    %479 = vmatprep.subr.mxu0 0.0
    %480 = vmatpush1.msra.mxu0 0.0
    %481 = vmatprep.subr.mxu0 0.0
    %482 = vmatpush1.msra.mxu0 0.0
    %483 = vmatprep.subr.mxu0 0.0
    %484 = vmatpush1.msra.mxu0 0.0
    %485 = vmatprep.subr.mxu0 0.0
    %486 = vmatpush1.msra.mxu0 0.0
    %487 = vmatprep.subr.mxu0 0.0
    %488 = vmatpush1.msra.mxu0 0.0
    %489 = vmatprep.subr.mxu0 0.0
    %490 = vmatpush1.msra.mxu0 0.0
    %491 = vmatprep.subr.mxu0 0.0
    %492 = vmatpush1.msra.mxu0 0.0
    %493 = vmatprep.subr.mxu0 0.0
    %494 = vmatpush1.msra.mxu0 0.0
    %495 = vmatprep.subr.mxu0 0.0
    %496 = vmatpush1.msra.mxu0 0.0
    %497 = vmatprep.subr.mxu0 0.0
    %498 = vmatpush1.msra.mxu0 0.0
    %499 = vmatprep.subr.mxu0 0.0
    %500 = vmatpush1.msra.mxu0 0.0
    %501 = vmatprep.subr.mxu0 0.0
    %502 = vmatpush1.msra.mxu0 0.0
    %503 = vmatprep.subr.mxu0 0.0
    %504 = vmatpush1.msra.mxu0 0.0
    %505 = vmatprep.subr.mxu0 0.0
    %506 = vmatpush1.msra.mxu0 0.0
    %507 = vmatprep.subr.mxu0 0.0
    %508 = vmatpush1.msra.mxu0 0.0
    %509 = vmatprep.subr.mxu0 0.0
    %510 = vmatpush1.msra.mxu0 0.0
    %511 = vmatprep.subr.mxu0 0.0
    %512 = vmatpush1.msra.mxu0 0.0
    %513 = vmatprep.subr.mxu0 0.0
    %514 = vmatpush1.msra.mxu0 0.0
    %515 = vmatprep.subr.mxu0 0.0
    %516 = vmatpush1.msra.mxu0 0.0
    %517 = vmatprep.mubr.f32.mxu0 0.0
    %518 = vmatmul.mubr.f32.gmra.mrb[0].mxu0 %v378
    %v519 = vpop.f32.mrb[0].mxu0
    %v520 = vadd.f32 %v451, %v519
    %v521 = vpop.f32.mrb[0].mxu0
    %522 = vdwg.mxu0
    %v523 = vxor.u32 %v447, 2147483648
    %v524 = vmul.f32 %v523, 1.442695
    %v525 = vpow.pop %v524
    %v526 = vadd.f32 %v525, 1.0
    %v527 = vrcp.pop %v526
    %v528 = vmul.f32 1.0, %v527
    %v529 = vtanh.pop %v447
    %v530 = vxor.u32 %v520, 2147483648
    %v531 = vmul.f32 %v530, 1.442695
    %v532 = vpow.pop %v531
    %v533 = vadd.f32 %v532, 1.0
    %v534 = vrcp.pop %v533
    %v535 = vmul.f32 1.0, %v534
    %v536 = vtanh.pop %v520
    %v537 = vmul.f32 %v528, 0.0
    %539 = vrot.lane.b32.xlu0 %v529, 64
    %v540 = vpop.permute.xlu0 %539
    %v542 = vmul.f32 %v528, %v540
    %544 = vrot.lane.b32.xlu0 %v542, 32
    %v545 = vpop.permute.xlu0 %544
    %v547 = vadd.f32 %v537, %v545
    %v548 = vtanh.pop %v547
    %550 = vrot.lane.b32.xlu0 %v548, 64
    %v551 = vpop.permute.xlu0 %550
    %v553 = vmul.f32 %v528, %v551
    %v554 = vmul.f32 %v535, 0.0
    %556 = vrot.lane.b32.xlu0 %v536, 64
    %v557 = vpop.permute.xlu0 %556
    %v559 = vmul.f32 %v535, %v557
    %561 = vrot.lane.b32.xlu0 %v559, 32
    %v562 = vpop.permute.xlu0 %561
    %v564 = vadd.f32 %v554, %v562
    %v565 = vtanh.pop %v564
    %567 = vrot.lane.b32.xlu0 %v565, 64
    %v568 = vpop.permute.xlu0 %567
    %v570 = vmul.f32 %v535, %v568
    %572 = vrot.lane.b32.xlu0 %v553, 32
    %v573 = vpop.permute.xlu0 %572
    %vm575 = vcmask 257024
    %576 = vst.msk [vmem:[#allocation2] sm:$0xf] %vm575, %v573
    %578 = vrot.lane.b32.xlu0 %v570, 32
    %v579 = vpop.permute.xlu0 %578
    %581 = vst.msk [vmem:[#allocation3 + $0x1c] sm:$0xf] %vm575, %v579
    %v583 = vrot.slane %v347, 4
    %v585 = vsel %vm267, %v573, 0
    %587 = vmatprep.subr.mxu0 0.0
    %588 = vmatpush1.msra.mxu0 %v369
    %589 = vmatprep.subr.mxu0 0.0
    %590 = vmatpush1.msra.mxu0 %v370
    %591 = vmatprep.subr.mxu0 0.0
    %592 = vmatpush1.msra.mxu0 %v371
    %593 = vmatprep.subr.mxu0 0.0
    %594 = vmatpush1.msra.mxu0 %v372
    %595 = vmatprep.subr.mxu0 0.0
    %596 = vmatpush1.msra.mxu0 0.0
    %597 = vmatprep.subr.mxu0 0.0
    %598 = vmatpush1.msra.mxu0 0.0
    %599 = vmatprep.subr.mxu0 0.0
    %600 = vmatpush1.msra.mxu0 0.0
    %601 = vmatprep.subr.mxu0 0.0
    %602 = vmatpush1.msra.mxu0 0.0
    %603 = vmatprep.subr.mxu0 0.0
    %604 = vmatpush1.msra.mxu0 0.0
    %605 = vmatprep.subr.mxu0 0.0
    %606 = vmatpush1.msra.mxu0 0.0
    %607 = vmatprep.subr.mxu0 0.0
    %608 = vmatpush1.msra.mxu0 0.0
    %609 = vmatprep.subr.mxu0 0.0
    %610 = vmatpush1.msra.mxu0 0.0
    %611 = vmatprep.subr.mxu0 0.0
    %612 = vmatpush1.msra.mxu0 0.0
    %613 = vmatprep.subr.mxu0 0.0
    %614 = vmatpush1.msra.mxu0 0.0
    %615 = vmatprep.subr.mxu0 0.0
    %616 = vmatpush1.msra.mxu0 0.0
    %617 = vmatprep.subr.mxu0 0.0
    %618 = vmatpush1.msra.mxu0 0.0
    %619 = vmatprep.subr.mxu0 0.0
    %620 = vmatpush1.msra.mxu0 0.0
    %621 = vmatprep.subr.mxu0 0.0
    %622 = vmatpush1.msra.mxu0 0.0
    %623 = vmatprep.subr.mxu0 0.0
    %624 = vmatpush1.msra.mxu0 0.0
    %625 = vmatprep.subr.mxu0 0.0
    %626 = vmatpush1.msra.mxu0 0.0
    %627 = vmatprep.subr.mxu0 0.0
    %628 = vmatpush1.msra.mxu0 0.0
    %629 = vmatprep.subr.mxu0 0.0
    %630 = vmatpush1.msra.mxu0 0.0
    %631 = vmatprep.subr.mxu0 0.0
    %632 = vmatpush1.msra.mxu0 0.0
    %633 = vmatprep.subr.mxu0 0.0
    %634 = vmatpush1.msra.mxu0 0.0
    %635 = vmatprep.subr.mxu0 0.0
    %636 = vmatpush1.msra.mxu0 0.0
    %637 = vmatprep.subr.mxu0 0.0
    %638 = vmatpush1.msra.mxu0 0.0
    %639 = vmatprep.subr.mxu0 0.0
    %640 = vmatpush1.msra.mxu0 0.0
    %641 = vmatprep.subr.mxu0 0.0
    %642 = vmatpush1.msra.mxu0 0.0
    %643 = vmatprep.subr.mxu0 0.0
    %644 = vmatpush1.msra.mxu0 0.0
    %645 = vmatprep.subr.mxu0 0.0
    %646 = vmatpush1.msra.mxu0 0.0
    %647 = vmatprep.subr.mxu0 0.0
    %648 = vmatpush1.msra.mxu0 0.0
    %649 = vmatprep.subr.mxu0 0.0
    %650 = vmatpush1.msra.mxu0 0.0
    %651 = vmatprep.mubr.f32.mxu0 0.0
    %652 = vmatmul.mubr.f32.gmra.mrb[0].mxu0 %v585
    %v653 = vpop.f32.mrb[0].mxu0
    %v654 = vadd.f32 %v583, %v653
    %v655 = vpop.f32.mrb[0].mxu0
    %656 = vdwg.mxu0
    %v657 = vsel %vm267, %v579, 0
    %659 = vmatprep.subr.mxu0 0.0
    %660 = vmatpush1.msra.mxu0 %v373
    %661 = vmatprep.subr.mxu0 0.0
    %662 = vmatpush1.msra.mxu0 %v374
    %663 = vmatprep.subr.mxu0 0.0
    %664 = vmatpush1.msra.mxu0 %v375
    %665 = vmatprep.subr.mxu0 0.0
    %666 = vmatpush1.msra.mxu0 %v376
    %667 = vmatprep.subr.mxu0 0.0
    %668 = vmatpush1.msra.mxu0 0.0
    %669 = vmatprep.subr.mxu0 0.0
    %670 = vmatpush1.msra.mxu0 0.0
    %671 = vmatprep.subr.mxu0 0.0
    %672 = vmatpush1.msra.mxu0 0.0
    %673 = vmatprep.subr.mxu0 0.0
    %674 = vmatpush1.msra.mxu0 0.0
    %675 = vmatprep.subr.mxu0 0.0
    %676 = vmatpush1.msra.mxu0 0.0
    %677 = vmatprep.subr.mxu0 0.0
    %678 = vmatpush1.msra.mxu0 0.0
    %679 = vmatprep.subr.mxu0 0.0
    %680 = vmatpush1.msra.mxu0 0.0
    %681 = vmatprep.subr.mxu0 0.0
    %682 = vmatpush1.msra.mxu0 0.0
    %683 = vmatprep.subr.mxu0 0.0
    %684 = vmatpush1.msra.mxu0 0.0
    %685 = vmatprep.subr.mxu0 0.0
    %686 = vmatpush1.msra.mxu0 0.0
    %687 = vmatprep.subr.mxu0 0.0
    %688 = vmatpush1.msra.mxu0 0.0
    %689 = vmatprep.subr.mxu0 0.0
    %690 = vmatpush1.msra.mxu0 0.0
    %691 = vmatprep.subr.mxu0 0.0
    %692 = vmatpush1.msra.mxu0 0.0
    %693 = vmatprep.subr.mxu0 0.0
    %694 = vmatpush1.msra.mxu0 0.0
    %695 = vmatprep.subr.mxu0 0.0
    %696 = vmatpush1.msra.mxu0 0.0
    %697 = vmatprep.subr.mxu0 0.0
    %698 = vmatpush1.msra.mxu0 0.0
    %699 = vmatprep.subr.mxu0 0.0
    %700 = vmatpush1.msra.mxu0 0.0
    %701 = vmatprep.subr.mxu0 0.0
    %702 = vmatpush1.msra.mxu0 0.0
    %703 = vmatprep.subr.mxu0 0.0
    %704 = vmatpush1.msra.mxu0 0.0
    %705 = vmatprep.subr.mxu0 0.0
    %706 = vmatpush1.msra.mxu0 0.0
    %707 = vmatprep.subr.mxu0 0.0
    %708 = vmatpush1.msra.mxu0 0.0
    %709 = vmatprep.subr.mxu0 0.0
    %710 = vmatpush1.msra.mxu0 0.0
    %711 = vmatprep.subr.mxu0 0.0
    %712 = vmatpush1.msra.mxu0 0.0
    %713 = vmatprep.subr.mxu0 0.0
    %714 = vmatpush1.msra.mxu0 0.0
    %715 = vmatprep.subr.mxu0 0.0
    %716 = vmatpush1.msra.mxu0 0.0
    %717 = vmatprep.subr.mxu0 0.0
    %718 = vmatpush1.msra.mxu0 0.0
    %719 = vmatprep.subr.mxu0 0.0
    %720 = vmatpush1.msra.mxu0 0.0
    %721 = vmatprep.subr.mxu0 0.0
    %722 = vmatpush1.msra.mxu0 0.0
    %723 = vmatprep.mubr.f32.mxu0 0.0
    %724 = vmatmul.mubr.f32.gmra.mrb[0].mxu0 %v657
    %v725 = vpop.f32.mrb[0].mxu0
    %v726 = vadd.f32 %v367, %v725
    %v727 = vpop.f32.mrb[0].mxu0
    %728 = vdwg.mxu0
    %v729 = vxor.u32 %v654, 2147483648
    %v730 = vmul.f32 %v729, 1.442695
    %v731 = vpow.pop %v730
    %v732 = vadd.f32 %v731, 1.0
    %v733 = vrcp.pop %v732
    %v734 = vmul.f32 1.0, %v733
    %v735 = vtanh.pop %v654
    %v736 = vxor.u32 %v726, 2147483648
    %v737 = vmul.f32 %v736, 1.442695
    %v738 = vpow.pop %v737
    %v739 = vadd.f32 %v738, 1.0
    %v740 = vrcp.pop %v739
    %v741 = vmul.f32 1.0, %v740
    %v742 = vtanh.pop %v726
    %v743 = vmul.f32 %v734, %v547
    %745 = vrot.lane.b32.xlu0 %v735, 64
    %v746 = vpop.permute.xlu0 %745
    %v748 = vmul.f32 %v734, %v746
    %750 = vrot.lane.b32.xlu0 %v748, 32
    %v751 = vpop.permute.xlu0 %750
    %v753 = vadd.f32 %v743, %v751
    %v754 = vtanh.pop %v753
    %756 = vrot.lane.b32.xlu0 %v754, 64
    %v757 = vpop.permute.xlu0 %756
    %v759 = vmul.f32 %v734, %v757
    %v760 = vmul.f32 %v741, %v564
    %762 = vrot.lane.b32.xlu0 %v742, 64
    %v763 = vpop.permute.xlu0 %762
    %v765 = vmul.f32 %v741, %v763
    %767 = vrot.lane.b32.xlu0 %v765, 32
    %v768 = vpop.permute.xlu0 %767
    %v770 = vadd.f32 %v760, %v768
    %v771 = vtanh.pop %v770
    %773 = vrot.lane.b32.xlu0 %v771, 64
    %v774 = vpop.permute.xlu0 %773
    %v776 = vmul.f32 %v741, %v774
    %778 = vrot.lane.b32.xlu0 %v759, 32
    %v779 = vpop.permute.xlu0 %778
    %781 = vst.msk [vmem:[#allocation2 + $0x4] sm:$0xf] %vm575, %v779
    %783 = vrot.lane.b32.xlu0 %v776, 32
    %v784 = vpop.permute.xlu0 %783
    %786 = vst.msk [vmem:[#allocation3 + $0x18] sm:$0xf] %vm575, %v784
    %v787 = vsel %vm267, %v779, 0
    %789 = vmatprep.subr.mxu0 0.0
    %790 = vmatpush1.msra.mxu0 %v369
    %791 = vmatprep.subr.mxu0 0.0
    %792 = vmatpush1.msra.mxu0 %v370
    %793 = vmatprep.subr.mxu0 0.0
    %794 = vmatpush1.msra.mxu0 %v371
    %795 = vmatprep.subr.mxu0 0.0
    %796 = vmatpush1.msra.mxu0 %v372
    %797 = vmatprep.subr.mxu0 0.0
    %798 = vmatpush1.msra.mxu0 0.0
    %799 = vmatprep.subr.mxu0 0.0
    %800 = vmatpush1.msra.mxu0 0.0
    %801 = vmatprep.subr.mxu0 0.0
    %802 = vmatpush1.msra.mxu0 0.0
    %803 = vmatprep.subr.mxu0 0.0
    %804 = vmatpush1.msra.mxu0 0.0
    %805 = vmatprep.subr.mxu0 0.0
    %806 = vmatpush1.msra.mxu0 0.0
    %807 = vmatprep.subr.mxu0 0.0
    %808 = vmatpush1.msra.mxu0 0.0
    %809 = vmatprep.subr.mxu0 0.0
    %810 = vmatpush1.msra.mxu0 0.0
    %811 = vmatprep.subr.mxu0 0.0
    %812 = vmatpush1.msra.mxu0 0.0
    %813 = vmatprep.subr.mxu0 0.0
    %814 = vmatpush1.msra.mxu0 0.0
    %815 = vmatprep.subr.mxu0 0.0
    %816 = vmatpush1.msra.mxu0 0.0
    %817 = vmatprep.subr.mxu0 0.0
    %818 = vmatpush1.msra.mxu0 0.0
    %819 = vmatprep.subr.mxu0 0.0
    %820 = vmatpush1.msra.mxu0 0.0
    %821 = vmatprep.subr.mxu0 0.0
    %822 = vmatpush1.msra.mxu0 0.0
    %823 = vmatprep.subr.mxu0 0.0
    %824 = vmatpush1.msra.mxu0 0.0
    %825 = vmatprep.subr.mxu0 0.0
    %826 = vmatpush1.msra.mxu0 0.0
    %827 = vmatprep.subr.mxu0 0.0
    %828 = vmatpush1.msra.mxu0 0.0
    %829 = vmatprep.subr.mxu0 0.0
    %830 = vmatpush1.msra.mxu0 0.0
    %831 = vmatprep.subr.mxu0 0.0
    %832 = vmatpush1.msra.mxu0 0.0
    %833 = vmatprep.subr.mxu0 0.0
    %834 = vmatpush1.msra.mxu0 0.0
    %835 = vmatprep.subr.mxu0 0.0
    %836 = vmatpush1.msra.mxu0 0.0
    %837 = vmatprep.subr.mxu0 0.0
    %838 = vmatpush1.msra.mxu0 0.0
    %839 = vmatprep.subr.mxu0 0.0
    %840 = vmatpush1.msra.mxu0 0.0
    %841 = vmatprep.subr.mxu0 0.0
    %842 = vmatpush1.msra.mxu0 0.0
    %843 = vmatprep.subr.mxu0 0.0
    %844 = vmatpush1.msra.mxu0 0.0
    %845 = vmatprep.subr.mxu0 0.0
    %846 = vmatpush1.msra.mxu0 0.0
    %847 = vmatprep.subr.mxu0 0.0
    %848 = vmatpush1.msra.mxu0 0.0
    %849 = vmatprep.subr.mxu0 0.0
    %850 = vmatpush1.msra.mxu0 0.0
    %851 = vmatprep.subr.mxu0 0.0
    %852 = vmatpush1.msra.mxu0 0.0
    %853 = vmatprep.mubr.f32.mxu0 0.0
    %854 = vmatmul.mubr.f32.gmra.mrb[0].mxu0 %v787
    %v855 = vpop.f32.mrb[0].mxu0
    %v856 = vadd.f32 %v353, %v855
    %v857 = vpop.f32.mrb[0].mxu0
    %858 = vdwg.mxu0
    %v860 = vrot.slane %v361, 4
    %v862 = vsel %vm267, %v784, 0
    %864 = vmatprep.subr.mxu0 0.0
    %865 = vmatpush1.msra.mxu0 %v373
    %866 = vmatprep.subr.mxu0 0.0
    %867 = vmatpush1.msra.mxu0 %v374
    %868 = vmatprep.subr.mxu0 0.0
    %869 = vmatpush1.msra.mxu0 %v375
    %870 = vmatprep.subr.mxu0 0.0
    %871 = vmatpush1.msra.mxu0 %v376
    %872 = vmatprep.subr.mxu0 0.0
    %873 = vmatpush1.msra.mxu0 0.0
    %874 = vmatprep.subr.mxu0 0.0
    %875 = vmatpush1.msra.mxu0 0.0
    %876 = vmatprep.subr.mxu0 0.0
    %877 = vmatpush1.msra.mxu0 0.0
    %878 = vmatprep.subr.mxu0 0.0
    %879 = vmatpush1.msra.mxu0 0.0
    %880 = vmatprep.subr.mxu0 0.0
    %881 = vmatpush1.msra.mxu0 0.0
    %882 = vmatprep.subr.mxu0 0.0
    %883 = vmatpush1.msra.mxu0 0.0
    %884 = vmatprep.subr.mxu0 0.0
    %885 = vmatpush1.msra.mxu0 0.0
    %886 = vmatprep.subr.mxu0 0.0
    %887 = vmatpush1.msra.mxu0 0.0
    %888 = vmatprep.subr.mxu0 0.0
    %889 = vmatpush1.msra.mxu0 0.0
    %890 = vmatprep.subr.mxu0 0.0
    %891 = vmatpush1.msra.mxu0 0.0
    %892 = vmatprep.subr.mxu0 0.0
    %893 = vmatpush1.msra.mxu0 0.0
    %894 = vmatprep.subr.mxu0 0.0
    %895 = vmatpush1.msra.mxu0 0.0
    %896 = vmatprep.subr.mxu0 0.0
    %897 = vmatpush1.msra.mxu0 0.0
    %898 = vmatprep.subr.mxu0 0.0
    %899 = vmatpush1.msra.mxu0 0.0
    %900 = vmatprep.subr.mxu0 0.0
    %901 = vmatpush1.msra.mxu0 0.0
    %902 = vmatprep.subr.mxu0 0.0
    %903 = vmatpush1.msra.mxu0 0.0
    %904 = vmatprep.subr.mxu0 0.0
    %905 = vmatpush1.msra.mxu0 0.0
    %906 = vmatprep.subr.mxu0 0.0
    %907 = vmatpush1.msra.mxu0 0.0
    %908 = vmatprep.subr.mxu0 0.0
    %909 = vmatpush1.msra.mxu0 0.0
    %910 = vmatprep.subr.mxu0 0.0
    %911 = vmatpush1.msra.mxu0 0.0
    %912 = vmatprep.subr.mxu0 0.0
    %913 = vmatpush1.msra.mxu0 0.0
    %914 = vmatprep.subr.mxu0 0.0
    %915 = vmatpush1.msra.mxu0 0.0
    %916 = vmatprep.subr.mxu0 0.0
    %917 = vmatpush1.msra.mxu0 0.0
    %918 = vmatprep.subr.mxu0 0.0
    %919 = vmatpush1.msra.mxu0 0.0
    %920 = vmatprep.subr.mxu0 0.0
    %921 = vmatpush1.msra.mxu0 0.0
    %922 = vmatprep.subr.mxu0 0.0
    %923 = vmatpush1.msra.mxu0 0.0
    %924 = vmatprep.subr.mxu0 0.0
    %925 = vmatpush1.msra.mxu0 0.0
    %926 = vmatprep.subr.mxu0 0.0
    %927 = vmatpush1.msra.mxu0 0.0
    %928 = vmatprep.mubr.f32.mxu0 0.0
    %929 = vmatmul.mubr.f32.gmra.mrb[0].mxu0 %v862
    %v930 = vpop.f32.mrb[0].mxu0
    %v931 = vadd.f32 %v860, %v930
    %v932 = vpop.f32.mrb[0].mxu0
    %933 = vdwg.mxu0
    %v934 = vxor.u32 %v856, 2147483648
    %v935 = vmul.f32 %v934, 1.442695
    %v936 = vpow.pop %v935
    %v937 = vadd.f32 %v936, 1.0
    %v938 = vrcp.pop %v937
    %v939 = vmul.f32 1.0, %v938
    %v940 = vtanh.pop %v856
    %v941 = vxor.u32 %v931, 2147483648
    %v942 = vmul.f32 %v941, 1.442695
    %v943 = vpow.pop %v942
    %v944 = vadd.f32 %v943, 1.0
    %v945 = vrcp.pop %v944
    %v946 = vmul.f32 1.0, %v945
    %v947 = vtanh.pop %v931
    %v948 = vmul.f32 %v939, %v753
    %950 = vrot.lane.b32.xlu0 %v940, 64
    %v951 = vpop.permute.xlu0 %950
    %v953 = vmul.f32 %v939, %v951
    %955 = vrot.lane.b32.xlu0 %v953, 32
    %v956 = vpop.permute.xlu0 %955
    %v958 = vadd.f32 %v948, %v956
    %v959 = vtanh.pop %v958
    %961 = vrot.lane.b32.xlu0 %v959, 64
    %v962 = vpop.permute.xlu0 %961
    %v964 = vmul.f32 %v939, %v962
    %v965 = vmul.f32 %v946, %v770
    %967 = vrot.lane.b32.xlu0 %v947, 64
    %v968 = vpop.permute.xlu0 %967
    %v970 = vmul.f32 %v946, %v968
    %972 = vrot.lane.b32.xlu0 %v970, 32
    %v973 = vpop.permute.xlu0 %972
    %v975 = vadd.f32 %v965, %v973
    %v976 = vtanh.pop %v975
    %978 = vrot.lane.b32.xlu0 %v976, 64
    %v979 = vpop.permute.xlu0 %978
    %v981 = vmul.f32 %v946, %v979
    %983 = vrot.lane.b32.xlu0 %v964, 32
    %v984 = vpop.permute.xlu0 %983
    %986 = vst.msk [vmem:[#allocation2 + $0x8] sm:$0xf] %vm575, %v984
    %988 = vrot.lane.b32.xlu0 %v981, 32
    %v989 = vpop.permute.xlu0 %988
    %991 = vst.msk [vmem:[#allocation3 + $0x14] sm:$0xf] %vm575, %v989
    %v993 = vrot.slane %v353, 4
    %v995 = vsel %vm267, %v984, 0
    %997 = vmatprep.subr.mxu0 0.0
    %998 = vmatpush1.msra.mxu0 %v369
    %999 = vmatprep.subr.mxu0 0.0
    %1000 = vmatpush1.msra.mxu0 %v370
    %1001 = vmatprep.subr.mxu0 0.0
    %1002 = vmatpush1.msra.mxu0 %v371
    %1003 = vmatprep.subr.mxu0 0.0
    %1004 = vmatpush1.msra.mxu0 %v372
    %1005 = vmatprep.subr.mxu0 0.0
    %1006 = vmatpush1.msra.mxu0 0.0
    %1007 = vmatprep.subr.mxu0 0.0
    %1008 = vmatpush1.msra.mxu0 0.0
    %1009 = vmatprep.subr.mxu0 0.0
    %1010 = vmatpush1.msra.mxu0 0.0
    %1011 = vmatprep.subr.mxu0 0.0
    %1012 = vmatpush1.msra.mxu0 0.0
    %1013 = vmatprep.subr.mxu0 0.0
    %1014 = vmatpush1.msra.mxu0 0.0
    %1015 = vmatprep.subr.mxu0 0.0
    %1016 = vmatpush1.msra.mxu0 0.0
    %1017 = vmatprep.subr.mxu0 0.0
    %1018 = vmatpush1.msra.mxu0 0.0
    %1019 = vmatprep.subr.mxu0 0.0
    %1020 = vmatpush1.msra.mxu0 0.0
    %1021 = vmatprep.subr.mxu0 0.0
    %1022 = vmatpush1.msra.mxu0 0.0
    %1023 = vmatprep.subr.mxu0 0.0
    %1024 = vmatpush1.msra.mxu0 0.0
    %1025 = vmatprep.subr.mxu0 0.0
    %1026 = vmatpush1.msra.mxu0 0.0
    %1027 = vmatprep.subr.mxu0 0.0
    %1028 = vmatpush1.msra.mxu0 0.0
    %1029 = vmatprep.subr.mxu0 0.0
    %1030 = vmatpush1.msra.mxu0 0.0
    %1031 = vmatprep.subr.mxu0 0.0
    %1032 = vmatpush1.msra.mxu0 0.0
    %1033 = vmatprep.subr.mxu0 0.0
    %1034 = vmatpush1.msra.mxu0 0.0
    %1035 = vmatprep.subr.mxu0 0.0
    %1036 = vmatpush1.msra.mxu0 0.0
    %1037 = vmatprep.subr.mxu0 0.0
    %1038 = vmatpush1.msra.mxu0 0.0
    %1039 = vmatprep.subr.mxu0 0.0
    %1040 = vmatpush1.msra.mxu0 0.0
    %1041 = vmatprep.subr.mxu0 0.0
    %1042 = vmatpush1.msra.mxu0 0.0
    %1043 = vmatprep.subr.mxu0 0.0
    %1044 = vmatpush1.msra.mxu0 0.0
    %1045 = vmatprep.subr.mxu0 0.0
    %1046 = vmatpush1.msra.mxu0 0.0
    %1047 = vmatprep.subr.mxu0 0.0
    %1048 = vmatpush1.msra.mxu0 0.0
    %1049 = vmatprep.subr.mxu0 0.0
    %1050 = vmatpush1.msra.mxu0 0.0
    %1051 = vmatprep.subr.mxu0 0.0
    %1052 = vmatpush1.msra.mxu0 0.0
    %1053 = vmatprep.subr.mxu0 0.0
    %1054 = vmatpush1.msra.mxu0 0.0
    %1055 = vmatprep.subr.mxu0 0.0
    %1056 = vmatpush1.msra.mxu0 0.0
    %1057 = vmatprep.subr.mxu0 0.0
    %1058 = vmatpush1.msra.mxu0 0.0
    %1059 = vmatprep.subr.mxu0 0.0
    %1060 = vmatpush1.msra.mxu0 0.0
    %1061 = vmatprep.mubr.f32.mxu0 0.0
    %1062 = vmatmul.mubr.f32.gmra.mrb[0].mxu0 %v995
    %v1063 = vpop.f32.mrb[0].mxu0
    %v1064 = vadd.f32 %v993, %v1063
    %v1065 = vpop.f32.mrb[0].mxu0
    %1066 = vdwg.mxu0
    %v1067 = vsel %vm267, %v989, 0
    %1069 = vmatprep.subr.mxu0 0.0
    %1070 = vmatpush1.msra.mxu0 %v373
    %1071 = vmatprep.subr.mxu0 0.0
    %1072 = vmatpush1.msra.mxu0 %v374
    %1073 = vmatprep.subr.mxu0 0.0
    %1074 = vmatpush1.msra.mxu0 %v375
    %1075 = vmatprep.subr.mxu0 0.0
    %1076 = vmatpush1.msra.mxu0 %v376
    %1077 = vmatprep.subr.mxu0 0.0
    %1078 = vmatpush1.msra.mxu0 0.0
    %1079 = vmatprep.subr.mxu0 0.0
    %1080 = vmatpush1.msra.mxu0 0.0
    %1081 = vmatprep.subr.mxu0 0.0
    %1082 = vmatpush1.msra.mxu0 0.0
    %1083 = vmatprep.subr.mxu0 0.0
    %1084 = vmatpush1.msra.mxu0 0.0
    %1085 = vmatprep.subr.mxu0 0.0
    %1086 = vmatpush1.msra.mxu0 0.0
    %1087 = vmatprep.subr.mxu0 0.0
    %1088 = vmatpush1.msra.mxu0 0.0
    %1089 = vmatprep.subr.mxu0 0.0
    %1090 = vmatpush1.msra.mxu0 0.0
    %1091 = vmatprep.subr.mxu0 0.0
    %1092 = vmatpush1.msra.mxu0 0.0
    %1093 = vmatprep.subr.mxu0 0.0
    %1094 = vmatpush1.msra.mxu0 0.0
    %1095 = vmatprep.subr.mxu0 0.0
    %1096 = vmatpush1.msra.mxu0 0.0
    %1097 = vmatprep.subr.mxu0 0.0
    %1098 = vmatpush1.msra.mxu0 0.0
    %1099 = vmatprep.subr.mxu0 0.0
    %1100 = vmatpush1.msra.mxu0 0.0
    %1101 = vmatprep.subr.mxu0 0.0
    %1102 = vmatpush1.msra.mxu0 0.0
    %1103 = vmatprep.subr.mxu0 0.0
    %1104 = vmatpush1.msra.mxu0 0.0
    %1105 = vmatprep.subr.mxu0 0.0
    %1106 = vmatpush1.msra.mxu0 0.0
    %1107 = vmatprep.subr.mxu0 0.0
    %1108 = vmatpush1.msra.mxu0 0.0
    %1109 = vmatprep.subr.mxu0 0.0
    %1110 = vmatpush1.msra.mxu0 0.0
    %1111 = vmatprep.subr.mxu0 0.0
    %1112 = vmatpush1.msra.mxu0 0.0
    %1113 = vmatprep.subr.mxu0 0.0
    %1114 = vmatpush1.msra.mxu0 0.0
    %1115 = vmatprep.subr.mxu0 0.0
    %1116 = vmatpush1.msra.mxu0 0.0
    %1117 = vmatprep.subr.mxu0 0.0
    %1118 = vmatpush1.msra.mxu0 0.0
    %1119 = vmatprep.subr.mxu0 0.0
    %1120 = vmatpush1.msra.mxu0 0.0
    %1121 = vmatprep.subr.mxu0 0.0
    %1122 = vmatpush1.msra.mxu0 0.0
    %1123 = vmatprep.subr.mxu0 0.0
    %1124 = vmatpush1.msra.mxu0 0.0
    %1125 = vmatprep.subr.mxu0 0.0
    %1126 = vmatpush1.msra.mxu0 0.0
    %1127 = vmatprep.subr.mxu0 0.0
    %1128 = vmatpush1.msra.mxu0 0.0
    %1129 = vmatprep.subr.mxu0 0.0
    %1130 = vmatpush1.msra.mxu0 0.0
    %1131 = vmatprep.subr.mxu0 0.0
    %1132 = vmatpush1.msra.mxu0 0.0
    %1133 = vmatprep.mubr.f32.mxu0 0.0
    %1134 = vmatmul.mubr.f32.gmra.mrb[0].mxu0 %v1067
    %v1135 = vpop.f32.mrb[0].mxu0
    %v1136 = vadd.f32 %v361, %v1135
    %v1137 = vpop.f32.mrb[0].mxu0
    %1138 = vdwg.mxu0
    %v1139 = vxor.u32 %v1064, 2147483648
    %v1140 = vmul.f32 %v1139, 1.442695
    %v1141 = vpow.pop %v1140
    %v1142 = vadd.f32 %v1141, 1.0
    %v1143 = vrcp.pop %v1142
    %v1144 = vmul.f32 1.0, %v1143
    %v1145 = vtanh.pop %v1064
    %v1146 = vxor.u32 %v1136, 2147483648
    %v1147 = vmul.f32 %v1146, 1.442695
    %v1148 = vpow.pop %v1147
    %v1149 = vadd.f32 %v1148, 1.0
    %v1150 = vrcp.pop %v1149
    %v1151 = vmul.f32 1.0, %v1150
    %v1152 = vtanh.pop %v1136
    %v1153 = vmul.f32 %v1144, %v958
    %1155 = vrot.lane.b32.xlu0 %v1145, 64
    %v1156 = vpop.permute.xlu0 %1155
    %v1158 = vmul.f32 %v1144, %v1156
    %1160 = vrot.lane.b32.xlu0 %v1158, 32
    %v1161 = vpop.permute.xlu0 %1160
    %v1163 = vadd.f32 %v1153, %v1161
    %v1164 = vtanh.pop %v1163
    %1166 = vrot.lane.b32.xlu0 %v1164, 64
    %v1167 = vpop.permute.xlu0 %1166
    %v1169 = vmul.f32 %v1144, %v1167
    %v1170 = vmul.f32 %v1151, %v975
    %1172 = vrot.lane.b32.xlu0 %v1152, 64
    %v1173 = vpop.permute.xlu0 %1172
    %v1175 = vmul.f32 %v1151, %v1173
    %1177 = vrot.lane.b32.xlu0 %v1175, 32
    %v1178 = vpop.permute.xlu0 %1177
    %v1180 = vadd.f32 %v1170, %v1178
    %v1181 = vtanh.pop %v1180
    %1183 = vrot.lane.b32.xlu0 %v1181, 64
    %v1184 = vpop.permute.xlu0 %1183
    %v1186 = vmul.f32 %v1151, %v1184
    %1188 = vrot.lane.b32.xlu0 %v1169, 32
    %v1189 = vpop.permute.xlu0 %1188
    %1191 = vst.msk [vmem:[#allocation2 + $0xc] sm:$0xf] %vm575, %v1189
    %1193 = vrot.lane.b32.xlu0 %v1186, 32
    %v1194 = vpop.permute.xlu0 %1193
    %1196 = vst.msk [vmem:[#allocation3 + $0x10] sm:$0xf] %vm575, %v1194
    %v1197 = vsel %vm267, %v1189, 0
    %1199 = vmatprep.subr.mxu0 0.0
    %1200 = vmatpush1.msra.mxu0 %v369
    %1201 = vmatprep.subr.mxu0 0.0
    %1202 = vmatpush1.msra.mxu0 %v370
    %1203 = vmatprep.subr.mxu0 0.0
    %1204 = vmatpush1.msra.mxu0 %v371
    %1205 = vmatprep.subr.mxu0 0.0
    %1206 = vmatpush1.msra.mxu0 %v372
    %1207 = vmatprep.subr.mxu0 0.0
    %1208 = vmatpush1.msra.mxu0 0.0
    %1209 = vmatprep.subr.mxu0 0.0
    %1210 = vmatpush1.msra.mxu0 0.0
    %1211 = vmatprep.subr.mxu0 0.0
    %1212 = vmatpush1.msra.mxu0 0.0
    %1213 = vmatprep.subr.mxu0 0.0
    %1214 = vmatpush1.msra.mxu0 0.0
    %1215 = vmatprep.subr.mxu0 0.0
    %1216 = vmatpush1.msra.mxu0 0.0
    %1217 = vmatprep.subr.mxu0 0.0
    %1218 = vmatpush1.msra.mxu0 0.0
    %1219 = vmatprep.subr.mxu0 0.0
    %1220 = vmatpush1.msra.mxu0 0.0
    %1221 = vmatprep.subr.mxu0 0.0
    %1222 = vmatpush1.msra.mxu0 0.0
    %1223 = vmatprep.subr.mxu0 0.0
    %1224 = vmatpush1.msra.mxu0 0.0
    %1225 = vmatprep.subr.mxu0 0.0
    %1226 = vmatpush1.msra.mxu0 0.0
    %1227 = vmatprep.subr.mxu0 0.0
    %1228 = vmatpush1.msra.mxu0 0.0
    %1229 = vmatprep.subr.mxu0 0.0
    %1230 = vmatpush1.msra.mxu0 0.0
    %1231 = vmatprep.subr.mxu0 0.0
    %1232 = vmatpush1.msra.mxu0 0.0
    %1233 = vmatprep.subr.mxu0 0.0
    %1234 = vmatpush1.msra.mxu0 0.0
    %1235 = vmatprep.subr.mxu0 0.0
    %1236 = vmatpush1.msra.mxu0 0.0
    %1237 = vmatprep.subr.mxu0 0.0
    %1238 = vmatpush1.msra.mxu0 0.0
    %1239 = vmatprep.subr.mxu0 0.0
    %1240 = vmatpush1.msra.mxu0 0.0
    %1241 = vmatprep.subr.mxu0 0.0
    %1242 = vmatpush1.msra.mxu0 0.0
    %1243 = vmatprep.subr.mxu0 0.0
    %1244 = vmatpush1.msra.mxu0 0.0
    %1245 = vmatprep.subr.mxu0 0.0
    %1246 = vmatpush1.msra.mxu0 0.0
    %1247 = vmatprep.subr.mxu0 0.0
    %1248 = vmatpush1.msra.mxu0 0.0
    %1249 = vmatprep.subr.mxu0 0.0
    %1250 = vmatpush1.msra.mxu0 0.0
    %1251 = vmatprep.subr.mxu0 0.0
    %1252 = vmatpush1.msra.mxu0 0.0
    %1253 = vmatprep.subr.mxu0 0.0
    %1254 = vmatpush1.msra.mxu0 0.0
    %1255 = vmatprep.subr.mxu0 0.0
    %1256 = vmatpush1.msra.mxu0 0.0
    %1257 = vmatprep.subr.mxu0 0.0
    %1258 = vmatpush1.msra.mxu0 0.0
    %1259 = vmatprep.subr.mxu0 0.0
    %1260 = vmatpush1.msra.mxu0 0.0
    %1261 = vmatprep.subr.mxu0 0.0
    %1262 = vmatpush1.msra.mxu0 0.0
    %1263 = vmatprep.mubr.f32.mxu0 0.0
    %1264 = vmatmul.mubr.f32.gmra.mrb[0].mxu0 %v1197
    %v1265 = vpop.f32.mrb[0].mxu0
    %v1266 = vadd.f32 %v359, %v1265
    %v1267 = vpop.f32.mrb[0].mxu0
    %1268 = vdwg.mxu0
    %v1270 = vrot.slane %v355, 4
    %v1272 = vsel %vm267, %v1194, 0
    %1274 = vmatprep.subr.mxu0 0.0
    %1275 = vmatpush1.msra.mxu0 %v373
    %1276 = vmatprep.subr.mxu0 0.0
    %1277 = vmatpush1.msra.mxu0 %v374
    %1278 = vmatprep.subr.mxu0 0.0
    %1279 = vmatpush1.msra.mxu0 %v375
    %1280 = vmatprep.subr.mxu0 0.0
    %1281 = vmatpush1.msra.mxu0 %v376
    %1282 = vmatprep.subr.mxu0 0.0
    %1283 = vmatpush1.msra.mxu0 0.0
    %1284 = vmatprep.subr.mxu0 0.0
    %1285 = vmatpush1.msra.mxu0 0.0
    %1286 = vmatprep.subr.mxu0 0.0
    %1287 = vmatpush1.msra.mxu0 0.0
    %1288 = vmatprep.subr.mxu0 0.0
    %1289 = vmatpush1.msra.mxu0 0.0
    %1290 = vmatprep.subr.mxu0 0.0
    %1291 = vmatpush1.msra.mxu0 0.0
    %1292 = vmatprep.subr.mxu0 0.0
    %1293 = vmatpush1.msra.mxu0 0.0
    %1294 = vmatprep.subr.mxu0 0.0
    %1295 = vmatpush1.msra.mxu0 0.0
    %1296 = vmatprep.subr.mxu0 0.0
    %1297 = vmatpush1.msra.mxu0 0.0
    %1298 = vmatprep.subr.mxu0 0.0
    %1299 = vmatpush1.msra.mxu0 0.0
    %1300 = vmatprep.subr.mxu0 0.0
    %1301 = vmatpush1.msra.mxu0 0.0
    %1302 = vmatprep.subr.mxu0 0.0
    %1303 = vmatpush1.msra.mxu0 0.0
    %1304 = vmatprep.subr.mxu0 0.0
    %1305 = vmatpush1.msra.mxu0 0.0
    %1306 = vmatprep.subr.mxu0 0.0
    %1307 = vmatpush1.msra.mxu0 0.0
    %1308 = vmatprep.subr.mxu0 0.0
    %1309 = vmatpush1.msra.mxu0 0.0
    %1310 = vmatprep.subr.mxu0 0.0
    %1311 = vmatpush1.msra.mxu0 0.0
    %1312 = vmatprep.subr.mxu0 0.0
    %1313 = vmatpush1.msra.mxu0 0.0
    %1314 = vmatprep.subr.mxu0 0.0
    %1315 = vmatpush1.msra.mxu0 0.0
    %1316 = vmatprep.subr.mxu0 0.0
    %1317 = vmatpush1.msra.mxu0 0.0
    %1318 = vmatprep.subr.mxu0 0.0
    %1319 = vmatpush1.msra.mxu0 0.0
    %1320 = vmatprep.subr.mxu0 0.0
    %1321 = vmatpush1.msra.mxu0 0.0
    %1322 = vmatprep.subr.mxu0 0.0
    %1323 = vmatpush1.msra.mxu0 0.0
    %1324 = vmatprep.subr.mxu0 0.0
    %1325 = vmatpush1.msra.mxu0 0.0
    %1326 = vmatprep.subr.mxu0 0.0
    %1327 = vmatpush1.msra.mxu0 0.0
    %1328 = vmatprep.subr.mxu0 0.0
    %1329 = vmatpush1.msra.mxu0 0.0
    %1330 = vmatprep.subr.mxu0 0.0
    %1331 = vmatpush1.msra.mxu0 0.0
    %1332 = vmatprep.subr.mxu0 0.0
    %1333 = vmatpush1.msra.mxu0 0.0
    %1334 = vmatprep.subr.mxu0 0.0
    %1335 = vmatpush1.msra.mxu0 0.0
    %1336 = vmatprep.subr.mxu0 0.0
    %1337 = vmatpush1.msra.mxu0 0.0
    %1338 = vmatprep.mubr.f32.mxu0 0.0
    %1339 = vmatmul.mubr.f32.gmra.mrb[0].mxu0 %v1272
    %v1340 = vpop.f32.mrb[0].mxu0
    %v1341 = vadd.f32 %v1270, %v1340
    %v1342 = vpop.f32.mrb[0].mxu0
    %1343 = vdwg.mxu0
    %v1344 = vxor.u32 %v1266, 2147483648
    %v1345 = vmul.f32 %v1344, 1.442695
    %v1346 = vpow.pop %v1345
    %v1347 = vadd.f32 %v1346, 1.0
    %v1348 = vrcp.pop %v1347
    %v1349 = vmul.f32 1.0, %v1348
    %v1350 = vtanh.pop %v1266
    %v1351 = vxor.u32 %v1341, 2147483648
    %v1352 = vmul.f32 %v1351, 1.442695
    %v1353 = vpow.pop %v1352
    %v1354 = vadd.f32 %v1353, 1.0
    %v1355 = vrcp.pop %v1354
    %v1356 = vmul.f32 1.0, %v1355
    %v1357 = vtanh.pop %v1341
    %v1358 = vmul.f32 %v1349, %v1163
    %1360 = vrot.lane.b32.xlu0 %v1350, 64
    %v1361 = vpop.permute.xlu0 %1360
    %v1363 = vmul.f32 %v1349, %v1361
    %1365 = vrot.lane.b32.xlu0 %v1363, 32
    %v1366 = vpop.permute.xlu0 %1365
    %v1368 = vadd.f32 %v1358, %v1366
    %v1369 = vtanh.pop %v1368
    %1371 = vrot.lane.b32.xlu0 %v1369, 64
    %v1372 = vpop.permute.xlu0 %1371
    %v1374 = vmul.f32 %v1349, %v1372
    %v1375 = vmul.f32 %v1356, %v1180
    %1377 = vrot.lane.b32.xlu0 %v1357, 64
    %v1378 = vpop.permute.xlu0 %1377
    %v1380 = vmul.f32 %v1356, %v1378
    %1382 = vrot.lane.b32.xlu0 %v1380, 32
    %v1383 = vpop.permute.xlu0 %1382
    %v1385 = vadd.f32 %v1375, %v1383
    %v1386 = vtanh.pop %v1385
    %1388 = vrot.lane.b32.xlu0 %v1386, 64
    %v1389 = vpop.permute.xlu0 %1388
    %v1391 = vmul.f32 %v1356, %v1389
    %1393 = vrot.lane.b32.xlu0 %v1374, 32
    %v1394 = vpop.permute.xlu0 %1393
    %1396 = vst.msk [vmem:[#allocation2 + $0x10] sm:$0xf] %vm575, %v1394
    %1398 = vrot.lane.b32.xlu0 %v1391, 32
    %v1399 = vpop.permute.xlu0 %1398
    %1401 = vst.msk [vmem:[#allocation3 + $0xc] sm:$0xf] %vm575, %v1399
    %v1403 = vrot.slane %v359, 4
    %v1405 = vsel %vm267, %v1394, 0
    %1407 = vmatprep.subr.mxu0 0.0
    %1408 = vmatpush1.msra.mxu0 %v369
    %1409 = vmatprep.subr.mxu0 0.0
    %1410 = vmatpush1.msra.mxu0 %v370
    %1411 = vmatprep.subr.mxu0 0.0
    %1412 = vmatpush1.msra.mxu0 %v371
    %1413 = vmatprep.subr.mxu0 0.0
    %1414 = vmatpush1.msra.mxu0 %v372
    %1415 = vmatprep.subr.mxu0 0.0
    %1416 = vmatpush1.msra.mxu0 0.0
    %1417 = vmatprep.subr.mxu0 0.0
    %1418 = vmatpush1.msra.mxu0 0.0
    %1419 = vmatprep.subr.mxu0 0.0
    %1420 = vmatpush1.msra.mxu0 0.0
    %1421 = vmatprep.subr.mxu0 0.0
    %1422 = vmatpush1.msra.mxu0 0.0
    %1423 = vmatprep.subr.mxu0 0.0
    %1424 = vmatpush1.msra.mxu0 0.0
    %1425 = vmatprep.subr.mxu0 0.0
    %1426 = vmatpush1.msra.mxu0 0.0
    %1427 = vmatprep.subr.mxu0 0.0
    %1428 = vmatpush1.msra.mxu0 0.0
    %1429 = vmatprep.subr.mxu0 0.0
    %1430 = vmatpush1.msra.mxu0 0.0
    %1431 = vmatprep.subr.mxu0 0.0
    %1432 = vmatpush1.msra.mxu0 0.0
    %1433 = vmatprep.subr.mxu0 0.0
    %1434 = vmatpush1.msra.mxu0 0.0
    %1435 = vmatprep.subr.mxu0 0.0
    %1436 = vmatpush1.msra.mxu0 0.0
    %1437 = vmatprep.subr.mxu0 0.0
    %1438 = vmatpush1.msra.mxu0 0.0
    %1439 = vmatprep.subr.mxu0 0.0
    %1440 = vmatpush1.msra.mxu0 0.0
    %1441 = vmatprep.subr.mxu0 0.0
    %1442 = vmatpush1.msra.mxu0 0.0
    %1443 = vmatprep.subr.mxu0 0.0
    %1444 = vmatpush1.msra.mxu0 0.0
    %1445 = vmatprep.subr.mxu0 0.0
    %1446 = vmatpush1.msra.mxu0 0.0
    %1447 = vmatprep.subr.mxu0 0.0
    %1448 = vmatpush1.msra.mxu0 0.0
    %1449 = vmatprep.subr.mxu0 0.0
    %1450 = vmatpush1.msra.mxu0 0.0
    %1451 = vmatprep.subr.mxu0 0.0
    %1452 = vmatpush1.msra.mxu0 0.0
    %1453 = vmatprep.subr.mxu0 0.0
    %1454 = vmatpush1.msra.mxu0 0.0
    %1455 = vmatprep.subr.mxu0 0.0
    %1456 = vmatpush1.msra.mxu0 0.0
    %1457 = vmatprep.subr.mxu0 0.0
    %1458 = vmatpush1.msra.mxu0 0.0
    %1459 = vmatprep.subr.mxu0 0.0
    %1460 = vmatpush1.msra.mxu0 0.0
    %1461 = vmatprep.subr.mxu0 0.0
    %1462 = vmatpush1.msra.mxu0 0.0
    %1463 = vmatprep.subr.mxu0 0.0
    %1464 = vmatpush1.msra.mxu0 0.0
    %1465 = vmatprep.subr.mxu0 0.0
    %1466 = vmatpush1.msra.mxu0 0.0
    %1467 = vmatprep.subr.mxu0 0.0
    %1468 = vmatpush1.msra.mxu0 0.0
    %1469 = vmatprep.subr.mxu0 0.0
    %1470 = vmatpush1.msra.mxu0 0.0
    %1471 = vmatprep.mubr.f32.mxu0 0.0
    %1472 = vmatmul.mubr.f32.gmra.mrb[0].mxu0 %v1405
    %v1473 = vpop.f32.mrb[0].mxu0
    %v1474 = vadd.f32 %v1403, %v1473
    %v1475 = vpop.f32.mrb[0].mxu0
    %1476 = vdwg.mxu0
    %v1477 = vsel %vm267, %v1399, 0
    %1479 = vmatprep.subr.mxu0 0.0
    %1480 = vmatpush1.msra.mxu0 %v373
    %1481 = vmatprep.subr.mxu0 0.0
    %1482 = vmatpush1.msra.mxu0 %v374
    %1483 = vmatprep.subr.mxu0 0.0
    %1484 = vmatpush1.msra.mxu0 %v375
    %1485 = vmatprep.subr.mxu0 0.0
    %1486 = vmatpush1.msra.mxu0 %v376
    %1487 = vmatprep.subr.mxu0 0.0
    %1488 = vmatpush1.msra.mxu0 0.0
    %1489 = vmatprep.subr.mxu0 0.0
    %1490 = vmatpush1.msra.mxu0 0.0
    %1491 = vmatprep.subr.mxu0 0.0
    %1492 = vmatpush1.msra.mxu0 0.0
    %1493 = vmatprep.subr.mxu0 0.0
    %1494 = vmatpush1.msra.mxu0 0.0
    %1495 = vmatprep.subr.mxu0 0.0
    %1496 = vmatpush1.msra.mxu0 0.0
    %1497 = vmatprep.subr.mxu0 0.0
    %1498 = vmatpush1.msra.mxu0 0.0
    %1499 = vmatprep.subr.mxu0 0.0
    %1500 = vmatpush1.msra.mxu0 0.0
    %1501 = vmatprep.subr.mxu0 0.0
    %1502 = vmatpush1.msra.mxu0 0.0
    %1503 = vmatprep.subr.mxu0 0.0
    %1504 = vmatpush1.msra.mxu0 0.0
    %1505 = vmatprep.subr.mxu0 0.0
    %1506 = vmatpush1.msra.mxu0 0.0
    %1507 = vmatprep.subr.mxu0 0.0
    %1508 = vmatpush1.msra.mxu0 0.0
    %1509 = vmatprep.subr.mxu0 0.0
    %1510 = vmatpush1.msra.mxu0 0.0
    %1511 = vmatprep.subr.mxu0 0.0
    %1512 = vmatpush1.msra.mxu0 0.0
    %1513 = vmatprep.subr.mxu0 0.0
    %1514 = vmatpush1.msra.mxu0 0.0
    %1515 = vmatprep.subr.mxu0 0.0
    %1516 = vmatpush1.msra.mxu0 0.0
    %1517 = vmatprep.subr.mxu0 0.0
    %1518 = vmatpush1.msra.mxu0 0.0
    %1519 = vmatprep.subr.mxu0 0.0
    %1520 = vmatpush1.msra.mxu0 0.0
    %1521 = vmatprep.subr.mxu0 0.0
    %1522 = vmatpush1.msra.mxu0 0.0
    %1523 = vmatprep.subr.mxu0 0.0
    %1524 = vmatpush1.msra.mxu0 0.0
    %1525 = vmatprep.subr.mxu0 0.0
    %1526 = vmatpush1.msra.mxu0 0.0
    %1527 = vmatprep.subr.mxu0 0.0
    %1528 = vmatpush1.msra.mxu0 0.0
    %1529 = vmatprep.subr.mxu0 0.0
    %1530 = vmatpush1.msra.mxu0 0.0
    %1531 = vmatprep.subr.mxu0 0.0
    %1532 = vmatpush1.msra.mxu0 0.0
    %1533 = vmatprep.subr.mxu0 0.0
    %1534 = vmatpush1.msra.mxu0 0.0
    %1535 = vmatprep.subr.mxu0 0.0
    %1536 = vmatpush1.msra.mxu0 0.0
    %1537 = vmatprep.subr.mxu0 0.0
    %1538 = vmatpush1.msra.mxu0 0.0
    %1539 = vmatprep.subr.mxu0 0.0
    %1540 = vmatpush1.msra.mxu0 0.0
    %1541 = vmatprep.subr.mxu0 0.0
    %1542 = vmatpush1.msra.mxu0 0.0
    %1543 = vmatprep.mubr.f32.mxu0 0.0
    %1544 = vmatmul.mubr.f32.gmra.mrb[0].mxu0 %v1477
    %v1545 = vpop.f32.mrb[0].mxu0
    %v1546 = vadd.f32 %v355, %v1545
    %v1547 = vpop.f32.mrb[0].mxu0
    %1548 = vdwg.mxu0
    %v1549 = vxor.u32 %v1474, 2147483648
    %v1550 = vmul.f32 %v1549, 1.442695
    %v1551 = vpow.pop %v1550
    %v1552 = vadd.f32 %v1551, 1.0
    %v1553 = vrcp.pop %v1552
    %v1554 = vmul.f32 1.0, %v1553
    %v1555 = vtanh.pop %v1474
    %v1556 = vxor.u32 %v1546, 2147483648
    %v1557 = vmul.f32 %v1556, 1.442695
    %v1558 = vpow.pop %v1557
    %v1559 = vadd.f32 %v1558, 1.0
    %v1560 = vrcp.pop %v1559
    %v1561 = vmul.f32 1.0, %v1560
    %v1562 = vtanh.pop %v1546
    %v1563 = vmul.f32 %v1554, %v1368
    %1565 = vrot.lane.b32.xlu0 %v1555, 64
    %v1566 = vpop.permute.xlu0 %1565
    %v1568 = vmul.f32 %v1554, %v1566
    %1570 = vrot.lane.b32.xlu0 %v1568, 32
    %v1571 = vpop.permute.xlu0 %1570
    %v1573 = vadd.f32 %v1563, %v1571
    %v1574 = vtanh.pop %v1573
    %1576 = vrot.lane.b32.xlu0 %v1574, 64
    %v1577 = vpop.permute.xlu0 %1576
    %v1579 = vmul.f32 %v1554, %v1577
    %v1580 = vmul.f32 %v1561, %v1385
    %1582 = vrot.lane.b32.xlu0 %v1562, 64
    %v1583 = vpop.permute.xlu0 %1582
    %v1585 = vmul.f32 %v1561, %v1583
    %1587 = vrot.lane.b32.xlu0 %v1585, 32
    %v1588 = vpop.permute.xlu0 %1587
    %v1590 = vadd.f32 %v1580, %v1588
    %v1591 = vtanh.pop %v1590
    %1593 = vrot.lane.b32.xlu0 %v1591, 64
    %v1594 = vpop.permute.xlu0 %1593
    %v1596 = vmul.f32 %v1561, %v1594
    %1598 = vrot.lane.b32.xlu0 %v1579, 32
    %v1599 = vpop.permute.xlu0 %1598
    %1601 = vst.msk [vmem:[#allocation2 + $0x14] sm:$0xf] %vm575, %v1599
    %1603 = vrot.lane.b32.xlu0 %v1596, 32
    %v1604 = vpop.permute.xlu0 %1603
    %1606 = vst.msk [vmem:[#allocation3 + $0x8] sm:$0xf] %vm575, %v1604
    %v1607 = vsel %vm267, %v1599, 0
    %1609 = vmatprep.subr.mxu0 0.0
    %1610 = vmatpush1.msra.mxu0 %v369
    %1611 = vmatprep.subr.mxu0 0.0
    %1612 = vmatpush1.msra.mxu0 %v370
    %1613 = vmatprep.subr.mxu0 0.0
    %1614 = vmatpush1.msra.mxu0 %v371
    %1615 = vmatprep.subr.mxu0 0.0
    %1616 = vmatpush1.msra.mxu0 %v372
    %1617 = vmatprep.subr.mxu0 0.0
    %1618 = vmatpush1.msra.mxu0 0.0
    %1619 = vmatprep.subr.mxu0 0.0
    %1620 = vmatpush1.msra.mxu0 0.0
    %1621 = vmatprep.subr.mxu0 0.0
    %1622 = vmatpush1.msra.mxu0 0.0
    %1623 = vmatprep.subr.mxu0 0.0
    %1624 = vmatpush1.msra.mxu0 0.0
    %1625 = vmatprep.subr.mxu0 0.0
    %1626 = vmatpush1.msra.mxu0 0.0
    %1627 = vmatprep.subr.mxu0 0.0
    %1628 = vmatpush1.msra.mxu0 0.0
    %1629 = vmatprep.subr.mxu0 0.0
    %1630 = vmatpush1.msra.mxu0 0.0
    %1631 = vmatprep.subr.mxu0 0.0
    %1632 = vmatpush1.msra.mxu0 0.0
    %1633 = vmatprep.subr.mxu0 0.0
    %1634 = vmatpush1.msra.mxu0 0.0
    %1635 = vmatprep.subr.mxu0 0.0
    %1636 = vmatpush1.msra.mxu0 0.0
    %1637 = vmatprep.subr.mxu0 0.0
    %1638 = vmatpush1.msra.mxu0 0.0
    %1639 = vmatprep.subr.mxu0 0.0
    %1640 = vmatpush1.msra.mxu0 0.0
    %1641 = vmatprep.subr.mxu0 0.0
    %1642 = vmatpush1.msra.mxu0 0.0
    %1643 = vmatprep.subr.mxu0 0.0
    %1644 = vmatpush1.msra.mxu0 0.0
    %1645 = vmatprep.subr.mxu0 0.0
    %1646 = vmatpush1.msra.mxu0 0.0
    %1647 = vmatprep.subr.mxu0 0.0
    %1648 = vmatpush1.msra.mxu0 0.0
    %1649 = vmatprep.subr.mxu0 0.0
    %1650 = vmatpush1.msra.mxu0 0.0
    %1651 = vmatprep.subr.mxu0 0.0
    %1652 = vmatpush1.msra.mxu0 0.0
    %1653 = vmatprep.subr.mxu0 0.0
    %1654 = vmatpush1.msra.mxu0 0.0
    %1655 = vmatprep.subr.mxu0 0.0
    %1656 = vmatpush1.msra.mxu0 0.0
    %1657 = vmatprep.subr.mxu0 0.0
    %1658 = vmatpush1.msra.mxu0 0.0
    %1659 = vmatprep.subr.mxu0 0.0
    %1660 = vmatpush1.msra.mxu0 0.0
    %1661 = vmatprep.subr.mxu0 0.0
    %1662 = vmatpush1.msra.mxu0 0.0
    %1663 = vmatprep.subr.mxu0 0.0
    %1664 = vmatpush1.msra.mxu0 0.0
    %1665 = vmatprep.subr.mxu0 0.0
    %1666 = vmatpush1.msra.mxu0 0.0
    %1667 = vmatprep.subr.mxu0 0.0
    %1668 = vmatpush1.msra.mxu0 0.0
    %1669 = vmatprep.subr.mxu0 0.0
    %1670 = vmatpush1.msra.mxu0 0.0
    %1671 = vmatprep.subr.mxu0 0.0
    %1672 = vmatpush1.msra.mxu0 0.0
    %1673 = vmatprep.mubr.f32.mxu0 0.0
    %1674 = vmatmul.mubr.f32.gmra.mrb[0].mxu0 %v1607
    %v1675 = vpop.f32.mrb[0].mxu0
    %v1676 = vadd.f32 %v365, %v1675
    %v1677 = vpop.f32.mrb[0].mxu0
    %1678 = vdwg.mxu0
    %v1680 = vrot.slane %v349, 4
    %v1682 = vsel %vm267, %v1604, 0
    %1684 = vmatprep.subr.mxu0 0.0
    %1685 = vmatpush1.msra.mxu0 %v373
    %1686 = vmatprep.subr.mxu0 0.0
    %1687 = vmatpush1.msra.mxu0 %v374
    %1688 = vmatprep.subr.mxu0 0.0
    %1689 = vmatpush1.msra.mxu0 %v375
    %1690 = vmatprep.subr.mxu0 0.0
    %1691 = vmatpush1.msra.mxu0 %v376
    %1692 = vmatprep.subr.mxu0 0.0
    %1693 = vmatpush1.msra.mxu0 0.0
    %1694 = vmatprep.subr.mxu0 0.0
    %1695 = vmatpush1.msra.mxu0 0.0
    %1696 = vmatprep.subr.mxu0 0.0
    %1697 = vmatpush1.msra.mxu0 0.0
    %1698 = vmatprep.subr.mxu0 0.0
    %1699 = vmatpush1.msra.mxu0 0.0
    %1700 = vmatprep.subr.mxu0 0.0
    %1701 = vmatpush1.msra.mxu0 0.0
    %1702 = vmatprep.subr.mxu0 0.0
    %1703 = vmatpush1.msra.mxu0 0.0
    %1704 = vmatprep.subr.mxu0 0.0
    %1705 = vmatpush1.msra.mxu0 0.0
    %1706 = vmatprep.subr.mxu0 0.0
    %1707 = vmatpush1.msra.mxu0 0.0
    %1708 = vmatprep.subr.mxu0 0.0
    %1709 = vmatpush1.msra.mxu0 0.0
    %1710 = vmatprep.subr.mxu0 0.0
    %1711 = vmatpush1.msra.mxu0 0.0
    %1712 = vmatprep.subr.mxu0 0.0
    %1713 = vmatpush1.msra.mxu0 0.0
    %1714 = vmatprep.subr.mxu0 0.0
    %1715 = vmatpush1.msra.mxu0 0.0
    %1716 = vmatprep.subr.mxu0 0.0
    %1717 = vmatpush1.msra.mxu0 0.0
    %1718 = vmatprep.subr.mxu0 0.0
    %1719 = vmatpush1.msra.mxu0 0.0
    %1720 = vmatprep.subr.mxu0 0.0
    %1721 = vmatpush1.msra.mxu0 0.0
    %1722 = vmatprep.subr.mxu0 0.0
    %1723 = vmatpush1.msra.mxu0 0.0
    %1724 = vmatprep.subr.mxu0 0.0
    %1725 = vmatpush1.msra.mxu0 0.0
    %1726 = vmatprep.subr.mxu0 0.0
    %1727 = vmatpush1.msra.mxu0 0.0
    %1728 = vmatprep.subr.mxu0 0.0
    %1729 = vmatpush1.msra.mxu0 0.0
    %1730 = vmatprep.subr.mxu0 0.0
    %1731 = vmatpush1.msra.mxu0 0.0
    %1732 = vmatprep.subr.mxu0 0.0
    %1733 = vmatpush1.msra.mxu0 0.0
    %1734 = vmatprep.subr.mxu0 0.0
    %1735 = vmatpush1.msra.mxu0 0.0
    %1736 = vmatprep.subr.mxu0 0.0
    %1737 = vmatpush1.msra.mxu0 0.0
    %1738 = vmatprep.subr.mxu0 0.0
    %1739 = vmatpush1.msra.mxu0 0.0
    %1740 = vmatprep.subr.mxu0 0.0
    %1741 = vmatpush1.msra.mxu0 0.0
    %1742 = vmatprep.subr.mxu0 0.0
    %1743 = vmatpush1.msra.mxu0 0.0
    %1744 = vmatprep.subr.mxu0 0.0
    %1745 = vmatpush1.msra.mxu0 0.0
    %1746 = vmatprep.subr.mxu0 0.0
    %1747 = vmatpush1.msra.mxu0 0.0
    %1748 = vmatprep.mubr.f32.mxu0 0.0
    %1749 = vmatmul.mubr.f32.gmra.mrb[0].mxu0 %v1682
    %v1750 = vpop.f32.mrb[0].mxu0
    %v1751 = vadd.f32 %v1680, %v1750
    %v1752 = vpop.f32.mrb[0].mxu0
    %1753 = vdwg.mxu0
    %v1754 = vxor.u32 %v1676, 2147483648
    %v1755 = vmul.f32 %v1754, 1.442695
    %v1756 = vpow.pop %v1755
    %v1757 = vadd.f32 %v1756, 1.0
    %v1758 = vrcp.pop %v1757
    %v1759 = vmul.f32 1.0, %v1758
    %v1760 = vtanh.pop %v1676
    %v1761 = vxor.u32 %v1751, 2147483648
    %v1762 = vmul.f32 %v1761, 1.442695
    %v1763 = vpow.pop %v1762
    %v1764 = vadd.f32 %v1763, 1.0
    %v1765 = vrcp.pop %v1764
    %v1766 = vmul.f32 1.0, %v1765
    %v1767 = vtanh.pop %v1751
    %v1768 = vmul.f32 %v1759, %v1573
    %1770 = vrot.lane.b32.xlu0 %v1760, 64
    %v1771 = vpop.permute.xlu0 %1770
    %v1773 = vmul.f32 %v1759, %v1771
    %1775 = vrot.lane.b32.xlu0 %v1773, 32
    %v1776 = vpop.permute.xlu0 %1775
    %v1778 = vadd.f32 %v1768, %v1776
    %v1779 = vtanh.pop %v1778
    %1781 = vrot.lane.b32.xlu0 %v1779, 64
    %v1782 = vpop.permute.xlu0 %1781
    %v1784 = vmul.f32 %v1759, %v1782
    %v1785 = vmul.f32 %v1766, %v1590
    %1787 = vrot.lane.b32.xlu0 %v1767, 64
    %v1788 = vpop.permute.xlu0 %1787
    %v1790 = vmul.f32 %v1766, %v1788
    %1792 = vrot.lane.b32.xlu0 %v1790, 32
    %v1793 = vpop.permute.xlu0 %1792
    %v1795 = vadd.f32 %v1785, %v1793
    %v1796 = vtanh.pop %v1795
    %1798 = vrot.lane.b32.xlu0 %v1796, 64
    %v1799 = vpop.permute.xlu0 %1798
    %v1801 = vmul.f32 %v1766, %v1799
    %1803 = vrot.lane.b32.xlu0 %v1784, 32
    %v1804 = vpop.permute.xlu0 %1803
    %1806 = vst.msk [vmem:[#allocation2 + $0x18] sm:$0xf] %vm575, %v1804
    %1808 = vrot.lane.b32.xlu0 %v1801, 32
    %v1809 = vpop.permute.xlu0 %1808
    %1811 = vst.msk [vmem:[#allocation3 + $0x4] sm:$0xf] %vm575, %v1809
    %v1813 = vrot.slane %v365, 4
    %v1815 = vsel %vm267, %v1804, 0
    %1817 = vmatprep.subr.mxu0 0.0
    %1818 = vmatpush1.msra.mxu0 %v369
    %1819 = vmatprep.subr.mxu0 0.0
    %1820 = vmatpush1.msra.mxu0 %v370
    %1821 = vmatprep.subr.mxu0 0.0
    %1822 = vmatpush1.msra.mxu0 %v371
    %1823 = vmatprep.subr.mxu0 0.0
    %1824 = vmatpush1.msra.mxu0 %v372
    %1825 = vmatprep.subr.mxu0 0.0
    %1826 = vmatpush1.msra.mxu0 0.0
    %1827 = vmatprep.subr.mxu0 0.0
    %1828 = vmatpush1.msra.mxu0 0.0
    %1829 = vmatprep.subr.mxu0 0.0
    %1830 = vmatpush1.msra.mxu0 0.0
    %1831 = vmatprep.subr.mxu0 0.0
    %1832 = vmatpush1.msra.mxu0 0.0
    %1833 = vmatprep.subr.mxu0 0.0
    %1834 = vmatpush1.msra.mxu0 0.0
    %1835 = vmatprep.subr.mxu0 0.0
    %1836 = vmatpush1.msra.mxu0 0.0
    %1837 = vmatprep.subr.mxu0 0.0
    %1838 = vmatpush1.msra.mxu0 0.0
    %1839 = vmatprep.subr.mxu0 0.0
    %1840 = vmatpush1.msra.mxu0 0.0
    %1841 = vmatprep.subr.mxu0 0.0
    %1842 = vmatpush1.msra.mxu0 0.0
    %1843 = vmatprep.subr.mxu0 0.0
    %1844 = vmatpush1.msra.mxu0 0.0
    %1845 = vmatprep.subr.mxu0 0.0
    %1846 = vmatpush1.msra.mxu0 0.0
    %1847 = vmatprep.subr.mxu0 0.0
    %1848 = vmatpush1.msra.mxu0 0.0
    %1849 = vmatprep.subr.mxu0 0.0
    %1850 = vmatpush1.msra.mxu0 0.0
    %1851 = vmatprep.subr.mxu0 0.0
    %1852 = vmatpush1.msra.mxu0 0.0
    %1853 = vmatprep.subr.mxu0 0.0
    %1854 = vmatpush1.msra.mxu0 0.0
    %1855 = vmatprep.subr.mxu0 0.0
    %1856 = vmatpush1.msra.mxu0 0.0
    %1857 = vmatprep.subr.mxu0 0.0
    %1858 = vmatpush1.msra.mxu0 0.0
    %1859 = vmatprep.subr.mxu0 0.0
    %1860 = vmatpush1.msra.mxu0 0.0
    %1861 = vmatprep.subr.mxu0 0.0
    %1862 = vmatpush1.msra.mxu0 0.0
    %1863 = vmatprep.subr.mxu0 0.0
    %1864 = vmatpush1.msra.mxu0 0.0
    %1865 = vmatprep.subr.mxu0 0.0
    %1866 = vmatpush1.msra.mxu0 0.0
    %1867 = vmatprep.subr.mxu0 0.0
    %1868 = vmatpush1.msra.mxu0 0.0
    %1869 = vmatprep.subr.mxu0 0.0
    %1870 = vmatpush1.msra.mxu0 0.0
    %1871 = vmatprep.subr.mxu0 0.0
    %1872 = vmatpush1.msra.mxu0 0.0
    %1873 = vmatprep.subr.mxu0 0.0
    %1874 = vmatpush1.msra.mxu0 0.0
    %1875 = vmatprep.subr.mxu0 0.0
    %1876 = vmatpush1.msra.mxu0 0.0
    %1877 = vmatprep.subr.mxu0 0.0
    %1878 = vmatpush1.msra.mxu0 0.0
    %1879 = vmatprep.subr.mxu0 0.0
    %1880 = vmatpush1.msra.mxu0 0.0
    %1881 = vmatprep.mubr.f32.mxu0 0.0
    %1882 = vmatmul.mubr.f32.gmra.mrb[0].mxu0 %v1815
    %v1883 = vpop.f32.mrb[0].mxu0
    %v1884 = vadd.f32 %v1813, %v1883
    %v1885 = vpop.f32.mrb[0].mxu0
    %1886 = vdwg.mxu0
    %v1887 = vsel %vm267, %v1809, 0
    %1889 = vmatprep.subr.mxu0 0.0
    %1890 = vmatpush1.msra.mxu0 %v373
    %1891 = vmatprep.subr.mxu0 0.0
    %1892 = vmatpush1.msra.mxu0 %v374
    %1893 = vmatprep.subr.mxu0 0.0
    %1894 = vmatpush1.msra.mxu0 %v375
    %1895 = vmatprep.subr.mxu0 0.0
    %1896 = vmatpush1.msra.mxu0 %v376
    %1897 = vmatprep.subr.mxu0 0.0
    %1898 = vmatpush1.msra.mxu0 0.0
    %1899 = vmatprep.subr.mxu0 0.0
    %1900 = vmatpush1.msra.mxu0 0.0
    %1901 = vmatprep.subr.mxu0 0.0
    %1902 = vmatpush1.msra.mxu0 0.0
    %1903 = vmatprep.subr.mxu0 0.0
    %1904 = vmatpush1.msra.mxu0 0.0
    %1905 = vmatprep.subr.mxu0 0.0
    %1906 = vmatpush1.msra.mxu0 0.0
    %1907 = vmatprep.subr.mxu0 0.0
    %1908 = vmatpush1.msra.mxu0 0.0
    %1909 = vmatprep.subr.mxu0 0.0
    %1910 = vmatpush1.msra.mxu0 0.0
    %1911 = vmatprep.subr.mxu0 0.0
    %1912 = vmatpush1.msra.mxu0 0.0
    %1913 = vmatprep.subr.mxu0 0.0
    %1914 = vmatpush1.msra.mxu0 0.0
    %1915 = vmatprep.subr.mxu0 0.0
    %1916 = vmatpush1.msra.mxu0 0.0
    %1917 = vmatprep.subr.mxu0 0.0
    %1918 = vmatpush1.msra.mxu0 0.0
    %1919 = vmatprep.subr.mxu0 0.0
    %1920 = vmatpush1.msra.mxu0 0.0
    %1921 = vmatprep.subr.mxu0 0.0
    %1922 = vmatpush1.msra.mxu0 0.0
    %1923 = vmatprep.subr.mxu0 0.0
    %1924 = vmatpush1.msra.mxu0 0.0
    %1925 = vmatprep.subr.mxu0 0.0
    %1926 = vmatpush1.msra.mxu0 0.0
    %1927 = vmatprep.subr.mxu0 0.0
    %1928 = vmatpush1.msra.mxu0 0.0
    %1929 = vmatprep.subr.mxu0 0.0
    %1930 = vmatpush1.msra.mxu0 0.0
    %1931 = vmatprep.subr.mxu0 0.0
    %1932 = vmatpush1.msra.mxu0 0.0
    %1933 = vmatprep.subr.mxu0 0.0
    %1934 = vmatpush1.msra.mxu0 0.0
    %1935 = vmatprep.subr.mxu0 0.0
    %1936 = vmatpush1.msra.mxu0 0.0
    %1937 = vmatprep.subr.mxu0 0.0
    %1938 = vmatpush1.msra.mxu0 0.0
    %1939 = vmatprep.subr.mxu0 0.0
    %1940 = vmatpush1.msra.mxu0 0.0
    %1941 = vmatprep.subr.mxu0 0.0
    %1942 = vmatpush1.msra.mxu0 0.0
    %1943 = vmatprep.subr.mxu0 0.0
    %1944 = vmatpush1.msra.mxu0 0.0
    %1945 = vmatprep.subr.mxu0 0.0
    %1946 = vmatpush1.msra.mxu0 0.0
    %1947 = vmatprep.subr.mxu0 0.0
    %1948 = vmatpush1.msra.mxu0 0.0
    %1949 = vmatprep.subr.mxu0 0.0
    %1950 = vmatpush1.msra.mxu0 0.0
    %1951 = vmatprep.subr.mxu0 0.0
    %1952 = vmatpush1.msra.mxu0 0.0
    %1953 = vmatprep.mubr.f32.mxu0 0.0
    %1954 = vmatmul.mubr.f32.gmra.mrb[0].mxu0 %v1887
    %v1955 = vpop.f32.mrb[0].mxu0
    %v1956 = vadd.f32 %v349, %v1955
    %v1957 = vpop.f32.mrb[0].mxu0
    %1958 = vdwg.mxu0
    %v1959 = vxor.u32 %v1884, 2147483648
    %v1960 = vmul.f32 %v1959, 1.442695
    %v1961 = vpow.pop %v1960
    %v1962 = vadd.f32 %v1961, 1.0
    %v1963 = vrcp.pop %v1962
    %v1964 = vmul.f32 1.0, %v1963
    %v1965 = vtanh.pop %v1884
    %v1966 = vxor.u32 %v1956, 2147483648
    %v1967 = vmul.f32 %v1966, 1.442695
    %v1968 = vpow.pop %v1967
    %v1969 = vadd.f32 %v1968, 1.0
    %v1970 = vrcp.pop %v1969
    %v1971 = vmul.f32 1.0, %v1970
    %v1972 = vtanh.pop %v1956
    %v1973 = vmul.f32 %v1964, %v1778
    %1975 = vrot.lane.b32.xlu0 %v1965, 64
    %v1976 = vpop.permute.xlu0 %1975
    %v1978 = vmul.f32 %v1964, %v1976
    %1980 = vrot.lane.b32.xlu0 %v1978, 32
    %v1981 = vpop.permute.xlu0 %1980
    %v1983 = vadd.f32 %v1973, %v1981
    %v1984 = vtanh.pop %v1983
    %1986 = vrot.lane.b32.xlu0 %v1984, 64
    %v1987 = vpop.permute.xlu0 %1986
    %v1989 = vmul.f32 %v1964, %v1987
    %v1990 = vmul.f32 %v1971, %v1795
    %1992 = vrot.lane.b32.xlu0 %v1972, 64
    %v1993 = vpop.permute.xlu0 %1992
    %v1995 = vmul.f32 %v1971, %v1993
    %1997 = vrot.lane.b32.xlu0 %v1995, 32
    %v1998 = vpop.permute.xlu0 %1997
    %v2000 = vadd.f32 %v1990, %v1998
    %v2001 = vtanh.pop %v2000
    %2003 = vrot.lane.b32.xlu0 %v2001, 64
    %v2004 = vpop.permute.xlu0 %2003
    %v2006 = vmul.f32 %v1971, %v2004
    %2008 = vrot.lane.b32.xlu0 %v1989, 32
    %v2009 = vpop.permute.xlu0 %2008
    %2011 = vst.msk [vmem:[#allocation2 + $0x1c] sm:$0xf] %vm575, %v2009
    %2013 = vrot.lane.b32.xlu0 %v2006, 32
    %v2014 = vpop.permute.xlu0 %2013
    %2016 = vst.msk [vmem:[#allocation3] sm:$0xf] %vm575, %v2014
    %v2017 = vld [vmem:[#allocation2] sm:$0xff]
    %v2018 = vld [vmem:[#allocation2 + $0x8] sm:$0xff]
    %v2019 = vld [vmem:[#allocation2 + $0x10] sm:$0xff]
    %v2020 = vld [vmem:[#allocation2 + $0x18] sm:$0xff]
    %v2021 = vld [vmem:[%s6] sm:$0xff]
    %v2022 = vld [vmem:[%s6 + $0x8] sm:$0xff]
    %v2023 = vld [vmem:[%s6 + $0x10] sm:$0xff]
    %v2024 = vld [vmem:[%s6 + $0x18] sm:$0xff]
    %v2025 = vld [vmem:[#allocation3] sm:$0xff]
    %v2026 = vld [vmem:[#allocation3 + $0x8] sm:$0xff]
    %v2027 = vld [vmem:[#allocation3 + $0x10] sm:$0xff]
    %v2028 = vld [vmem:[#allocation3 + $0x18] sm:$0xff]
    %v2029 = vld [vmem:[%s7] sm:$0xff]
    %v2030 = vld [vmem:[%s7 + $0x8] sm:$0xff]
    %v2031 = vld [vmem:[%s7 + $0x10] sm:$0xff]
    %v2032 = vld [vmem:[%s7 + $0x18] sm:$0xff]
    %v2034 = vsel %vm267, %v2025, 0
    %v2037 = vsel %vm267, %v2026, 0
    %v2040 = vsel %vm267, %v2027, 0
    %v2043 = vsel %vm267, %v2028, 0
    %2045 = vmatprep.subr.mxu0 0.0
    %2046 = vmatpush1.msra.mxu0 %v2029
    %2047 = vmatprep.subr.mxu0 0.0
    %2048 = vmatpush1.msra.mxu0 %v2030
    %2049 = vmatprep.subr.mxu0 0.0
    %2050 = vmatpush1.msra.mxu0 %v2031
    %2051 = vmatprep.subr.mxu0 0.0
    %2052 = vmatpush1.msra.mxu0 %v2032
    %2053 = vmatprep.subr.mxu0 0.0
    %2054 = vmatpush1.msra.mxu0 0.0
    %2055 = vmatprep.subr.mxu0 0.0
    %2056 = vmatpush1.msra.mxu0 0.0
    %2057 = vmatprep.subr.mxu0 0.0
    %2058 = vmatpush1.msra.mxu0 0.0
    %2059 = vmatprep.subr.mxu0 0.0
    %2060 = vmatpush1.msra.mxu0 0.0
    %2061 = vmatprep.subr.mxu0 0.0
    %2062 = vmatpush1.msra.mxu0 0.0
    %2063 = vmatprep.subr.mxu0 0.0
    %2064 = vmatpush1.msra.mxu0 0.0
    %2065 = vmatprep.subr.mxu0 0.0
    %2066 = vmatpush1.msra.mxu0 0.0
    %2067 = vmatprep.subr.mxu0 0.0
    %2068 = vmatpush1.msra.mxu0 0.0
    %2069 = vmatprep.subr.mxu0 0.0
    %2070 = vmatpush1.msra.mxu0 0.0
    %2071 = vmatprep.subr.mxu0 0.0
    %2072 = vmatpush1.msra.mxu0 0.0
    %2073 = vmatprep.subr.mxu0 0.0
    %2074 = vmatpush1.msra.mxu0 0.0
    %2075 = vmatprep.subr.mxu0 0.0
    %2076 = vmatpush1.msra.mxu0 0.0
    %2077 = vmatprep.subr.mxu0 0.0
    %2078 = vmatpush1.msra.mxu0 0.0
    %2079 = vmatprep.subr.mxu0 0.0
    %2080 = vmatpush1.msra.mxu0 0.0
    %2081 = vmatprep.subr.mxu0 0.0
    %2082 = vmatpush1.msra.mxu0 0.0
    %2083 = vmatprep.subr.mxu0 0.0
    %2084 = vmatpush1.msra.mxu0 0.0
    %2085 = vmatprep.subr.mxu0 0.0
    %2086 = vmatpush1.msra.mxu0 0.0
    %2087 = vmatprep.subr.mxu0 0.0
    %2088 = vmatpush1.msra.mxu0 0.0
    %2089 = vmatprep.subr.mxu0 0.0
    %2090 = vmatpush1.msra.mxu0 0.0
    %2091 = vmatprep.subr.mxu0 0.0
    %2092 = vmatpush1.msra.mxu0 0.0
    %2093 = vmatprep.subr.mxu0 0.0
    %2094 = vmatpush1.msra.mxu0 0.0
    %2095 = vmatprep.subr.mxu0 0.0
    %2096 = vmatpush1.msra.mxu0 0.0
    %2097 = vmatprep.subr.mxu0 0.0
    %2098 = vmatpush1.msra.mxu0 0.0
    %2099 = vmatprep.subr.mxu0 0.0
    %2100 = vmatpush1.msra.mxu0 0.0
    %2101 = vmatprep.subr.mxu0 0.0
    %2102 = vmatpush1.msra.mxu0 0.0
    %2103 = vmatprep.subr.mxu0 0.0
    %2104 = vmatpush1.msra.mxu0 0.0
    %2105 = vmatprep.subr.mxu0 0.0
    %2106 = vmatpush1.msra.mxu0 0.0
    %2107 = vmatprep.subr.mxu0 0.0
    %2108 = vmatpush1.msra.mxu0 0.0
    %2109 = vmatprep.mubr.f32.mxu0 0.0
    %2110 = vmatmul.mubr.f32.gmra.mrb[0].mxu0 %v2034
    %v2111 = vpop.f32.mrb[0].mxu0
    %v2112 = vadd.f32 0.0, %v2111
    %v2113 = vpop.f32.mrb[0].mxu0
    %2114 = vmatprep.mubr.f32.mxu0 0.0
    %2115 = vmatmul.mubr.f32.gmra.mrb[0].mxu0 %v2037
    %v2116 = vpop.f32.mrb[0].mxu0
    %v2117 = vadd.f32 0.0, %v2116
    %v2118 = vpop.f32.mrb[0].mxu0
    %2119 = vmatprep.mubr.f32.mxu0 0.0
    %2120 = vmatmul.mubr.f32.gmra.mrb[0].mxu0 %v2040
    %v2121 = vpop.f32.mrb[0].mxu0
    %v2122 = vadd.f32 0.0, %v2121
    %v2123 = vpop.f32.mrb[0].mxu0
    %2124 = vmatprep.mubr.f32.mxu0 0.0
    %2125 = vmatmul.mubr.f32.gmra.mrb[0].mxu0 %v2043
    %v2126 = vpop.f32.mrb[0].mxu0
    %v2127 = vadd.f32 0.0, %v2126
    %v2128 = vpop.f32.mrb[0].mxu0
    %2129 = vdwg.mxu0
    %v2131 = vsel %vm267, %v2017, 0
    %v2134 = vsel %vm267, %v2018, 0
    %v2137 = vsel %vm267, %v2019, 0
    %v2140 = vsel %vm267, %v2020, 0
    %2142 = vmatprep.subr.mxu0 0.0
    %2143 = vmatpush1.msra.mxu0 %v2021
    %2144 = vmatprep.subr.mxu0 0.0
    %2145 = vmatpush1.msra.mxu0 %v2022
    %2146 = vmatprep.subr.mxu0 0.0
    %2147 = vmatpush1.msra.mxu0 %v2023
    %2148 = vmatprep.subr.mxu0 0.0
    %2149 = vmatpush1.msra.mxu0 %v2024
    %2150 = vmatprep.subr.mxu0 0.0
    %2151 = vmatpush1.msra.mxu0 0.0
    %2152 = vmatprep.subr.mxu0 0.0
    %2153 = vmatpush1.msra.mxu0 0.0
    %2154 = vmatprep.subr.mxu0 0.0
    %2155 = vmatpush1.msra.mxu0 0.0
    %2156 = vmatprep.subr.mxu0 0.0
    %2157 = vmatpush1.msra.mxu0 0.0
    %2158 = vmatprep.subr.mxu0 0.0
    %2159 = vmatpush1.msra.mxu0 0.0
    %2160 = vmatprep.subr.mxu0 0.0
    %2161 = vmatpush1.msra.mxu0 0.0
    %2162 = vmatprep.subr.mxu0 0.0
    %2163 = vmatpush1.msra.mxu0 0.0
    %2164 = vmatprep.subr.mxu0 0.0
    %2165 = vmatpush1.msra.mxu0 0.0
    %2166 = vmatprep.subr.mxu0 0.0
    %2167 = vmatpush1.msra.mxu0 0.0
    %2168 = vmatprep.subr.mxu0 0.0
    %2169 = vmatpush1.msra.mxu0 0.0
    %2170 = vmatprep.subr.mxu0 0.0
    %2171 = vmatpush1.msra.mxu0 0.0
    %2172 = vmatprep.subr.mxu0 0.0
    %2173 = vmatpush1.msra.mxu0 0.0
    %2174 = vmatprep.subr.mxu0 0.0
    %2175 = vmatpush1.msra.mxu0 0.0
    %2176 = vmatprep.subr.mxu0 0.0
    %2177 = vmatpush1.msra.mxu0 0.0
    %2178 = vmatprep.subr.mxu0 0.0
    %2179 = vmatpush1.msra.mxu0 0.0
    %2180 = vmatprep.subr.mxu0 0.0
    %2181 = vmatpush1.msra.mxu0 0.0
    %2182 = vmatprep.subr.mxu0 0.0
    %2183 = vmatpush1.msra.mxu0 0.0
    %2184 = vmatprep.subr.mxu0 0.0
    %2185 = vmatpush1.msra.mxu0 0.0
    %2186 = vmatprep.subr.mxu0 0.0
    %2187 = vmatpush1.msra.mxu0 0.0
    %2188 = vmatprep.subr.mxu0 0.0
    %2189 = vmatpush1.msra.mxu0 0.0
    %2190 = vmatprep.subr.mxu0 0.0
    %2191 = vmatpush1.msra.mxu0 0.0
    %2192 = vmatprep.subr.mxu0 0.0
    %2193 = vmatpush1.msra.mxu0 0.0
    %2194 = vmatprep.subr.mxu0 0.0
    %2195 = vmatpush1.msra.mxu0 0.0
    %2196 = vmatprep.subr.mxu0 0.0
    %2197 = vmatpush1.msra.mxu0 0.0
    %2198 = vmatprep.subr.mxu0 0.0
    %2199 = vmatpush1.msra.mxu0 0.0
    %2200 = vmatprep.subr.mxu0 0.0
    %2201 = vmatpush1.msra.mxu0 0.0
    %2202 = vmatprep.subr.mxu0 0.0
    %2203 = vmatpush1.msra.mxu0 0.0
    %2204 = vmatprep.subr.mxu0 0.0
    %2205 = vmatpush1.msra.mxu0 0.0
    %2206 = vmatprep.mubr.f32.mxu0 0.0
    %2207 = vmatmul.mubr.f32.gmra.mrb[0].mxu0 %v2131
    %v2208 = vpop.f32.mrb[0].mxu0
    %v2209 = vadd.f32 %v2112, %v2208
    %v2210 = vpop.f32.mrb[0].mxu0
    %2211 = vmatprep.mubr.f32.mxu0 0.0
    %2212 = vmatmul.mubr.f32.gmra.mrb[0].mxu0 %v2134
    %v2213 = vpop.f32.mrb[0].mxu0
    %v2214 = vadd.f32 %v2117, %v2213
    %v2215 = vpop.f32.mrb[0].mxu0
    %2216 = vmatprep.mubr.f32.mxu0 0.0
    %2217 = vmatmul.mubr.f32.gmra.mrb[0].mxu0 %v2137
    %v2218 = vpop.f32.mrb[0].mxu0
    %v2219 = vadd.f32 %v2122, %v2218
    %v2220 = vpop.f32.mrb[0].mxu0
    %2221 = vmatprep.mubr.f32.mxu0 0.0
    %2222 = vmatmul.mubr.f32.gmra.mrb[0].mxu0 %v2140
    %v2223 = vpop.f32.mrb[0].mxu0
    %v2224 = vadd.f32 %v2127, %v2223
    %v2225 = vpop.f32.mrb[0].mxu0
    %2226 = vdwg.mxu0
    %v2227 = vld [vmem:[%s8] sm:$0x1]
    %v2229 = vlaneseq
    %v2230 = vshrl.u32 %v2229, 7
    %v2231 = vsub.s32 0, %v2230
    %v2232 = vrot.slane %v2227, %v2231
    %v2234 = vadd.f32 %v2209, %v2232
    %v2235 = vadd.f32 %v2214, %v2232
    %v2236 = vadd.f32 %v2219, %v2232
    %v2237 = vadd.f32 %v2224, %v2232
    %v2238 = vmax.f32 %v2234, 0.0
    %v2239 = vmax.f32 %v2235, 0.0
    %v2240 = vmax.f32 %v2236, 0.0
    %v2241 = vmax.f32 %v2237, 0.0
    %v2242 = vld [vmem:[%s9] sm:$0xff]
    %v2243 = vld [vmem:[%s9 + $0x8] sm:$0xff]
    %v2244 = vld [vmem:[%s9 + $0x10] sm:$0xff]
    %v2245 = vld [vmem:[%s9 + $0x18] sm:$0xff]
    %v2246 = vld [vmem:[#allocation6] sm:$0x1]
    %v2248 = vlaneseq
    %v2249 = vshrl.u32 %v2248, 7
    %v2250 = vsub.s32 0, %v2249
    %v2251 = vrot.slane %v2246, %v2250
    %v2254 = vsel %vm267, %v2238, 0
    %v2257 = vsel %vm267, %v2239, 0
    %v2260 = vsel %vm267, %v2240, 0
    %v2263 = vsel %vm267, %v2241, 0
    %2265 = vmatprep.subr.mxu0 0.0
    %2266 = vmatpush1.msra.mxu0 %v2242
    %2267 = vmatprep.subr.mxu0 0.0
    %2268 = vmatpush1.msra.mxu0 %v2243
    %2269 = vmatprep.subr.mxu0 0.0
    %2270 = vmatpush1.msra.mxu0 %v2244
    %2271 = vmatprep.subr.mxu0 0.0
    %2272 = vmatpush1.msra.mxu0 %v2245
    %2273 = vmatprep.subr.mxu0 0.0
    %2274 = vmatpush1.msra.mxu0 0.0
    %2275 = vmatprep.subr.mxu0 0.0
    %2276 = vmatpush1.msra.mxu0 0.0
    %2277 = vmatprep.subr.mxu0 0.0
    %2278 = vmatpush1.msra.mxu0 0.0
    %2279 = vmatprep.subr.mxu0 0.0
    %2280 = vmatpush1.msra.mxu0 0.0
    %2281 = vmatprep.subr.mxu0 0.0
    %2282 = vmatpush1.msra.mxu0 0.0
    %2283 = vmatprep.subr.mxu0 0.0
    %2284 = vmatpush1.msra.mxu0 0.0
    %2285 = vmatprep.subr.mxu0 0.0
    %2286 = vmatpush1.msra.mxu0 0.0
    %2287 = vmatprep.subr.mxu0 0.0
    %2288 = vmatpush1.msra.mxu0 0.0
    %2289 = vmatprep.subr.mxu0 0.0
    %2290 = vmatpush1.msra.mxu0 0.0
    %2291 = vmatprep.subr.mxu0 0.0
    %2292 = vmatpush1.msra.mxu0 0.0
    %2293 = vmatprep.subr.mxu0 0.0
    %2294 = vmatpush1.msra.mxu0 0.0
    %2295 = vmatprep.subr.mxu0 0.0
    %2296 = vmatpush1.msra.mxu0 0.0
    %2297 = vmatprep.subr.mxu0 0.0
    %2298 = vmatpush1.msra.mxu0 0.0
    %2299 = vmatprep.subr.mxu0 0.0
    %2300 = vmatpush1.msra.mxu0 0.0
    %2301 = vmatprep.subr.mxu0 0.0
    %2302 = vmatpush1.msra.mxu0 0.0
    %2303 = vmatprep.subr.mxu0 0.0
    %2304 = vmatpush1.msra.mxu0 0.0
    %2305 = vmatprep.subr.mxu0 0.0
    %2306 = vmatpush1.msra.mxu0 0.0
    %2307 = vmatprep.subr.mxu0 0.0
    %2308 = vmatpush1.msra.mxu0 0.0
    %2309 = vmatprep.subr.mxu0 0.0
    %2310 = vmatpush1.msra.mxu0 0.0
    %2311 = vmatprep.subr.mxu0 0.0
    %2312 = vmatpush1.msra.mxu0 0.0
    %2313 = vmatprep.subr.mxu0 0.0
    %2314 = vmatpush1.msra.mxu0 0.0
    %2315 = vmatprep.subr.mxu0 0.0
    %2316 = vmatpush1.msra.mxu0 0.0
    %2317 = vmatprep.subr.mxu0 0.0
    %2318 = vmatpush1.msra.mxu0 0.0
    %2319 = vmatprep.subr.mxu0 0.0
    %2320 = vmatpush1.msra.mxu0 0.0
    %2321 = vmatprep.subr.mxu0 0.0
    %2322 = vmatpush1.msra.mxu0 0.0
    %2323 = vmatprep.subr.mxu0 0.0
    %2324 = vmatpush1.msra.mxu0 0.0
    %2325 = vmatprep.subr.mxu0 0.0
    %2326 = vmatpush1.msra.mxu0 0.0
    %2327 = vmatprep.subr.mxu0 0.0
    %2328 = vmatpush1.msra.mxu0 0.0
    %2329 = vmatprep.mubr.f32.mxu0 0.0
    %2330 = vmatmul.mubr.f32.gmra.mrb[0].mxu0 %v2254
    %v2331 = vpop.f32.mrb[0].mxu0
    %v2332 = vadd.f32 %v2251, %v2331
    %v2333 = vpop.f32.mrb[0].mxu0
    %2334 = vmatprep.mubr.f32.mxu0 0.0
    %2335 = vmatmul.mubr.f32.gmra.mrb[0].mxu0 %v2257
    %v2336 = vpop.f32.mrb[0].mxu0
    %v2337 = vadd.f32 %v2251, %v2336
    %v2338 = vpop.f32.mrb[0].mxu0
    %2339 = vmatprep.mubr.f32.mxu0 0.0
    %2340 = vmatmul.mubr.f32.gmra.mrb[0].mxu0 %v2260
    %v2341 = vpop.f32.mrb[0].mxu0
    %v2342 = vadd.f32 %v2251, %v2341
    %v2343 = vpop.f32.mrb[0].mxu0
    %2344 = vmatprep.mubr.f32.mxu0 0.0
    %2345 = vmatmul.mubr.f32.gmra.mrb[0].mxu0 %v2263
    %v2346 = vpop.f32.mrb[0].mxu0
    %v2347 = vadd.f32 %v2251, %v2346
    %v2348 = vpop.f32.mrb[0].mxu0
    %2349 = vdwg.mxu0
    %v2350 = vmax.f32 %v2332, 0.0
    %v2351 = vmax.f32 %v2337, 0.0
    %v2352 = vmax.f32 %v2342, 0.0
    %v2353 = vmax.f32 %v2347, 0.0
    %v2354 = vld [vmem:[%s11] sm:$0xff]
    %v2355 = vld [vmem:[%s11 + $0x8] sm:$0xff]
    %v2356 = vld [vmem:[#allocation8] sm:$0x1]
    %v2358 = vlaneseq
    %v2359 = vshrl.u32 %v2358, 7
    %v2360 = vsub.s32 0, %v2359
    %v2361 = vrot.slane %v2356, %v2360
    %vm2363 = vcmask 130048
    %v2365 = vsel %vm2363, %v2350, 0
    %v2368 = vsel %vm2363, %v2351, 0
    %v2371 = vsel %vm2363, %v2352, 0
    %v2374 = vsel %vm2363, %v2353, 0
    %2376 = vmatprep.subr.mxu0 0.0
    %2377 = vmatpush1.msra.mxu0 %v2354
    %2378 = vmatprep.subr.mxu0 0.0
    %2379 = vmatpush1.msra.mxu0 %v2355
    %2380 = vmatprep.subr.mxu0 0.0
    %2381 = vmatpush1.msra.mxu0 0.0
    %2382 = vmatprep.subr.mxu0 0.0
    %2383 = vmatpush1.msra.mxu0 0.0
    %2384 = vmatprep.subr.mxu0 0.0
    %2385 = vmatpush1.msra.mxu0 0.0
    %2386 = vmatprep.subr.mxu0 0.0
    %2387 = vmatpush1.msra.mxu0 0.0
    %2388 = vmatprep.subr.mxu0 0.0
    %2389 = vmatpush1.msra.mxu0 0.0
    %2390 = vmatprep.subr.mxu0 0.0
    %2391 = vmatpush1.msra.mxu0 0.0
    %2392 = vmatprep.subr.mxu0 0.0
    %2393 = vmatpush1.msra.mxu0 0.0
    %2394 = vmatprep.subr.mxu0 0.0
    %2395 = vmatpush1.msra.mxu0 0.0
    %2396 = vmatprep.subr.mxu0 0.0
    %2397 = vmatpush1.msra.mxu0 0.0
    %2398 = vmatprep.subr.mxu0 0.0
    %2399 = vmatpush1.msra.mxu0 0.0
    %2400 = vmatprep.subr.mxu0 0.0
    %2401 = vmatpush1.msra.mxu0 0.0
    %2402 = vmatprep.subr.mxu0 0.0
    %2403 = vmatpush1.msra.mxu0 0.0
    %2404 = vmatprep.subr.mxu0 0.0
    %2405 = vmatpush1.msra.mxu0 0.0
    %2406 = vmatprep.subr.mxu0 0.0
    %2407 = vmatpush1.msra.mxu0 0.0
    %2408 = vmatprep.subr.mxu0 0.0
    %2409 = vmatpush1.msra.mxu0 0.0
    %2410 = vmatprep.subr.mxu0 0.0
    %2411 = vmatpush1.msra.mxu0 0.0
    %2412 = vmatprep.subr.mxu0 0.0
    %2413 = vmatpush1.msra.mxu0 0.0
    %2414 = vmatprep.subr.mxu0 0.0
    %2415 = vmatpush1.msra.mxu0 0.0
    %2416 = vmatprep.subr.mxu0 0.0
    %2417 = vmatpush1.msra.mxu0 0.0
    %2418 = vmatprep.subr.mxu0 0.0
    %2419 = vmatpush1.msra.mxu0 0.0
    %2420 = vmatprep.subr.mxu0 0.0
    %2421 = vmatpush1.msra.mxu0 0.0
    %2422 = vmatprep.subr.mxu0 0.0
    %2423 = vmatpush1.msra.mxu0 0.0
    %2424 = vmatprep.subr.mxu0 0.0
    %2425 = vmatpush1.msra.mxu0 0.0
    %2426 = vmatprep.subr.mxu0 0.0
    %2427 = vmatpush1.msra.mxu0 0.0
    %2428 = vmatprep.subr.mxu0 0.0
    %2429 = vmatpush1.msra.mxu0 0.0
    %2430 = vmatprep.subr.mxu0 0.0
    %2431 = vmatpush1.msra.mxu0 0.0
    %2432 = vmatprep.subr.mxu0 0.0
    %2433 = vmatpush1.msra.mxu0 0.0
    %2434 = vmatprep.subr.mxu0 0.0
    %2435 = vmatpush1.msra.mxu0 0.0
    %2436 = vmatprep.subr.mxu0 0.0
    %2437 = vmatpush1.msra.mxu0 0.0
    %2438 = vmatprep.subr.mxu0 0.0
    %2439 = vmatpush1.msra.mxu0 0.0
    %2440 = vmatprep.mubr.f32.mxu0 0.0
    %2441 = vmatmul.mubr.f32.gmra.mrb[0].mxu0 %v2365
    %v2442 = vpop.f32.mrb[0].mxu0
    %v2443 = vadd.f32 %v2361, %v2442
    %v2444 = vpop.f32.mrb[0].mxu0
    %2445 = vmatprep.mubr.f32.mxu0 0.0
    %2446 = vmatmul.mubr.f32.gmra.mrb[0].mxu0 %v2368
    %v2447 = vpop.f32.mrb[0].mxu0
    %v2448 = vadd.f32 %v2361, %v2447
    %v2449 = vpop.f32.mrb[0].mxu0
    %2450 = vmatprep.mubr.f32.mxu0 0.0
    %2451 = vmatmul.mubr.f32.gmra.mrb[0].mxu0 %v2371
    %v2452 = vpop.f32.mrb[0].mxu0
    %v2453 = vadd.f32 %v2361, %v2452
    %v2454 = vpop.f32.mrb[0].mxu0
    %2455 = vmatprep.mubr.f32.mxu0 0.0
    %2456 = vmatmul.mubr.f32.gmra.mrb[0].mxu0 %v2374
    %v2457 = vpop.f32.mrb[0].mxu0
    %v2458 = vadd.f32 %v2361, %v2457
    %v2459 = vpop.f32.mrb[0].mxu0
    %2460 = vdwg.mxu0
    %v2461 = vmax.f32 %v2443, 0.0
    %v2462 = vmax.f32 %v2448, 0.0
    %v2463 = vmax.f32 %v2453, 0.0
    %v2464 = vmax.f32 %v2458, 0.0
    %v2465 = vld [vmem:[#allocation9] sm:$0xff]
    %v2466 = vld [vmem:[#allocation11] sm:$0x1]
    %v2468 = vlaneseq
    %v2469 = vshrl.u32 %v2468, 7
    %v2470 = vsub.s32 0, %v2469
    %v2471 = vrot.slane %v2466, %v2470
    %vm2473 = vcmask 64512
    %v2475 = vsel %vm2473, %v2461, 0
    %v2478 = vsel %vm2473, %v2462, 0
    %v2481 = vsel %vm2473, %v2463, 0
    %v2484 = vsel %vm2473, %v2464, 0
    %2486 = vmatprep.subr.mxu0 0.0
    %2487 = vmatpush1.msra.mxu0 %v2465
    %2488 = vmatprep.subr.mxu0 0.0
    %2489 = vmatpush1.msra.mxu0 0.0
    %2490 = vmatprep.subr.mxu0 0.0
    %2491 = vmatpush1.msra.mxu0 0.0
    %2492 = vmatprep.subr.mxu0 0.0
    %2493 = vmatpush1.msra.mxu0 0.0
    %2494 = vmatprep.subr.mxu0 0.0
    %2495 = vmatpush1.msra.mxu0 0.0
    %2496 = vmatprep.subr.mxu0 0.0
    %2497 = vmatpush1.msra.mxu0 0.0
    %2498 = vmatprep.subr.mxu0 0.0
    %2499 = vmatpush1.msra.mxu0 0.0
    %2500 = vmatprep.subr.mxu0 0.0
    %2501 = vmatpush1.msra.mxu0 0.0
    %2502 = vmatprep.subr.mxu0 0.0
    %2503 = vmatpush1.msra.mxu0 0.0
    %2504 = vmatprep.subr.mxu0 0.0
    %2505 = vmatpush1.msra.mxu0 0.0
    %2506 = vmatprep.subr.mxu0 0.0
    %2507 = vmatpush1.msra.mxu0 0.0
    %2508 = vmatprep.subr.mxu0 0.0
    %2509 = vmatpush1.msra.mxu0 0.0
    %2510 = vmatprep.subr.mxu0 0.0
    %2511 = vmatpush1.msra.mxu0 0.0
    %2512 = vmatprep.subr.mxu0 0.0
    %2513 = vmatpush1.msra.mxu0 0.0
    %2514 = vmatprep.subr.mxu0 0.0
    %2515 = vmatpush1.msra.mxu0 0.0
    %2516 = vmatprep.subr.mxu0 0.0
    %2517 = vmatpush1.msra.mxu0 0.0
    %2518 = vmatprep.subr.mxu0 0.0
    %2519 = vmatpush1.msra.mxu0 0.0
    %2520 = vmatprep.subr.mxu0 0.0
    %2521 = vmatpush1.msra.mxu0 0.0
    %2522 = vmatprep.subr.mxu0 0.0
    %2523 = vmatpush1.msra.mxu0 0.0
    %2524 = vmatprep.subr.mxu0 0.0
    %2525 = vmatpush1.msra.mxu0 0.0
    %2526 = vmatprep.subr.mxu0 0.0
    %2527 = vmatpush1.msra.mxu0 0.0
    %2528 = vmatprep.subr.mxu0 0.0
    %2529 = vmatpush1.msra.mxu0 0.0
    %2530 = vmatprep.subr.mxu0 0.0
    %2531 = vmatpush1.msra.mxu0 0.0
    %2532 = vmatprep.subr.mxu0 0.0
    %2533 = vmatpush1.msra.mxu0 0.0
    %2534 = vmatprep.subr.mxu0 0.0
    %2535 = vmatpush1.msra.mxu0 0.0
    %2536 = vmatprep.subr.mxu0 0.0
    %2537 = vmatpush1.msra.mxu0 0.0
    %2538 = vmatprep.subr.mxu0 0.0
    %2539 = vmatpush1.msra.mxu0 0.0
    %2540 = vmatprep.subr.mxu0 0.0
    %2541 = vmatpush1.msra.mxu0 0.0
    %2542 = vmatprep.subr.mxu0 0.0
    %2543 = vmatpush1.msra.mxu0 0.0
    %2544 = vmatprep.subr.mxu0 0.0
    %2545 = vmatpush1.msra.mxu0 0.0
    %2546 = vmatprep.subr.mxu0 0.0
    %2547 = vmatpush1.msra.mxu0 0.0
    %2548 = vmatprep.subr.mxu0 0.0
    %2549 = vmatpush1.msra.mxu0 0.0
    %2550 = vmatprep.mubr.f32.mxu0 0.0
    %2551 = vmatmul.mubr.f32.gmra.mrb[0].mxu0 %v2475
    %v2552 = vpop.f32.mrb[0].mxu0
    %v2553 = vadd.f32 %v2471, %v2552
    %v2554 = vpop.f32.mrb[0].mxu0
    %2555 = vmatprep.mubr.f32.mxu0 0.0
    %2556 = vmatmul.mubr.f32.gmra.mrb[0].mxu0 %v2478
    %v2557 = vpop.f32.mrb[0].mxu0
    %v2558 = vadd.f32 %v2471, %v2557
    %v2559 = vpop.f32.mrb[0].mxu0
    %2560 = vmatprep.mubr.f32.mxu0 0.0
    %2561 = vmatmul.mubr.f32.gmra.mrb[0].mxu0 %v2481
    %v2562 = vpop.f32.mrb[0].mxu0
    %v2563 = vadd.f32 %v2471, %v2562
    %v2564 = vpop.f32.mrb[0].mxu0
    %2565 = vmatprep.mubr.f32.mxu0 0.0
    %2566 = vmatmul.mubr.f32.gmra.mrb[0].mxu0 %v2484
    %v2567 = vpop.f32.mrb[0].mxu0
    %v2568 = vadd.f32 %v2471, %v2567
    %v2569 = vpop.f32.mrb[0].mxu0
    %2570 = vdwg.mxu0
    %2571 = vst [vmem:[%s15] sm:$0xff] %v2553
    %2572 = vst [vmem:[%s15 + $0x8] sm:$0xff] %v2558
    %2573 = vst [vmem:[%s15 + $0x10] sm:$0xff] %v2563
    %2574 = vst [vmem:[%s15 + $0x18] sm:$0xff] %v2568
    // Predicated region
    $region82: #{forward.1} parent=1 // pred_check
      _
    $region83: #{forward.1} parent=1 // pred_check_branch
      %2576 = sbr.rel (0) target = $region85
    $region84: #{forward.1} parent=1 // pred_region
      _
    $region85: #{forward.1} parent=1 // pred_fallthru
      _
    // Predicated region
    $region86: #{forward.1} parent=1 // pred_check
      _
    $region87: #{forward.1} parent=1 // pred_check_branch
      %2578 = sbr.rel (0) target = $region89
    $region88: #{forward.1} parent=1 // pred_region
      _
    $region89: #{forward.1} parent=1 // pred_fallthru
      _
    %2579 = vsyncpa [#allocation5], 1
    %2580 = vsyncpa [#allocation7], 1
    %2581 = vsyncpa [#allocation10], 1

</llo_original>
